<compile_context>
chip_gen: v5e
topology: v5e:2x2
jax: 0.10.0
libtpu: 0.0.40
codegen_flags: <defaults>
</compile_context>

<pallas_src>
from functools import partial

import numpy as np
import jax
import jax.numpy as jnp
from jax.experimental import pallas as pl
from jax.experimental.pallas import tpu as pltpu

# ----------------------------- small config -----------------------------
E = 64            # token hidden size ("span_embedding_dim")
FEAT = 16         # feature_size
FFNN = 32         # ffnn_size
MAX_W = 8         # max_span_width
NUM_DIST = 10     # num_dist_buckets
NUM_GENRES = 7
VOCAB = 100
MAX_TOP_ANT = 4   # max_top_antecedents
TOP_SPAN_RATIO = 0.4
COREF_DEPTH = 2
SPAN_DIM = 3 * E + FEAT            # concatenated span embedding dim (208)
PAIR_DIM = (SPAN_DIM + FEAT) * 3   # pair embedding dim (672)

# bucket thresholds for [0,1,2,3,4, 5-7, 8-15, 16-31, 32-63, 64+]
_DIST_THRESHOLDS = (1, 2, 3, 4, 5, 8, 16, 32, 64)

_FAST_ROW_TILE = 256
_FAST_VMEM = 40 * 1024 * 1024      # < v7x's 64 MiB physical, > v5e's 16 MiB default


def _row_tile(n, pref):
    return n if n <= pref else pref


def _cparams(vmem=None):
    return pltpu.CompilerParams(dimension_semantics=("parallel",),
                                vmem_limit_bytes=vmem)


# ----------------------------- Pallas kernels -----------------------------

def _mlp_score_kernel(x_ref, w1_ref, b1_ref, w2_ref, b2_ref, o_ref):
    x16 = x_ref[...].astype(jnp.bfloat16)
    h = jnp.dot(x16, w1_ref[...], preferred_element_type=jnp.float32) + b1_ref[...]
    h = jnp.maximum(h, 0.0)
    # Fo=1 second layer as a VPU multiply + lane reduction (a 1-column matmul
    # would waste 127/128 of the MXU).
    o_ref[...] = jnp.sum(h * w2_ref[...], axis=1, keepdims=True) + b2_ref[...]


def pallas_mlp_score(x, w1, b1, w2, b2, *, row_tile=512):
    """Linear(D->H) -> ReLU -> Linear(H->1). Returns (N, 1). Row-tiled."""
    N, D = x.shape
    H = w1.shape[1]
    tm = _row_tile(N, row_tile)
    return pl.pallas_call(
        _mlp_score_kernel,
        out_shape=jax.ShapeDtypeStruct((N, 1), jnp.float32),
        grid=(pl.cdiv(N, tm),),
        in_specs=[pl.BlockSpec((tm, D), lambda i: (i, 0)),
                  pl.BlockSpec((D, H), lambda i: (0, 0)),
                  pl.BlockSpec((1, H), lambda i: (0, 0)),
                  pl.BlockSpec((1, H), lambda i: (0, 0)),
                  pl.BlockSpec((1, 1), lambda i: (0, 0))],
        out_specs=pl.BlockSpec((tm, 1), lambda i: (i, 0)),
        compiler_params=_cparams(),
    )(x.astype(jnp.float32), w1.astype(jnp.bfloat16), b1.reshape(1, H),
      w2.reshape(1, H), b2.reshape(1, 1))


def _span_attend_kernel(emb_ref, hs_ref, width_ref, o_ref):
    # Masked softmax + attend over the W=8 token window of each span.
    emb = emb_ref[...]                                           # (TM, W, E)
    scores = hs_ref[...]                                         # (TM, W) precomputed head scores
    w_iota = jax.lax.broadcasted_iota(jnp.int32, scores.shape, 1)
    mask = w_iota < width_ref[...]
    s = jnp.where(mask, scores, -1e30)                           # avoids NaN on padded rows
    s = s - jnp.max(s, axis=1, keepdims=True)
    p = jnp.exp(s)
    p = p * pl.reciprocal(jnp.sum(p, axis=1, keepdims=True), approx=True)
    o_ref[...] = jnp.sum(p[:, :, None] * emb, axis=1)


def pallas_span_attend(emb_spans, head_scores_spans, span_widths, *, row_tile=256):
    N, W, D = emb_spans.shape
    tm = _row_tile(N, row_tile)
    return pl.pallas_call(
        _span_attend_kernel,
        out_shape=jax.ShapeDtypeStruct((N, D), jnp.float32),
        grid=(pl.cdiv(N, tm),),
        in_specs=[pl.BlockSpec((tm, W, D), lambda i: (i, 0, 0)),
                  pl.BlockSpec((tm, W), lambda i: (i, 0)),
                  pl.BlockSpec((tm, 1), lambda i: (i, 0))],
        out_specs=pl.BlockSpec((tm, D), lambda i: (i, 0)),
        compiler_params=_cparams(),
    )(emb_spans.astype(jnp.float32),
      head_scores_spans.astype(jnp.float32),
      span_widths.reshape(N, 1).astype(jnp.int32))


def _fast_ant_kernel(dd_ref, x_ref, xt_ref, wp_ref, bp_ref, msr_ref, msc_ref,
                     full_ref, idx_ref, score_ref, *, row_tile, n_cols):
    # Fused: proj(x) @ x.T (bf16 MXU) + mention-score pair sum + antecedent mask
    # + exact distance-bucket scores + in-kernel dummy column + per-row top-4.
    i = pl.program_id(0)
    x16 = x_ref[...].astype(jnp.bfloat16)                        # (TM, D)
    src = jnp.dot(x16, wp_ref[...], preferred_element_type=jnp.float32) + bp_ref[...]
    acc = jnp.dot(src.astype(jnp.bfloat16), xt_ref[...],
                  preferred_element_type=jnp.float32)            # (TM, N+1), col0 uses zero RHS
    acc = acc + msr_ref[...] + msc_ref[...]                      # pair mention scores (+d0 folded)
    c = jax.lax.broadcasted_iota(jnp.int32, acc.shape, 1)        # column = antecedent index + 1
    rows = i * row_tile + jax.lax.broadcasted_iota(jnp.int32, acc.shape, 0)
    off = rows - c + 1                                           # = row - antecedent
    # exact distance buckets: d(off) = d0 + sum_k delta_k * [off >= t_k]  (no log / EUP)
    for k, t in enumerate(_DIST_THRESHOLDS):
        acc = acc + jnp.where(off >= t, dd_ref[k], 0.0)
    full = jnp.where(c == 0, 0.0, jnp.where(off >= 1, acc, -jnp.inf))
    full_ref[...] = full

    # fused per-row top-MAX_TOP_ANT over the real antecedent columns (XLU reductions)
    sel = jnp.where(c == 0, -2e30, jnp.maximum(full, -1e30))     # finite sentinels keep picks distinct
    rows1 = i * row_tile + jax.lax.broadcasted_iota(jnp.int32, (acc.shape[0], 1), 0)
    idx_cols, score_cols = [], []
    for _ in range(MAX_TOP_ANT):
        m = jnp.max(sel, axis=1, keepdims=True)
        cpick = jnp.min(jnp.where(sel == m, c, n_cols), axis=1, keepdims=True)
        j = cpick - 1
        ok = (j >= 0) & (rows1 - j >= 1)
        score_cols.append(jnp.where(ok, m, -jnp.inf))            # true score (-inf for invalid picks)
        idx_cols.append(jnp.maximum(j, 0))
        sel = jnp.where(c == cpick, -jnp.inf, sel)
    idx_ref[...] = jnp.concatenate(idx_cols, axis=1)
    score_ref[...] = jnp.concatenate(score_cols, axis=1)


def pallas_fast_ant_scores(emb, wp, bp, mention_scores, dist_scores, *, row_tile=_FAST_ROW_TILE):
    """Returns (full_scores_with_dummy (N,N+1), top_idx (N,A), top_scores (N,A))."""
    N, D = emb.shape
    Np1 = N + 1
    tm = _row_tile(N, row_tile)
    x = emb.astype(jnp.float32)
    xt_pad = jnp.concatenate(
        [jnp.zeros((D, 1), jnp.bfloat16), emb.astype(jnp.bfloat16).T], axis=1)   # (D, N+1)
    d0 = dist_scores[0]
    deltas = (dist_scores[1:] - dist_scores[:-1]).astype(jnp.float32)            # (9,)
    msr = mention_scores.reshape(N, 1).astype(jnp.float32)
    msc_pad = jnp.concatenate(
        [jnp.zeros((1, 1), jnp.float32),
         (mention_scores.astype(jnp.float32) + d0).reshape(1, N)], axis=1)       # (1, N+1)
    return pl.pallas_call(
        partial(_fast_ant_kernel, row_tile=tm, n_cols=Np1),
        out_shape=(jax.ShapeDtypeStruct((N, Np1), jnp.float32),
                   jax.ShapeDtypeStruct((N, MAX_TOP_ANT), jnp.int32),
                   jax.ShapeDtypeStruct((N, MAX_TOP_ANT), jnp.float32)),
        grid=(pl.cdiv(N, tm),),
        in_specs=[pl.BlockSpec(memory_space=pltpu.MemorySpace.SMEM),   # (9,) delta table
                  pl.BlockSpec((tm, D), lambda i: (i, 0)),
                  pl.BlockSpec((D, Np1), lambda i: (0, 0)),
                  pl.BlockSpec((D, D), lambda i: (0, 0)),
                  pl.BlockSpec((1, D), lambda i: (0, 0)),
                  pl.BlockSpec((tm, 1), lambda i: (i, 0)),
                  pl.BlockSpec((1, Np1), lambda i: (0, 0))],
        out_specs=(pl.BlockSpec((tm, Np1), lambda i: (i, 0)),
                   pl.BlockSpec((tm, MAX_TOP_ANT), lambda i: (i, 0)),
                   pl.BlockSpec((tm, MAX_TOP_ANT), lambda i: (i, 0))),
        compiler_params=_cparams(_FAST_VMEM),
    )(deltas, x, xt_pad, wp.astype(jnp.bfloat16),
      bp.reshape(1, D).astype(jnp.float32), msr, msc_pad)


def _slow_ant_kernel(span_ref, ant_ref, feat_ref, w1s_ref, w1r_ref, b1_ref,
                     w2_ref, b2_ref, o_ref, *, num_ants):
    # Fused pair-embedding MLP: the 672-wide pair embedding never touches HBM;
    # ant / ant*span / feature blocks are merged into one matmul per antecedent.
    span16 = span_ref[...]                                        # bf16 (TM, S)
    span_f = span16.astype(jnp.float32)
    h_span = jnp.dot(span16, w1s_ref[...], preferred_element_type=jnp.float32) + b1_ref[...]
    w1r = w1r_ref[...]
    w2 = w2_ref[...]
    cols = []
    for a in range(num_ants):
        ant_f = ant_ref[a].astype(jnp.float32)                    # (TM, S) static leading index
        feat_f = feat_ref[a].astype(jnp.float32)                  # (TM, 3*FEAT)
        op = jnp.concatenate((ant_f, ant_f * span_f, feat_f), axis=1).astype(jnp.bfloat16)
        h = jnp.maximum(h_span + jnp.dot(op, w1r, preferred_element_type=jnp.float32), 0.0)
        cols.append(jnp.sum(h * w2, axis=1, keepdims=True) + b2_ref[...])
    o_ref[...] = jnp.concatenate(cols, axis=1)                    # (TM, A)


def pallas_slow_ant_scores(span16, ant_emb_a, feat_emb_a, w1, b1, w2, b2, *, row_tile=512):
    T, S = span16.shape
    A = ant_emb_a.shape[0]
    F3 = feat_emb_a.shape[-1]
    H = w1.shape[1]
    tm = _row_tile(T, row_tile)
    w1s = w1[:S].astype(jnp.bfloat16)
    w1r = w1[S:].astype(jnp.bfloat16)                             # rows for [ant | ant*span | feat]
    return pl.pallas_call(
        partial(_slow_ant_kernel, num_ants=A),
        out_shape=jax.ShapeDtypeStruct((T, A), jnp.float32),
        grid=(pl.cdiv(T, tm),),
        in_specs=[pl.BlockSpec((tm, S), lambda i: (i, 0)),
                  pl.BlockSpec((A, tm, S), lambda i: (0, i, 0)),
                  pl.BlockSpec((A, tm, F3), lambda i: (0, i, 0)),
                  pl.BlockSpec((S, H), lambda i: (0, 0)),
                  pl.BlockSpec((2 * S + F3, H), lambda i: (0, 0)),
                  pl.BlockSpec((1, H), lambda i: (0, 0)),
                  pl.BlockSpec((1, H), lambda i: (0, 0)),
                  pl.BlockSpec((1, 1), lambda i: (0, 0))],
        out_specs=pl.BlockSpec((tm, A), lambda i: (i, 0)),
        compiler_params=_cparams(),
    )(span16, ant_emb_a, feat_emb_a, w1s, w1r,
      b1.reshape(1, H), w2.reshape(1, H), b2.reshape(1, 1))


def _refine_kernel(span_ref, ant_ref, attn_ref, gws_ref, gwa_ref, gb_ref, o_ref, *, num_ants):
    # Fused: antecedent-attention weighted sum + gate linear (split weights) + convex update.
    span = span_ref[...]                                          # f32 (TM, S)
    attn = attn_ref[...]                                          # f32 (TM, A+1)
    att = attn[:, 0:1] * span
    for a in range(num_ants):
        att = att + attn[:, a + 1:a + 2] * ant_ref[a].astype(jnp.float32)
    g = jax.nn.sigmoid(
        jnp.dot(span.astype(jnp.bfloat16), gws_ref[...], preferred_element_type=jnp.float32)
        + jnp.dot(att.astype(jnp.bfloat16), gwa_ref[...], preferred_element_type=jnp.float32)
        + gb_ref[...])
    o_ref[...] = g * att + (1.0 - g) * span


def pallas_refine(span_emb, ant_emb_a, attn, gate_w, gate_b, *, row_tile=512):
    T, S = span_emb.shape
    A = ant_emb_a.shape[0]
    tm = _row_tile(T, row_tile)
    gws = gate_w[:S].astype(jnp.bfloat16)
    gwa = gate_w[S:].astype(jnp.bfloat16)
    return pl.pallas_call(
        partial(_refine_kernel, num_ants=A),
        out_shape=jax.ShapeDtypeStruct((T, S), jnp.float32),
        grid=(pl.cdiv(T, tm),),
        in_specs=[pl.BlockSpec((tm, S), lambda i: (i, 0)),
                  pl.BlockSpec((A, tm, S), lambda i: (0, i, 0)),
                  pl.BlockSpec((tm, A + 1), lambda i: (i, 0)),
                  pl.BlockSpec((S, S), lambda i: (0, 0)),
                  pl.BlockSpec((S, S), lambda i: (0, 0)),
                  pl.BlockSpec((1, S), lambda i: (0, 0))],
        out_specs=pl.BlockSpec((tm, S), lambda i: (i, 0)),
        compiler_params=_cparams(),
    )(span_emb.astype(jnp.float32), ant_emb_a, attn.astype(jnp.float32),
      gws, gwa, gate_b.reshape(1, S))


# ----------------------------- model pieces -----------------------------

def get_offset_bucket_idxes_batch(offsets):
    # Exact threshold-based bucketing (no log / floor rounding hazard).
    b = jnp.zeros(offsets.shape, jnp.int32)
    for t in _DIST_THRESHOLDS:
        b = b + (offsets >= t).astype(jnp.int32)
    return b


def _jnp_mlp_scores(x, w1, b1, w2, b2):
    # Tiny parameter-only MLPs (8 or 10 rows) stay in plain XLA.
    h = jnp.maximum(x @ w1 + b1, 0.0)
    return (h @ w2 + b2)[:, 0]


def get_span_emb(params, mention_doc, start_idxes, end_idxes):
    num_words = mention_doc.shape[0]
    start_embeddings = mention_doc[start_idxes]
    end_embeddings = mention_doc[end_idxes]
    span_widths = end_idxes - start_idxes + 1
    span_width_embeddings = params["span_width_emb"][span_widths - 1]
    idxes_of_spans = jnp.minimum(
        start_idxes[:, None] + jnp.arange(MAX_W, dtype=start_idxes.dtype)[None, :],
        num_words - 1)
    embeddings_of_spans = mention_doc[idxes_of_spans]                      # (N, W, E)
    # per-token head scores computed once, then gathered (kernel only softmax+attend)
    token_head_scores = (mention_doc @ params["head_w"] + params["head_b"])[:, 0]
    head_scores_of_spans = token_head_scores[idxes_of_spans]               # (N, W)
    attended = pallas_span_attend(embeddings_of_spans, head_scores_of_spans, span_widths)
    return jnp.concatenate((start_embeddings, end_embeddings,
                            span_width_embeddings, attended), axis=-1)


def get_mention_scores(params, span_emb, span_starts, span_ends):
    span_scores = pallas_mlp_score(span_emb, params["ms_w1"], params["ms_b1"],
                                   params["ms_w2"], params["ms_b2"])[:, 0]
    width_scores = _jnp_mlp_scores(params["sws_emb"], params["sws_w1"], params["sws_b1"],
                                   params["sws_w2"], params["sws_b2"])
    return span_scores + width_scores[span_ends - span_starts]


def prune(params, top_span_embeddings, top_span_mention_scores, pruned_ant_num):
    T = top_span_embeddings.shape[0]
    dist_scores = (params["dist_emb"] @ params["dist_w"] + params["dist_b"])[:, 0]
    full_with_dummy, top_idx, top_fast = pallas_fast_ant_scores(
        top_span_embeddings, params["proj_w"], params["proj_b"],
        top_span_mention_scores, dist_scores)
    if pruned_ant_num < MAX_TOP_ANT:
        # degenerate tiny-T fallback (matrix is tiny here)
        top_fast, top_idx = jax.lax.top_k(full_with_dummy[:, 1:], pruned_ant_num)
    else:
        top_idx = top_idx[:, :pruned_ant_num]
        top_fast = top_fast[:, :pruned_ant_num]
    span_col = jnp.arange(T, dtype=jnp.int32)[:, None]
    top_off = span_col - top_idx
    top_mask = top_off >= 1
    full_ant_mask = span_col > jnp.arange(T, dtype=jnp.int32)[None, :]
    return top_idx, top_mask, top_fast, top_off, full_with_dummy, full_ant_mask


# ----------------------------- jit stages -----------------------------

@jax.jit
def stage1(params, input_ids, keep_idx, speaker_ids, candidate_starts, candidate_ends):
    # TODO(synk): pretrained BERT encoder has no in-script equivalent; replaced by a
    # deterministic embedding-table lookup producing the contextual token embeddings.
    enc = params["enc_emb"][input_ids].reshape(-1, E)
    mention_doc = enc[keep_idx]
    speakers_flat = speaker_ids.reshape(-1)[keep_idx]
    cand_span_emb = get_span_emb(params, mention_doc, candidate_starts, candidate_ends)
    cand_mention_scores = get_mention_scores(params, cand_span_emb,
                                             candidate_starts, candidate_ends)
    return cand_span_emb, cand_mention_scores, speakers_flat


@jax.jit
def stage2(params, cand_span_emb, cand_mention_scores, speakers_flat,
           candidate_starts, candidate_ends, cand_cluster_ids, top_span_idxes, genre_id):
    top_start_idxes = candidate_starts[top_span_idxes]
    top_end_idxes = candidate_ends[top_span_idxes]
    top_span_embeddings = cand_span_emb[top_span_idxes]
    top_span_cluster_ids = cand_cluster_ids[top_span_idxes]
    top_span_mention_scores = cand_mention_scores[top_span_idxes]
    top_span_speaker_ids = speakers_flat[top_start_idxes]

    T = top_span_idxes.shape[0]
    pruned_ant_num = min(MAX_TOP_ANT, T)
    (top_ant_idxes, top_ant_mask, top_fast_scores, top_ant_offsets,
     full_fast_with_dummy, full_ant_mask) = prune(params, top_span_embeddings,
                                                  top_span_mention_scores, pruned_ant_num)

    # antecedent feature embeddings depend only on indices / speakers: hoisted out
    # of the coref-depth loop and built once.
    genre_embedding = params["genre_emb"][genre_id].reshape(-1)
    ant_speaker_ids = top_span_speaker_ids[top_ant_idxes]
    same_speaker = (top_span_speaker_ids[:, None] == ant_speaker_ids).astype(jnp.int32)
    speaker_pair_emb = params["speaker_pair_emb"][same_speaker]            # (T, A, FEAT)
    offset_buckets = get_offset_bucket_idxes_batch(top_ant_offsets)
    ant_offset_emb = params["ant_offset_emb"][offset_buckets]              # (T, A, FEAT)
    genre_emb = jnp.broadcast_to(genre_embedding[None, None, :], (T, pruned_ant_num, FEAT))
    feat_emb_a = jnp.transpose(
        jnp.concatenate((speaker_pair_emb, genre_emb, ant_offset_emb), axis=-1),
        (1, 0, 2)).astype(jnp.bfloat16)                                    # (A, T, 3*FEAT)

    dummy_scores = jnp.zeros((T, 1), jnp.float32)
    ant_idx_t = top_ant_idxes.T
    top_ant_scores = None
    for i in range(COREF_DEPTH):
        # TODO(synk): the antecedent-embedding gather could be moved in-kernel with
        # scalar-prefetched indices; kept in XLA (bf16 halves its HBM traffic).
        span16 = top_span_embeddings.astype(jnp.bfloat16)
        ant_emb_a = span16[ant_idx_t]                                      # (A, T, SPAN_DIM) bf16
        slow = pallas_slow_ant_scores(span16, ant_emb_a, feat_emb_a,
                                      params["sas_w1"], params["sas_b1"],
                                      params["sas_w2"], params["sas_b2"])
        top_ant_scores = jnp.concatenate((dummy_scores, top_fast_scores + slow), axis=1)
        if i == COREF_DEPTH - 1:
            break
        attn = jax.nn.softmax(top_ant_scores, axis=-1)
        top_span_embeddings = pallas_refine(top_span_embeddings, ant_emb_a, attn,
                                            params["gate_w"], params["gate_b"])

    top_ant_cluster_ids = top_span_cluster_ids[top_ant_idxes]
    return (top_start_idxes, top_end_idxes, top_span_cluster_ids,
            top_ant_idxes, top_ant_cluster_ids, top_ant_scores, top_ant_mask,
            full_fast_with_dummy, full_ant_mask)


# ----------------------------- host-side pieces -----------------------------

def extract_top_spans(span_scores, candidate_starts, candidate_ends, top_span_num):
    # TODO(synk): data-dependent greedy non-crossing span selection has no Pallas
    # equivalent; it runs on host in numpy (mirrors the PyTorch implementation).
    sorted_span_idxes = np.argsort(-span_scores).tolist()
    top_span_idxes = []
    end_idx_to_min_start_idx, start_idx_to_max_end_idx = {}, {}
    selected = 0
    for span_idx in sorted_span_idxes:
        crossed = False
        start_idx = int(candidate_starts[span_idx])
        end_idx = int(candidate_ends[span_idx])
        if end_idx == start_idx_to_max_end_idx.get(start_idx, -1):
            continue
        for j in range(start_idx, end_idx + 1):
            if j in start_idx_to_max_end_idx and j > start_idx and start_idx_to_max_end_idx[j] > end_idx:
                crossed = True
                break
            if j in end_idx_to_min_start_idx and j < end_idx and end_idx_to_min_start_idx[j] < start_idx:
                crossed = True
                break
        if not crossed:
            top_span_idxes.append(span_idx)
            selected += 1
            if start_idx not in start_idx_to_max_end_idx or end_idx > start_idx_to_max_end_idx[start_idx]:
                start_idx_to_max_end_idx[start_idx] = end_idx
            if end_idx not in end_idx_to_min_start_idx or start_idx < end_idx_to_min_start_idx[end_idx]:
                end_idx_to_min_start_idx[end_idx] = start_idx
        if selected == top_span_num:
            break
    top_span_idxes.sort(key=lambda i: (int(candidate_starts[i]), int(candidate_ends[i])))
    return np.asarray(top_span_idxes, dtype=np.int32)


def forward(params, input_ids, input_mask, speaker_ids, genre_id,
            gold_starts, gold_ends, gold_cluster_ids,
            candidate_starts, candidate_ends, cand_cluster_ids):
    # mask is host-known input data: build keep indices with numpy, no device sync
    mask_np = np.asarray(input_mask).reshape(-1).astype(bool)
    keep_idx = jnp.asarray(np.nonzero(mask_np)[0], dtype=jnp.int32)
    num_words = int(mask_np.sum())

    cand_starts_np = np.asarray(candidate_starts, dtype=np.int32)
    cand_ends_np = np.asarray(candidate_ends, dtype=np.int32)
    cand_starts = jnp.asarray(cand_starts_np)
    cand_ends = jnp.asarray(cand_ends_np)

    cand_span_emb, cand_mention_scores, speakers_flat = stage1(
        params, input_ids, keep_idx, speaker_ids, cand_starts, cand_ends)

    top_cand_num = min(3900, int(num_words * TOP_SPAN_RATIO))
    if top_cand_num < num_words:
        # the only device->host sync of the forward pass: the mention scores
        scores_np = np.asarray(cand_mention_scores)
        top_span_idxes_np = extract_top_spans(scores_np, cand_starts_np, cand_ends_np,
                                              top_cand_num)
    else:
        top_span_idxes_np = np.arange(num_words, dtype=np.int32)
    top_span_idxes = jnp.asarray(top_span_idxes_np, dtype=jnp.int32)

    outs = stage2(params, cand_span_emb, cand_mention_scores, speakers_flat,
                  cand_starts, cand_ends, jnp.asarray(cand_cluster_ids, dtype=jnp.int32),
                  top_span_idxes, genre_id)
    return (cand_mention_scores,) + outs


# ----------------------------- params -----------------------------

def init_model_params(key):
    keys = iter(jax.random.split(key, 32))
    n = lambda shape: 0.02 * jax.random.normal(next(keys), shape, dtype=jnp.float32)
    z = lambda shape: jnp.zeros(shape, jnp.float32)
    return dict(
        enc_emb=n((VOCAB, E)),
        span_width_emb=n((MAX_W, FEAT)),
        head_w=n((E, 1)), head_b=z((1,)),
        ms_w1=n((SPAN_DIM, FFNN)), ms_b1=z((FFNN,)),
        ms_w2=n((FFNN, 1)), ms_b2=z((1,)),
        sws_emb=n((MAX_W, FEAT)),
        sws_w1=n((FEAT, FFNN)), sws_b1=z((FFNN,)),
        sws_w2=n((FFNN, 1)), sws_b2=z((1,)),
        dist_emb=n((NUM_DIST, FEAT)),
        dist_w=n((FEAT, 1)), dist_b=z((1,)),
        proj_w=n((SPAN_DIM, SPAN_DIM)), proj_b=z((SPAN_DIM,)),
        genre_emb=n((NUM_GENRES, FEAT)),
        speaker_pair_emb=n((2, FEAT)),
        ant_offset_emb=n((NUM_DIST, FEAT)),
        sas_w1=n((PAIR_DIM, FFNN)), sas_b1=z((FFNN,)),
        sas_w2=n((FFNN, 1)), sas_b2=z((1,)),
        gate_w=n((2 * SPAN_DIM, SPAN_DIM)), gate_b=z((SPAN_DIM,)),
    )


# ----------------------------- main -----------------------------

if __name__ == "__main__":
    root = jax.random.PRNGKey(0)
    k_params, k_ids, k_speaker = jax.random.split(root, 3)
    params = init_model_params(k_params)

    num_sentences, max_sent_len = 2, 16
    input_ids = jax.random.randint(k_ids, (num_sentences, max_sent_len), 0, VOCAB, dtype=jnp.int32)
    input_mask = jnp.array([[1] * 16, [1] * 12 + [0] * 4], dtype=jnp.int32)
    speaker_ids = jax.random.randint(k_speaker, (num_sentences, max_sent_len), 0, 3, dtype=jnp.int32)
    genre_id = jnp.array(3, dtype=jnp.int32)

    num_words = int(np.asarray(input_mask).sum())
    cs, ce = [], []
    for s in range(num_words):
        for w in range(1, MAX_W + 1):
            e = s + w - 1
            if e < num_words:
                cs.append(s)
                ce.append(e)
    candidate_starts = np.asarray(cs, dtype=np.int32)
    candidate_ends = np.asarray(ce, dtype=np.int32)
    cand_cluster_ids = np.zeros((len(cs),), dtype=np.int32)
    gold_starts = np.array([0, 5], dtype=np.int32)
    gold_ends = np.array([1, 6], dtype=np.int32)
    gold_cluster_ids = np.array([1, 1], dtype=np.int32)

    outputs = forward(params, input_ids, input_mask, speaker_ids, genre_id,
                      gold_starts, gold_ends, gold_cluster_ids,
                      candidate_starts, candidate_ends, cand_cluster_ids)
    jax.block_until_ready(outputs)
    print("KERNEL_OK")
</pallas_src>

<mosaic_0001>
module attributes {stable_mosaic.version = 11 : i64} {
  func.func @_span_attend_kernel(%arg0: i32, %arg1: memref<196x8x64xf32, #tpu.memory_space<vmem>>, %arg2: memref<196x8xf32, #tpu.memory_space<vmem>>, %arg3: memref<196x1xi32, #tpu.memory_space<vmem>>, %arg4: memref<196x64xf32, #tpu.memory_space<vmem>>) attributes {dimension_semantics = [#tpu.dimension_semantics<parallel>], iteration_bounds = array<i64: 1>, scalar_prefetch = 0 : i64, scratch_operands = 0 : i64, tpu.core_type = #tpu.core_type<tc>, window_params = [{transform_indices = @transform_0, window_bounds = array<i64: 196, 8, 64>}, {transform_indices = @transform_1, window_bounds = array<i64: 196, 8>}, {transform_indices = @transform_2, window_bounds = array<i64: 196, 1>}, {transform_indices = @transform_3, window_bounds = array<i64: 196, 64>}]} {
    %c0 = arith.constant 0 : index
    %c0_0 = arith.constant 0 : index
    %c0_1 = arith.constant 0 : index
    %0 = vector.load %arg1[%c0, %c0_0, %c0_1] : memref<196x8x64xf32, #tpu.memory_space<vmem>>, vector<196x8x64xf32>
    %c0_2 = arith.constant 0 : index
    %c0_3 = arith.constant 0 : index
    %1 = vector.load %arg2[%c0_2, %c0_3] : memref<196x8xf32, #tpu.memory_space<vmem>>, vector<196x8xf32>
    %2 = tpu.iota {dimensions = array<i32: 1>} : vector<196x8xi32>
    %c0_4 = arith.constant 0 : index
    %c0_5 = arith.constant 0 : index
    %3 = vector.load %arg3[%c0_4, %c0_5] : memref<196x1xi32, #tpu.memory_space<vmem>>, vector<196x1xi32>
    %4 = vector.broadcast %3 : vector<196x1xi32> to vector<196x8xi32>
    %5 = arith.cmpi slt, %2, %4 : vector<196x8xi32>
    %cst = arith.constant -1.000000e+30 : f32
    %6 = vector.broadcast %cst : f32 to vector<196x8xf32>
    %7 = arith.select %5, %1, %6 : vector<196x8xi1>, vector<196x8xf32>
    %cst_6 = arith.constant dense<0xFF800000> : vector<196xf32>
    %8 = vector.multi_reduction <maximumf>, %7, %cst_6 [1] : vector<196x8xf32> to vector<196xf32>
    %9 = vector.shape_cast %8 : vector<196xf32> to vector<196x1xf32>
    %10 = vector.broadcast %9 : vector<196x1xf32> to vector<196x8xf32>
    %11 = arith.subf %7, %10 : vector<196x8xf32>
    %12 = math.exp %11 : vector<196x8xf32>
    %cst_7 = arith.constant dense<0.000000e+00> : vector<196xf32>
    %13 = vector.multi_reduction <add>, %12, %cst_7 [1] : vector<196x8xf32> to vector<196xf32>
    %14 = vector.shape_cast %13 : vector<196xf32> to vector<196x1xf32>
    %15 = tpu.reciprocal %14 {approx = true} : vector<196x1xf32> -> vector<196x1xf32>
    %16 = vector.broadcast %15 : vector<196x1xf32> to vector<196x8xf32>
    %17 = arith.mulf %12, %16 : vector<196x8xf32>
    %18 = vector.shape_cast %17 : vector<196x8xf32> to vector<196x8x1xf32>
    %19 = vector.broadcast %18 : vector<196x8x1xf32> to vector<196x8x64xf32>
    %20 = arith.mulf %19, %0 : vector<196x8x64xf32>
    %cst_8 = arith.constant dense<0.000000e+00> : vector<196x64xf32>
    %21 = vector.multi_reduction <add>, %20, %cst_8 [1] : vector<196x8x64xf32> to vector<196x64xf32>
    %c0_9 = arith.constant 0 : index
    %c0_10 = arith.constant 0 : index
    %22 = vector.load %arg4[%c0_9, %c0_10] : memref<196x64xf32, #tpu.memory_space<vmem>>, vector<196x64xf32>
    tpu.vector_store %arg4[%c0_9, %c0_10], %21 {strides = array<i32>} : memref<196x64xf32, #tpu.memory_space<vmem>>, vector<196x64xf32>,
    return
  }
  func.func @transform_0(%arg0: i32) -> (i32, i32, i32) {
    %c0_i32 = arith.constant 0 : i32
    %c0_i32_0 = arith.constant 0 : i32
    %c0_i32_1 = arith.constant 0 : i32
    return %arg0, %c0_i32, %c0_i32_0 : i32, i32, i32
  }
  func.func @transform_1(%arg0: i32) -> (i32, i32) {
    %c0_i32 = arith.constant 0 : i32
    %c0_i32_0 = arith.constant 0 : i32
    return %arg0, %c0_i32 : i32, i32
  }
  func.func @transform_2(%arg0: i32) -> (i32, i32) {
    %c0_i32 = arith.constant 0 : i32
    %c0_i32_0 = arith.constant 0 : i32
    return %arg0, %c0_i32 : i32, i32
  }
  func.func @transform_3(%arg0: i32) -> (i32, i32) {
    %c0_i32 = arith.constant 0 : i32
    %c0_i32_0 = arith.constant 0 : i32
    return %arg0, %c0_i32 : i32, i32
  }
}

module attributes {stable_mosaic.version = 11 : i64} {
  func.func @_mlp_score_kernel(%arg0: i32, %arg1: memref<196x208xf32, #tpu.memory_space<vmem>>, %arg2: memref<208x32xbf16, #tpu.memory_space<vmem>>, %arg3: memref<1x32xf32, #tpu.memory_space<vmem>>, %arg4: memref<1x32xf32, #tpu.memory_space<vmem>>, %arg5: memref<1x1xf32, #tpu.memory_space<vmem>>, %arg6: memref<196x1xf32, #tpu.memory_space<vmem>>) attributes {dimension_semantics = [#tpu.dimension_semantics<parallel>], iteration_bounds = array<i64: 1>, scalar_prefetch = 0 : i64, scratch_operands = 0 : i64, tpu.core_type = #tpu.core_type<tc>, window_params = [{transform_indices = @transform_0, window_bounds = array<i64: 196, 208>}, {pipeline_mode = #tpu.pipeline_mode<synchronous>, transform_indices = @transform_1, window_bounds = array<i64: 208, 32>}, {pipeline_mode = #tpu.pipeline_mode<synchronous>, transform_indices = @transform_2, window_bounds = array<i64: 1, 32>}, {pipeline_mode = #tpu.pipeline_mode<synchronous>, transform_indices = @transform_3, window_bounds = array<i64: 1, 32>}, {pipeline_mode = #tpu.pipeline_mode<synchronous>, transform_indices = @transform_4, window_bounds = array<i64: 1, 1>}, {transform_indices = @transform_5, window_bounds = array<i64: 196, 1>}]} {
    %c0 = arith.constant 0 : index
    %c0_0 = arith.constant 0 : index
    %0 = vector.load %arg1[%c0, %c0_0] : memref<196x208xf32, #tpu.memory_space<vmem>>, vector<196x208xf32>
    %1 = arith.truncf %0 : vector<196x208xf32> to vector<196x208xbf16>
    %c0_1 = arith.constant 0 : index
    %c0_2 = arith.constant 0 : index
    %2 = vector.load %arg2[%c0_1, %c0_2] : memref<208x32xbf16, #tpu.memory_space<vmem>>, vector<208x32xbf16>
    %cst = arith.constant dense<0.000000e+00> : vector<196x32xf32>
    %3 = tpu.matmul %1, %2, %cst {dimension_numbers = #tpu.dot_dimension_numbers<[1], [0], [0], [1], [0, 0, 1, 1], [], []>} : vector<196x208xbf16>, vector<208x32xbf16>, vector<196x32xf32> -> vector<196x32xf32>
    %c0_3 = arith.constant 0 : index
    %c0_4 = arith.constant 0 : index
    %4 = vector.load %arg3[%c0_3, %c0_4] : memref<1x32xf32, #tpu.memory_space<vmem>>, vector<1x32xf32>
    %5 = vector.broadcast %4 : vector<1x32xf32> to vector<196x32xf32>
    %6 = arith.addf %3, %5 : vector<196x32xf32>
    %cst_5 = arith.constant 0.000000e+00 : f32
    %7 = vector.broadcast %cst_5 : f32 to vector<196x32xf32>
    %8 = arith.maximumf %6, %7 : vector<196x32xf32>
    %c0_6 = arith.constant 0 : index
    %c0_7 = arith.constant 0 : index
    %9 = vector.load %arg4[%c0_6, %c0_7] : memref<1x32xf32, #tpu.memory_space<vmem>>, vector<1x32xf32>
    %10 = vector.broadcast %9 : vector<1x32xf32> to vector<196x32xf32>
    %11 = arith.mulf %8, %10 : vector<196x32xf32>
    %cst_8 = arith.constant dense<0.000000e+00> : vector<196xf32>
    %12 = vector.multi_reduction <add>, %11, %cst_8 [1] : vector<196x32xf32> to vector<196xf32>
    %13 = vector.shape_cast %12 : vector<196xf32> to vector<196x1xf32>
    %c0_9 = arith.constant 0 : index
    %c0_10 = arith.constant 0 : index
    %14 = vector.load %arg5[%c0_9, %c0_10] : memref<1x1xf32, #tpu.memory_space<vmem>>, vector<1x1xf32>
    %15 = vector.broadcast %14 : vector<1x1xf32> to vector<196x1xf32>
    %16 = arith.addf %13, %15 : vector<196x1xf32>
    %c0_11 = arith.constant 0 : index
    %c0_12 = arith.constant 0 : index
    %17 = vector.load %arg6[%c0_11, %c0_12] : memref<196x1xf32, #tpu.memory_space<vmem>>, vector<196x1xf32>
    tpu.vector_store %arg6[%c0_11, %c0_12], %16 {strides = array<i32>} : memref<196x1xf32, #tpu.memory_space<vmem>>, vector<196x1xf32>,
    return
  }
  func.func @transform_0(%arg0: i32) -> (i32, i32) {
    %c0_i32 = arith.constant 0 : i32
    %c0_i32_0 = arith.constant 0 : i32
    return %arg0, %c0_i32 : i32, i32
  }
  func.func @transform_1(%arg0: i32) -> (i32, i32) {
    %c0_i32 = arith.constant 0 : i32
    %c0_i32_0 = arith.constant 0 : i32
    %c0_i32_1 = arith.constant 0 : i32
    return %c0_i32, %c0_i32_0 : i32, i32
  }
  func.func @transform_2(%arg0: i32) -> (i32, i32) {
    %c0_i32 = arith.constant 0 : i32
    %c0_i32_0 = arith.constant 0 : i32
    %c0_i32_1 = arith.constant 0 : i32
    return %c0_i32, %c0_i32_0 : i32, i32
  }
  func.func @transform_3(%arg0: i32) -> (i32, i32) {
    %c0_i32 = arith.constant 0 : i32
    %c0_i32_0 = arith.constant 0 : i32
    %c0_i32_1 = arith.constant 0 : i32
    return %c0_i32, %c0_i32_0 : i32, i32
  }
  func.func @transform_4(%arg0: i32) -> (i32, i32) {
    %c0_i32 = arith.constant 0 : i32
    %c0_i32_0 = arith.constant 0 : i32
    %c0_i32_1 = arith.constant 0 : i32
    return %c0_i32, %c0_i32_0 : i32, i32
  }
  func.func @transform_5(%arg0: i32) -> (i32, i32) {
    %c0_i32 = arith.constant 0 : i32
    %c0_i32_0 = arith.constant 0 : i32
    return %arg0, %c0_i32 : i32, i32
  }
}

</mosaic_0001>

<llo_original>
// kernel: stage1.3
$region0: #{stage1.3}
  #allocation0 [shape = 'u32[]', space=smem, size = 0x4, offset = 0x4, fixed_abs, tag = 'smem constant byte address 0x4 - core index']
  #allocation1 [shape = 'u32[72,128]{1,0:T(1,128)}', space=vmem, size = 0x9000, scoped, tag = 'internal scratch']
  #allocation2 [shape = 'f32[1,1]{1,0:T(1,128)S(1)}', space=vmem, size = 0x200, scoped, tag = 'scoped memory for stage1.3']
  %s0 = inlined_call_operand.vmem [shape: f32[196,208], index: 0, kind: input, shape index: {}]
  %s1 = inlined_call_operand.vmem [shape: bf16[208,32], index: 1, kind: input, shape index: {}]
  %s2 = inlined_call_operand.vmem [shape: f32[1,32], index: 2, kind: input, shape index: {}]
  %s3 = inlined_call_operand.vmem [shape: f32[1,32], index: 3, kind: input, shape index: {}]
  %s4 = inlined_call_operand.<no memory space> [shape: f32[1,1], index: 4, kind: input, shape index: {}]
  %s5 = inlined_call_operand.vmem [shape: f32[196,1], index: 5, kind: output, shape index: {}]
  %s6 = sld [smem:[#allocation0]]
  $region30: #{stage1.3} parent=0
    _
  %s8 = ssub.s32 1, %s6
  %s9 = scalar_select 0, %s8, %s6
  %v10 = vstv %s4
  %11 = vst [vmem:[#allocation2] sm:$0x1] %v10
  // Predicated region
  $region2: #{stage1.3} parent=0 // pred_check
    _
  $region3: #{stage1.3} parent=0 // pred_check_branch
    %13 = sbr.rel (0) target = $region5
  $region4: #{stage1.3} parent=0 // pred_region
    _
  $region5: #{stage1.3} parent=0 // pred_fallthru
    _
  // Predicated region
  $region6: #{stage1.3} parent=0 // pred_check
    _
  $region7: #{stage1.3} parent=0 // pred_check_branch
    %15 = sbr.rel (0) target = $region9
  $region8: #{stage1.3} parent=0 // pred_region
    _
  $region9: #{stage1.3} parent=0 // pred_fallthru
    _
  // Predicated region
  $region10: #{stage1.3} parent=0 // pred_check
    _
  $region11: #{stage1.3} parent=0 // pred_check_branch
    %17 = sbr.rel (0) target = $region13
  $region12: #{stage1.3} parent=0 // pred_region
    _
  $region13: #{stage1.3} parent=0 // pred_fallthru
    _
  // Predicated region
  $region14: #{stage1.3} parent=0 // pred_check
    _
  $region15: #{stage1.3} parent=0 // pred_check_branch
    %19 = sbr.rel (0) target = $region17
  $region16: #{stage1.3} parent=0 // pred_region
    _
  $region17: #{stage1.3} parent=0 // pred_fallthru
    _
  // Predicated region
  $region18: #{stage1.3} parent=0 // pred_check
    _
  $region19: #{stage1.3} parent=0 // pred_check_branch
    %21 = sbr.rel (0) target = $region21
  $region20: #{stage1.3} parent=0 // pred_region
    _
  $region21: #{stage1.3} parent=0 // pred_fallthru
    _
  %v23 = vld [vmem:[%s0] sm:$0xff]
  %v24 = vld [vmem:[%s0 + $0x8] sm:$0xff]
  %v25 = vld [vmem:[%s0 + $0x10] sm:$0xff]
  %v26 = vld [vmem:[%s0 + $0x18] sm:$0xff]
  %v27 = vld [vmem:[%s0 + $0x20] sm:$0xff]
  %v28 = vld [vmem:[%s0 + $0x28] sm:$0xff]
  %v29 = vld [vmem:[%s0 + $0x30] sm:$0xff]
  %v30 = vld [vmem:[%s0 + $0x38] sm:$0xff]
  %v31 = vld [vmem:[%s0 + $0x40] sm:$0xff]
  %v32 = vld [vmem:[%s0 + $0x48] sm:$0xff]
  %v33 = vld [vmem:[%s0 + $0x50] sm:$0xff]
  %v34 = vld [vmem:[%s0 + $0x58] sm:$0xff]
  %v35 = vld [vmem:[%s0 + $0x60] sm:$0xff]
  %v36 = vld [vmem:[%s0 + $0x68] sm:$0xff]
  %v37 = vld [vmem:[%s0 + $0x70] sm:$0xff]
  %v38 = vld [vmem:[%s0 + $0x78] sm:$0xff]
  %v39 = vld [vmem:[%s0 + $0x80] sm:$0xff]
  %v40 = vld [vmem:[%s0 + $0x88] sm:$0xff]
  %v41 = vld [vmem:[%s0 + $0x90] sm:$0xff]
  %v42 = vld [vmem:[%s0 + $0x98] sm:$0xff]
  %v43 = vld [vmem:[%s0 + $0xa0] sm:$0xff]
  %v44 = vld [vmem:[%s0 + $0xa8] sm:$0xff]
  %v45 = vld [vmem:[%s0 + $0xb0] sm:$0xff]
  %v46 = vld [vmem:[%s0 + $0xb8] sm:$0xff]
  %v47 = vld [vmem:[%s0 + $0xc0] sm:$0xff]
  %v48 = vld [vmem:[%s0 + $0xc8] sm:$0xff]
  %v49 = vld [vmem:[%s0 + $0xd0] sm:$0xff]
  %v50 = vld [vmem:[%s0 + $0xd8] sm:$0xff]
  %v51 = vld [vmem:[%s0 + $0xe0] sm:$0xff]
  %v52 = vld [vmem:[%s0 + $0xe8] sm:$0xff]
  %v53 = vld [vmem:[%s0 + $0xf0] sm:$0xff]
  %v54 = vld [vmem:[%s0 + $0xf8] sm:$0xff]
  %v55 = vld [vmem:[%s0 + $0x100] sm:$0xff]
  %v56 = vld [vmem:[%s0 + $0x108] sm:$0xff]
  %v57 = vld [vmem:[%s0 + $0x110] sm:$0xff]
  %v58 = vld [vmem:[%s0 + $0x118] sm:$0xff]
  %v59 = vld [vmem:[%s0 + $0x120] sm:$0xff]
  %v60 = vld [vmem:[%s0 + $0x128] sm:$0xff]
  %v61 = vld [vmem:[%s0 + $0x130] sm:$0xff]
  %v62 = vld [vmem:[%s0 + $0x138] sm:$0xff]
  %v63 = vld [vmem:[%s0 + $0x140] sm:$0xff]
  %v64 = vld [vmem:[%s0 + $0x148] sm:$0xff]
  %v65 = vld [vmem:[%s0 + $0x150] sm:$0xff]
  %v66 = vld [vmem:[%s0 + $0x158] sm:$0xff]
  %v67 = vld [vmem:[%s0 + $0x160] sm:$0xff]
  %v68 = vld [vmem:[%s0 + $0x168] sm:$0xff]
  %v69 = vld [vmem:[%s0 + $0x170] sm:$0xff]
  %v70 = vld [vmem:[%s0 + $0x178] sm:$0xff]
  %v71 = vld [vmem:[%s0 + $0x180] sm:$0xf]
  %v72 = vld [vmem:[%s0 + $0x188] sm:$0xf]
  %v73 = vpack.c.bf16 %v25, %v23
  %v74 = vpack.c.bf16 %v26, %v24
  %v75 = vpack.c.bf16 %v29, %v27
  %v76 = vpack.c.bf16 %v30, %v28
  %v77 = vpack.c.bf16 %v33, %v31
  %v78 = vpack.c.bf16 %v34, %v32
  %v79 = vpack.c.bf16 %v37, %v35
  %v80 = vpack.c.bf16 %v38, %v36
  %v81 = vpack.c.bf16 %v41, %v39
  %v82 = vpack.c.bf16 %v42, %v40
  %v83 = vpack.c.bf16 %v45, %v43
  %v84 = vpack.c.bf16 %v46, %v44
  %v85 = vpack.c.bf16 %v49, %v47
  %v86 = vpack.c.bf16 %v50, %v48
  %v87 = vpack.c.bf16 %v53, %v51
  %v88 = vpack.c.bf16 %v54, %v52
  %v89 = vpack.c.bf16 %v57, %v55
  %v90 = vpack.c.bf16 %v58, %v56
  %v91 = vpack.c.bf16 %v61, %v59
  %v92 = vpack.c.bf16 %v62, %v60
  %v93 = vpack.c.bf16 %v65, %v63
  %v94 = vpack.c.bf16 %v66, %v64
  %v95 = vpack.c.bf16 %v69, %v67
  %v96 = vpack.c.bf16 %v70, %v68
  %v97 = vpack.c.bf16 %v71, %v71
  %v98 = vpack.c.bf16 %v72, %v72
  %v99 = vld [vmem:[%s1] sm:$0xf]
  %v100 = vld [vmem:[%s1 + $0x4] sm:$0xf]
  %v101 = vld [vmem:[%s1 + $0x8] sm:$0xf]
  %v102 = vld [vmem:[%s1 + $0xc] sm:$0xf]
  %v103 = vld [vmem:[%s1 + $0x10] sm:$0xf]
  %v104 = vld [vmem:[%s1 + $0x14] sm:$0xf]
  %v105 = vld [vmem:[%s1 + $0x18] sm:$0xf]
  %v106 = vld [vmem:[%s1 + $0x1c] sm:$0xf]
  %v107 = vld [vmem:[%s1 + $0x20] sm:$0xf]
  %v108 = vld [vmem:[%s1 + $0x24] sm:$0xf]
  %v109 = vld [vmem:[%s1 + $0x28] sm:$0xf]
  %v110 = vld [vmem:[%s1 + $0x2c] sm:$0xf]
  %v111 = vld [vmem:[%s1 + $0x30] sm:$0xf]
  %v112 = vld [vmem:[%s1 + $0x34] sm:$0xf]
  %v113 = vld [vmem:[%s1 + $0x38] sm:$0xf]
  %v114 = vld [vmem:[%s1 + $0x3c] sm:$0xf]
  %v115 = vld [vmem:[%s1 + $0x40] sm:$0xf]
  %v116 = vld [vmem:[%s1 + $0x44] sm:$0xf]
  %v117 = vld [vmem:[%s1 + $0x48] sm:$0xf]
  %v118 = vld [vmem:[%s1 + $0x4c] sm:$0xf]
  %v119 = vld [vmem:[%s1 + $0x50] sm:$0xf]
  %v120 = vld [vmem:[%s1 + $0x54] sm:$0xf]
  %v121 = vld [vmem:[%s1 + $0x58] sm:$0xf]
  %v122 = vld [vmem:[%s1 + $0x5c] sm:$0xf]
  %v123 = vld [vmem:[%s1 + $0x60] sm:$0xf]
  %v124 = vld [vmem:[%s1 + $0x64] sm:$0xf]
  %v125 = vld [vmem:[%s2] sm:$0x1]
  %v127 = vperm.slane %v125, 0
  %v155 = vunpack.c.l.b16 %v99
  %v156 = vunpack.c.l.b16 %v100
  %v157 = vunpack.c.l.b16 %v101
  %v158 = vunpack.c.l.b16 %v102
  %v159 = vunpack.c.l.b16 %v103
  %v160 = vunpack.c.l.b16 %v104
  %v161 = vunpack.c.l.b16 %v105
  %v162 = vunpack.c.l.b16 %v106
  %v163 = vunpack.c.l.b16 %v107
  %v164 = vunpack.c.l.b16 %v108
  %v165 = vunpack.c.l.b16 %v109
  %v166 = vunpack.c.l.b16 %v110
  %v167 = vunpack.c.l.b16 %v111
  %v168 = vunpack.c.l.b16 %v112
  %v169 = vunpack.c.l.b16 %v113
  %v170 = vunpack.c.l.b16 %v114
  %v171 = vunpack.c.l.b16 %v115
  %v172 = vunpack.c.l.b16 %v116
  %v173 = vunpack.c.l.b16 %v117
  %v174 = vunpack.c.l.b16 %v118
  %v175 = vunpack.c.l.b16 %v119
  %v176 = vunpack.c.l.b16 %v120
  %v177 = vunpack.c.l.b16 %v121
  %v178 = vunpack.c.l.b16 %v122
  %v179 = vunpack.c.l.b16 %v123
  %v180 = vunpack.c.l.b16 %v124
  %v181 = vpack.c.b16 %v156, %v155
  %v182 = vpack.c.b16 %v158, %v157
  %v183 = vpack.c.b16 %v160, %v159
  %v184 = vpack.c.b16 %v162, %v161
  %v185 = vpack.c.b16 %v164, %v163
  %v186 = vpack.c.b16 %v166, %v165
  %v187 = vpack.c.b16 %v168, %v167
  %v188 = vpack.c.b16 %v170, %v169
  %v189 = vpack.c.b16 %v172, %v171
  %v190 = vpack.c.b16 %v174, %v173
  %v191 = vpack.c.b16 %v176, %v175
  %v192 = vpack.c.b16 %v178, %v177
  %v193 = vpack.c.b16 %v180, %v179
  %vm207 = vcmask 654336
  %v209 = vsel %vm207, %v74, 0
  %v212 = vsel %vm207, %v76, 0
  %v215 = vsel %vm207, %v78, 0
  %v218 = vsel %vm207, %v80, 0
  %v221 = vsel %vm207, %v82, 0
  %v224 = vsel %vm207, %v84, 0
  %v227 = vsel %vm207, %v86, 0
  %v230 = vsel %vm207, %v88, 0
  %v233 = vsel %vm207, %v90, 0
  %v236 = vsel %vm207, %v92, 0
  %v239 = vsel %vm207, %v94, 0
  %v242 = vsel %vm207, %v96, 0
  %v245 = vsel %vm207, %v98, 0
  %247 = vmatpush.bf16.msra.mxu0 %v188
  %248 = vmatpush.bf16.msra.mxu0 %v187
  %249 = vmatpush.bf16.msra.mxu0 %v186
  %250 = vmatpush.bf16.msra.mxu0 %v185
  %251 = vmatpush.bf16.msra.mxu0 %v184
  %252 = vmatpush.bf16.msra.mxu0 %v183
  %253 = vmatpush.bf16.msra.mxu0 %v182
  %254 = vmatpush.bf16.msra.mxu0 %v181
  %255 = vmatmul.bf16.gmra.mxu0 %v73
  %v256 = vpop.f32.mrf.mxu0
  %v257 = vadd.f32 %v127, %v256
  %v258 = vpop.f32.mrf.mxu0
  %v259 = vadd.f32 %v127, %v258
  %260 = vmatmul.bf16.gmra.mxu0 %v75
  %v261 = vpop.f32.mrf.mxu0
  %v262 = vadd.f32 %v127, %v261
  %v263 = vpop.f32.mrf.mxu0
  %v264 = vadd.f32 %v127, %v263
  %265 = vmatmul.bf16.gmra.mxu0 %v77
  %v266 = vpop.f32.mrf.mxu0
  %v267 = vadd.f32 %v127, %v266
  %v268 = vpop.f32.mrf.mxu0
  %v269 = vadd.f32 %v127, %v268
  %270 = vmatmul.bf16.gmra.mxu0 %v79
  %v271 = vpop.f32.mrf.mxu0
  %v272 = vadd.f32 %v127, %v271
  %v273 = vpop.f32.mrf.mxu0
  %v274 = vadd.f32 %v127, %v273
  %275 = vmatmul.bf16.gmra.mxu0 %v81
  %v276 = vpop.f32.mrf.mxu0
  %v277 = vadd.f32 %v127, %v276
  %v278 = vpop.f32.mrf.mxu0
  %v279 = vadd.f32 %v127, %v278
  %280 = vmatmul.bf16.gmra.mxu0 %v83
  %v281 = vpop.f32.mrf.mxu0
  %v282 = vadd.f32 %v127, %v281
  %v283 = vpop.f32.mrf.mxu0
  %v284 = vadd.f32 %v127, %v283
  %285 = vmatmul.bf16.gmra.mxu0 %v85
  %v286 = vpop.f32.mrf.mxu0
  %v287 = vadd.f32 %v127, %v286
  %v288 = vpop.f32.mrf.mxu0
  %v289 = vadd.f32 %v127, %v288
  %290 = vmatmul.bf16.gmra.mxu0 %v87
  %v291 = vpop.f32.mrf.mxu0
  %v292 = vadd.f32 %v127, %v291
  %v293 = vpop.f32.mrf.mxu0
  %v294 = vadd.f32 %v127, %v293
  %295 = vmatmul.bf16.gmra.mxu0 %v89
  %v296 = vpop.f32.mrf.mxu0
  %v297 = vadd.f32 %v127, %v296
  %v298 = vpop.f32.mrf.mxu0
  %v299 = vadd.f32 %v127, %v298
  %300 = vmatmul.bf16.gmra.mxu0 %v91
  %v301 = vpop.f32.mrf.mxu0
  %v302 = vadd.f32 %v127, %v301
  %v303 = vpop.f32.mrf.mxu0
  %v304 = vadd.f32 %v127, %v303
  %305 = vmatmul.bf16.gmra.mxu0 %v93
  %v306 = vpop.f32.mrf.mxu0
  %v307 = vadd.f32 %v127, %v306
  %v308 = vpop.f32.mrf.mxu0
  %v309 = vadd.f32 %v127, %v308
  %310 = vmatmul.bf16.gmra.mxu0 %v95
  %v311 = vpop.f32.mrf.mxu0
  %v312 = vadd.f32 %v127, %v311
  %v313 = vpop.f32.mrf.mxu0
  %v314 = vadd.f32 %v127, %v313
  %315 = vmatmul.bf16.gmra.mxu0 %v97
  %v316 = vpop.f32.mrf.mxu0
  %v317 = vadd.f32 %v127, %v316
  %v318 = vpop.f32.mrf.mxu0
  %319 = vdwg.mxu0
  %320 = vmatpush.bf16.msra.mxu0 0
  %321 = vmatpush.bf16.msra.mxu0 0
  %322 = vmatpush.bf16.msra.mxu0 0
  %323 = vmatpush.bf16.msra.mxu0 %v193
  %324 = vmatpush.bf16.msra.mxu0 %v192
  %325 = vmatpush.bf16.msra.mxu0 %v191
  %326 = vmatpush.bf16.msra.mxu0 %v190
  %327 = vmatpush.bf16.msra.mxu0 %v189
  %328 = vmatmul.bf16.gmra.mxu0 %v209
  %v329 = vpop.f32.mrf.mxu0
  %v330 = vadd.f32 %v257, %v329
  %v331 = vpop.f32.mrf.mxu0
  %v332 = vadd.f32 %v259, %v331
  %333 = vmatmul.bf16.gmra.mxu0 %v212
  %v334 = vpop.f32.mrf.mxu0
  %v335 = vadd.f32 %v262, %v334
  %v336 = vpop.f32.mrf.mxu0
  %v337 = vadd.f32 %v264, %v336
  %338 = vmatmul.bf16.gmra.mxu0 %v215
  %v339 = vpop.f32.mrf.mxu0
  %v340 = vadd.f32 %v267, %v339
  %v341 = vpop.f32.mrf.mxu0
  %v342 = vadd.f32 %v269, %v341
  %343 = vmatmul.bf16.gmra.mxu0 %v218
  %v344 = vpop.f32.mrf.mxu0
  %v345 = vadd.f32 %v272, %v344
  %v346 = vpop.f32.mrf.mxu0
  %v347 = vadd.f32 %v274, %v346
  %348 = vmatmul.bf16.gmra.mxu0 %v221
  %v349 = vpop.f32.mrf.mxu0
  %v350 = vadd.f32 %v277, %v349
  %v351 = vpop.f32.mrf.mxu0
  %v352 = vadd.f32 %v279, %v351
  %353 = vmatmul.bf16.gmra.mxu0 %v224
  %v354 = vpop.f32.mrf.mxu0
  %v355 = vadd.f32 %v282, %v354
  %v356 = vpop.f32.mrf.mxu0
  %v357 = vadd.f32 %v284, %v356
  %358 = vmatmul.bf16.gmra.mxu0 %v227
  %v359 = vpop.f32.mrf.mxu0
  %v360 = vadd.f32 %v287, %v359
  %v361 = vpop.f32.mrf.mxu0
  %v362 = vadd.f32 %v289, %v361
  %363 = vmatmul.bf16.gmra.mxu0 %v230
  %v364 = vpop.f32.mrf.mxu0
  %v365 = vadd.f32 %v292, %v364
  %v366 = vpop.f32.mrf.mxu0
  %v367 = vadd.f32 %v294, %v366
  %368 = vmatmul.bf16.gmra.mxu0 %v233
  %v369 = vpop.f32.mrf.mxu0
  %v370 = vadd.f32 %v297, %v369
  %v371 = vpop.f32.mrf.mxu0
  %v372 = vadd.f32 %v299, %v371
  %373 = vmatmul.bf16.gmra.mxu0 %v236
  %v374 = vpop.f32.mrf.mxu0
  %v375 = vadd.f32 %v302, %v374
  %v376 = vpop.f32.mrf.mxu0
  %v377 = vadd.f32 %v304, %v376
  %378 = vmatmul.bf16.gmra.mxu0 %v239
  %v379 = vpop.f32.mrf.mxu0
  %v380 = vadd.f32 %v307, %v379
  %v381 = vpop.f32.mrf.mxu0
  %v382 = vadd.f32 %v309, %v381
  %383 = vmatmul.bf16.gmra.mxu0 %v242
  %v384 = vpop.f32.mrf.mxu0
  %v385 = vadd.f32 %v312, %v384
  %v386 = vpop.f32.mrf.mxu0
  %v387 = vadd.f32 %v314, %v386
  %388 = vmatmul.bf16.gmra.mxu0 %v245
  %v389 = vpop.f32.mrf.mxu0
  %v390 = vadd.f32 %v317, %v389
  %v391 = vpop.f32.mrf.mxu0
  %392 = vdwg.mxu0
  %v393 = vmax.f32 %v330, 0.0
  %v394 = vmax.f32 %v332, 0.0
  %v395 = vmax.f32 %v335, 0.0
  %v396 = vmax.f32 %v337, 0.0
  %v397 = vmax.f32 %v340, 0.0
  %v398 = vmax.f32 %v342, 0.0
  %v399 = vmax.f32 %v345, 0.0
  %v400 = vmax.f32 %v347, 0.0
  %v401 = vmax.f32 %v350, 0.0
  %v402 = vmax.f32 %v352, 0.0
  %v403 = vmax.f32 %v355, 0.0
  %v404 = vmax.f32 %v357, 0.0
  %v405 = vmax.f32 %v360, 0.0
  %v406 = vmax.f32 %v362, 0.0
  %v407 = vmax.f32 %v365, 0.0
  %v408 = vmax.f32 %v367, 0.0
  %v409 = vmax.f32 %v370, 0.0
  %v410 = vmax.f32 %v372, 0.0
  %v411 = vmax.f32 %v375, 0.0
  %v412 = vmax.f32 %v377, 0.0
  %v413 = vmax.f32 %v380, 0.0
  %v414 = vmax.f32 %v382, 0.0
  %v415 = vmax.f32 %v385, 0.0
  %v416 = vmax.f32 %v387, 0.0
  %v417 = vmax.f32 %v390, 0.0
  %v418 = vld [vmem:[%s3] sm:$0x1]
  %v420 = vperm.slane %v418, 0
  %v422 = vmul.f32 %v393, %v420
  %v423 = vmul.f32 %v394, %v420
  %v424 = vmul.f32 %v395, %v420
  %v425 = vmul.f32 %v396, %v420
  %v426 = vmul.f32 %v397, %v420
  %v427 = vmul.f32 %v398, %v420
  %v428 = vmul.f32 %v399, %v420
  %v429 = vmul.f32 %v400, %v420
  %v430 = vmul.f32 %v401, %v420
  %v431 = vmul.f32 %v402, %v420
  %v432 = vmul.f32 %v403, %v420
  %v433 = vmul.f32 %v404, %v420
  %v434 = vmul.f32 %v405, %v420
  %v435 = vmul.f32 %v406, %v420
  %v436 = vmul.f32 %v407, %v420
  %v437 = vmul.f32 %v408, %v420
  %v438 = vmul.f32 %v409, %v420
  %v439 = vmul.f32 %v410, %v420
  %v440 = vmul.f32 %v411, %v420
  %v441 = vmul.f32 %v412, %v420
  %v442 = vmul.f32 %v413, %v420
  %v443 = vmul.f32 %v414, %v420
  %v444 = vmul.f32 %v415, %v420
  %v445 = vmul.f32 %v416, %v420
  %v446 = vmul.f32 %v417, %v420
  %vm447 = vcmask 261120
  %v448 = vsel %vm447, %v422, 0.0
  %449 = vadd.xlane.f32.xlu0 %v448
  %v450 = vpop.xlane.xlu0 %449
  %v451 = vsel %vm447, %v423, 0.0
  %452 = vadd.xlane.f32.xlu0 %v451
  %v453 = vpop.xlane.xlu0 %452
  %v454 = vsel %vm447, %v424, 0.0
  %455 = vadd.xlane.f32.xlu0 %v454
  %v456 = vpop.xlane.xlu0 %455
  %v457 = vsel %vm447, %v425, 0.0
  %458 = vadd.xlane.f32.xlu0 %v457
  %v459 = vpop.xlane.xlu0 %458
  %v460 = vsel %vm447, %v426, 0.0
  %461 = vadd.xlane.f32.xlu0 %v460
  %v462 = vpop.xlane.xlu0 %461
  %v463 = vsel %vm447, %v427, 0.0
  %464 = vadd.xlane.f32.xlu0 %v463
  %v465 = vpop.xlane.xlu0 %464
  %v466 = vsel %vm447, %v428, 0.0
  %467 = vadd.xlane.f32.xlu0 %v466
  %v468 = vpop.xlane.xlu0 %467
  %v469 = vsel %vm447, %v429, 0.0
  %470 = vadd.xlane.f32.xlu0 %v469
  %v471 = vpop.xlane.xlu0 %470
  %v472 = vsel %vm447, %v430, 0.0
  %473 = vadd.xlane.f32.xlu0 %v472
  %v474 = vpop.xlane.xlu0 %473
  %v475 = vsel %vm447, %v431, 0.0
  %476 = vadd.xlane.f32.xlu0 %v475
  %v477 = vpop.xlane.xlu0 %476
  %v478 = vsel %vm447, %v432, 0.0
  %479 = vadd.xlane.f32.xlu0 %v478
  %v480 = vpop.xlane.xlu0 %479
  %v481 = vsel %vm447, %v433, 0.0
  %482 = vadd.xlane.f32.xlu0 %v481
  %v483 = vpop.xlane.xlu0 %482
  %v484 = vsel %vm447, %v434, 0.0
  %485 = vadd.xlane.f32.xlu0 %v484
  %v486 = vpop.xlane.xlu0 %485
  %v487 = vsel %vm447, %v435, 0.0
  %488 = vadd.xlane.f32.xlu0 %v487
  %v489 = vpop.xlane.xlu0 %488
  %v490 = vsel %vm447, %v436, 0.0
  %491 = vadd.xlane.f32.xlu0 %v490
  %v492 = vpop.xlane.xlu0 %491
  %v493 = vsel %vm447, %v437, 0.0
  %494 = vadd.xlane.f32.xlu0 %v493
  %v495 = vpop.xlane.xlu0 %494
  %v496 = vsel %vm447, %v438, 0.0
  %497 = vadd.xlane.f32.xlu0 %v496
  %v498 = vpop.xlane.xlu0 %497
  %v499 = vsel %vm447, %v439, 0.0
  %500 = vadd.xlane.f32.xlu0 %v499
  %v501 = vpop.xlane.xlu0 %500
  %v502 = vsel %vm447, %v440, 0.0
  %503 = vadd.xlane.f32.xlu0 %v502
  %v504 = vpop.xlane.xlu0 %503
  %v505 = vsel %vm447, %v441, 0.0
  %506 = vadd.xlane.f32.xlu0 %v505
  %v507 = vpop.xlane.xlu0 %506
  %v508 = vsel %vm447, %v442, 0.0
  %509 = vadd.xlane.f32.xlu0 %v508
  %v510 = vpop.xlane.xlu0 %509
  %v511 = vsel %vm447, %v443, 0.0
  %512 = vadd.xlane.f32.xlu0 %v511
  %v513 = vpop.xlane.xlu0 %512
  %v514 = vsel %vm447, %v444, 0.0
  %515 = vadd.xlane.f32.xlu0 %v514
  %v516 = vpop.xlane.xlu0 %515
  %v517 = vsel %vm447, %v445, 0.0
  %518 = vadd.xlane.f32.xlu0 %v517
  %v519 = vpop.xlane.xlu0 %518
  %vm520 = vcmask 257024
  %v521 = vsel %vm520, %v446, 0.0
  %522 = vadd.xlane.f32.xlu0 %v521
  %v523 = vpop.xlane.xlu0 %522
  %v524 = vld [vmem:[#allocation2] sm:$0x1]
  %v526 = vperm.slane %v524, 0
  %v528 = vadd.f32 %v450, %v526
  %v529 = vadd.f32 %v453, %v526
  %v530 = vadd.f32 %v456, %v526
  %v531 = vadd.f32 %v459, %v526
  %v532 = vadd.f32 %v462, %v526
  %v533 = vadd.f32 %v465, %v526
  %v534 = vadd.f32 %v468, %v526
  %v535 = vadd.f32 %v471, %v526
  %v536 = vadd.f32 %v474, %v526
  %v537 = vadd.f32 %v477, %v526
  %v538 = vadd.f32 %v480, %v526
  %v539 = vadd.f32 %v483, %v526
  %v540 = vadd.f32 %v486, %v526
  %v541 = vadd.f32 %v489, %v526
  %v542 = vadd.f32 %v492, %v526
  %v543 = vadd.f32 %v495, %v526
  %v544 = vadd.f32 %v498, %v526
  %v545 = vadd.f32 %v501, %v526
  %v546 = vadd.f32 %v504, %v526
  %v547 = vadd.f32 %v507, %v526
  %v548 = vadd.f32 %v510, %v526
  %v549 = vadd.f32 %v513, %v526
  %v550 = vadd.f32 %v516, %v526
  %v551 = vadd.f32 %v519, %v526
  %v552 = vadd.f32 %v523, %v526
  %vm553 = vcmask 7168
  %554 = vst.msk [vmem:[%s5] sm:$0xff] %vm553, %v528
  %555 = vst.msk [vmem:[%s5 + $0x8] sm:$0xff] %vm553, %v529
  %556 = vst.msk [vmem:[%s5 + $0x10] sm:$0xff] %vm553, %v530
  %557 = vst.msk [vmem:[%s5 + $0x18] sm:$0xff] %vm553, %v531
  %558 = vst.msk [vmem:[%s5 + $0x20] sm:$0xff] %vm553, %v532
  %559 = vst.msk [vmem:[%s5 + $0x28] sm:$0xff] %vm553, %v533
  %560 = vst.msk [vmem:[%s5 + $0x30] sm:$0xff] %vm553, %v534
  %561 = vst.msk [vmem:[%s5 + $0x38] sm:$0xff] %vm553, %v535
  %562 = vst.msk [vmem:[%s5 + $0x40] sm:$0xff] %vm553, %v536
  %563 = vst.msk [vmem:[%s5 + $0x48] sm:$0xff] %vm553, %v537
  %564 = vst.msk [vmem:[%s5 + $0x50] sm:$0xff] %vm553, %v538
  %565 = vst.msk [vmem:[%s5 + $0x58] sm:$0xff] %vm553, %v539
  %566 = vst.msk [vmem:[%s5 + $0x60] sm:$0xff] %vm553, %v540
  %567 = vst.msk [vmem:[%s5 + $0x68] sm:$0xff] %vm553, %v541
  %568 = vst.msk [vmem:[%s5 + $0x70] sm:$0xff] %vm553, %v542
  %569 = vst.msk [vmem:[%s5 + $0x78] sm:$0xff] %vm553, %v543
  %570 = vst.msk [vmem:[%s5 + $0x80] sm:$0xff] %vm553, %v544
  %571 = vst.msk [vmem:[%s5 + $0x88] sm:$0xff] %vm553, %v545
  %572 = vst.msk [vmem:[%s5 + $0x90] sm:$0xff] %vm553, %v546
  %573 = vst.msk [vmem:[%s5 + $0x98] sm:$0xff] %vm553, %v547
  %574 = vst.msk [vmem:[%s5 + $0xa0] sm:$0xff] %vm553, %v548
  %575 = vst.msk [vmem:[%s5 + $0xa8] sm:$0xff] %vm553, %v549
  %576 = vst.msk [vmem:[%s5 + $0xb0] sm:$0xff] %vm553, %v550
  %577 = vst.msk [vmem:[%s5 + $0xb8] sm:$0xff] %vm553, %v551
  %vm578 = vcmask 3072
  %579 = vst.msk [vmem:[%s5 + $0xc0] sm:$0xf] %vm578, %v552
  // Predicated region
  $region22: #{stage1.3} parent=0 // pred_check
    _
  $region23: #{stage1.3} parent=0 // pred_check_branch
    %581 = sbr.rel (0) target = $region25
  $region24: #{stage1.3} parent=0 // pred_region
    _
  $region25: #{stage1.3} parent=0 // pred_fallthru
    _
  // Predicated region
  $region26: #{stage1.3} parent=0 // pred_check
    _
  $region27: #{stage1.3} parent=0 // pred_check_branch
    %583 = sbr.rel (0) target = $region29
  $region28: #{stage1.3} parent=0 // pred_region
    _
  $region29: #{stage1.3} parent=0 // pred_fallthru
    _

// kernel: stage1.2
$region0: #{stage1.2}
  #allocation0 [shape = 'u32[]', space=smem, size = 0x4, offset = 0x4, fixed_abs, tag = 'smem constant byte address 0x4 - core index']
  #allocation1 [shape = 'u32[72,128]{1,0:T(1,128)}', space=vmem, size = 0x9000, scoped, tag = 'internal scratch']
  %s0 = inlined_call_operand.vmem [shape: f32[196,8,64], index: 0, kind: input, shape index: {}]
  %s1 = inlined_call_operand.vmem [shape: f32[196,8], index: 1, kind: input, shape index: {}]
  %s2 = inlined_call_operand.vmem [shape: s32[196,1], index: 2, kind: input, shape index: {}]
  %s3 = inlined_call_operand.vmem [shape: f32[196,64], index: 3, kind: output, shape index: {}]
  %s4 = sld [smem:[#allocation0]]
  $region22: #{stage1.2} parent=0
    _
  %s6 = ssub.s32 1, %s4
  %s7 = scalar_select 0, %s6, %s4
  // Predicated region
  $region2: #{stage1.2} parent=0 // pred_check
    _
  $region3: #{stage1.2} parent=0 // pred_check_branch
    %9 = sbr.rel (0) target = $region5
  $region4: #{stage1.2} parent=0 // pred_region
    _
  $region5: #{stage1.2} parent=0 // pred_fallthru
    _
  // Predicated region
  $region6: #{stage1.2} parent=0 // pred_check
    _
  $region7: #{stage1.2} parent=0 // pred_check_branch
    %11 = sbr.rel (0) target = $region9
  $region8: #{stage1.2} parent=0 // pred_region
    _
  $region9: #{stage1.2} parent=0 // pred_fallthru
    _
  // Predicated region
  $region10: #{stage1.2} parent=0 // pred_check
    _
  $region11: #{stage1.2} parent=0 // pred_check_branch
    %13 = sbr.rel (0) target = $region13
  $region12: #{stage1.2} parent=0 // pred_region
    _
  $region13: #{stage1.2} parent=0 // pred_fallthru
    _
  %v14 = vld [vmem:[%s0] sm:$0xff]
  %v15 = vld [vmem:[%s0 + $0x8] sm:$0xff]
  %v16 = vld [vmem:[%s0 + $0x10] sm:$0xff]
  %v17 = vld [vmem:[%s0 + $0x18] sm:$0xff]
  %v18 = vld [vmem:[%s0 + $0x20] sm:$0xff]
  %v19 = vld [vmem:[%s0 + $0x28] sm:$0xff]
  %v20 = vld [vmem:[%s0 + $0x30] sm:$0xff]
  %v21 = vld [vmem:[%s0 + $0x38] sm:$0xff]
  %v22 = vld [vmem:[%s0 + $0x40] sm:$0xff]
  %v23 = vld [vmem:[%s0 + $0x48] sm:$0xff]
  %v24 = vld [vmem:[%s0 + $0x50] sm:$0xff]
  %v25 = vld [vmem:[%s0 + $0x58] sm:$0xff]
  %v26 = vld [vmem:[%s0 + $0x60] sm:$0xff]
  %v27 = vld [vmem:[%s0 + $0x68] sm:$0xff]
  %v28 = vld [vmem:[%s0 + $0x70] sm:$0xff]
  %v29 = vld [vmem:[%s0 + $0x78] sm:$0xff]
  %v30 = vld [vmem:[%s0 + $0x80] sm:$0xff]
  %v31 = vld [vmem:[%s0 + $0x88] sm:$0xff]
  %v32 = vld [vmem:[%s0 + $0x90] sm:$0xff]
  %v33 = vld [vmem:[%s0 + $0x98] sm:$0xff]
  %v34 = vld [vmem:[%s0 + $0xa0] sm:$0xff]
  %v35 = vld [vmem:[%s0 + $0xa8] sm:$0xff]
  %v36 = vld [vmem:[%s0 + $0xb0] sm:$0xff]
  %v37 = vld [vmem:[%s0 + $0xb8] sm:$0xff]
  %v38 = vld [vmem:[%s0 + $0xc0] sm:$0xff]
  %v39 = vld [vmem:[%s0 + $0xc8] sm:$0xff]
  %v40 = vld [vmem:[%s0 + $0xd0] sm:$0xff]
  %v41 = vld [vmem:[%s0 + $0xd8] sm:$0xff]
  %v42 = vld [vmem:[%s0 + $0xe0] sm:$0xff]
  %v43 = vld [vmem:[%s0 + $0xe8] sm:$0xff]
  %v44 = vld [vmem:[%s0 + $0xf0] sm:$0xff]
  %v45 = vld [vmem:[%s0 + $0xf8] sm:$0xff]
  %v46 = vld [vmem:[%s0 + $0x100] sm:$0xff]
  %v47 = vld [vmem:[%s0 + $0x108] sm:$0xff]
  %v48 = vld [vmem:[%s0 + $0x110] sm:$0xff]
  %v49 = vld [vmem:[%s0 + $0x118] sm:$0xff]
  %v50 = vld [vmem:[%s0 + $0x120] sm:$0xff]
  %v51 = vld [vmem:[%s0 + $0x128] sm:$0xff]
  %v52 = vld [vmem:[%s0 + $0x130] sm:$0xff]
  %v53 = vld [vmem:[%s0 + $0x138] sm:$0xff]
  %v54 = vld [vmem:[%s0 + $0x140] sm:$0xff]
  %v55 = vld [vmem:[%s0 + $0x148] sm:$0xff]
  %v56 = vld [vmem:[%s0 + $0x150] sm:$0xff]
  %v57 = vld [vmem:[%s0 + $0x158] sm:$0xff]
  %v58 = vld [vmem:[%s0 + $0x160] sm:$0xff]
  %v59 = vld [vmem:[%s0 + $0x168] sm:$0xff]
  %v60 = vld [vmem:[%s0 + $0x170] sm:$0xff]
  %v61 = vld [vmem:[%s0 + $0x178] sm:$0xff]
  %v62 = vld [vmem:[%s0 + $0x180] sm:$0xff]
  %v63 = vld [vmem:[%s0 + $0x188] sm:$0xff]
  %v64 = vld [vmem:[%s0 + $0x190] sm:$0xff]
  %v65 = vld [vmem:[%s0 + $0x198] sm:$0xff]
  %v66 = vld [vmem:[%s0 + $0x1a0] sm:$0xff]
  %v67 = vld [vmem:[%s0 + $0x1a8] sm:$0xff]
  %v68 = vld [vmem:[%s0 + $0x1b0] sm:$0xff]
  %v69 = vld [vmem:[%s0 + $0x1b8] sm:$0xff]
  %v70 = vld [vmem:[%s0 + $0x1c0] sm:$0xff]
  %v71 = vld [vmem:[%s0 + $0x1c8] sm:$0xff]
  %v72 = vld [vmem:[%s0 + $0x1d0] sm:$0xff]
  %v73 = vld [vmem:[%s0 + $0x1d8] sm:$0xff]
  %v74 = vld [vmem:[%s0 + $0x1e0] sm:$0xff]
  %v75 = vld [vmem:[%s0 + $0x1e8] sm:$0xff]
  %v76 = vld [vmem:[%s0 + $0x1f0] sm:$0xff]
  %v77 = vld [vmem:[%s0 + $0x1f8] sm:$0xff]
  %v78 = vld [vmem:[%s0 + $0x200] sm:$0xff]
  %v79 = vld [vmem:[%s0 + $0x208] sm:$0xff]
  %v80 = vld [vmem:[%s0 + $0x210] sm:$0xff]
  %v81 = vld [vmem:[%s0 + $0x218] sm:$0xff]
  %v82 = vld [vmem:[%s0 + $0x220] sm:$0xff]
  %v83 = vld [vmem:[%s0 + $0x228] sm:$0xff]
  %v84 = vld [vmem:[%s0 + $0x230] sm:$0xff]
  %v85 = vld [vmem:[%s0 + $0x238] sm:$0xff]
  %v86 = vld [vmem:[%s0 + $0x240] sm:$0xff]
  %v87 = vld [vmem:[%s0 + $0x248] sm:$0xff]
  %v88 = vld [vmem:[%s0 + $0x250] sm:$0xff]
  %v89 = vld [vmem:[%s0 + $0x258] sm:$0xff]
  %v90 = vld [vmem:[%s0 + $0x260] sm:$0xff]
  %v91 = vld [vmem:[%s0 + $0x268] sm:$0xff]
  %v92 = vld [vmem:[%s0 + $0x270] sm:$0xff]
  %v93 = vld [vmem:[%s0 + $0x278] sm:$0xff]
  %v94 = vld [vmem:[%s0 + $0x280] sm:$0xff]
  %v95 = vld [vmem:[%s0 + $0x288] sm:$0xff]
  %v96 = vld [vmem:[%s0 + $0x290] sm:$0xff]
  %v97 = vld [vmem:[%s0 + $0x298] sm:$0xff]
  %v98 = vld [vmem:[%s0 + $0x2a0] sm:$0xff]
  %v99 = vld [vmem:[%s0 + $0x2a8] sm:$0xff]
  %v100 = vld [vmem:[%s0 + $0x2b0] sm:$0xff]
  %v101 = vld [vmem:[%s0 + $0x2b8] sm:$0xff]
  %v102 = vld [vmem:[%s0 + $0x2c0] sm:$0xff]
  %v103 = vld [vmem:[%s0 + $0x2c8] sm:$0xff]
  %v104 = vld [vmem:[%s0 + $0x2d0] sm:$0xff]
  %v105 = vld [vmem:[%s0 + $0x2d8] sm:$0xff]
  %v106 = vld [vmem:[%s0 + $0x2e0] sm:$0xff]
  %v107 = vld [vmem:[%s0 + $0x2e8] sm:$0xff]
  %v108 = vld [vmem:[%s0 + $0x2f0] sm:$0xff]
  %v109 = vld [vmem:[%s0 + $0x2f8] sm:$0xff]
  %v110 = vld [vmem:[%s0 + $0x300] sm:$0xff]
  %v111 = vld [vmem:[%s0 + $0x308] sm:$0xff]
  %v112 = vld [vmem:[%s0 + $0x310] sm:$0xff]
  %v113 = vld [vmem:[%s0 + $0x318] sm:$0xff]
  %v114 = vld [vmem:[%s0 + $0x320] sm:$0xff]
  %v115 = vld [vmem:[%s0 + $0x328] sm:$0xff]
  %v116 = vld [vmem:[%s0 + $0x330] sm:$0xff]
  %v117 = vld [vmem:[%s0 + $0x338] sm:$0xff]
  %v118 = vld [vmem:[%s0 + $0x340] sm:$0xff]
  %v119 = vld [vmem:[%s0 + $0x348] sm:$0xff]
  %v120 = vld [vmem:[%s0 + $0x350] sm:$0xff]
  %v121 = vld [vmem:[%s0 + $0x358] sm:$0xff]
  %v122 = vld [vmem:[%s0 + $0x360] sm:$0xff]
  %v123 = vld [vmem:[%s0 + $0x368] sm:$0xff]
  %v124 = vld [vmem:[%s0 + $0x370] sm:$0xff]
  %v125 = vld [vmem:[%s0 + $0x378] sm:$0xff]
  %v126 = vld [vmem:[%s0 + $0x380] sm:$0xff]
  %v127 = vld [vmem:[%s0 + $0x388] sm:$0xff]
  %v128 = vld [vmem:[%s0 + $0x390] sm:$0xff]
  %v129 = vld [vmem:[%s0 + $0x398] sm:$0xff]
  %v130 = vld [vmem:[%s0 + $0x3a0] sm:$0xff]
  %v131 = vld [vmem:[%s0 + $0x3a8] sm:$0xff]
  %v132 = vld [vmem:[%s0 + $0x3b0] sm:$0xff]
  %v133 = vld [vmem:[%s0 + $0x3b8] sm:$0xff]
  %v134 = vld [vmem:[%s0 + $0x3c0] sm:$0xff]
  %v135 = vld [vmem:[%s0 + $0x3c8] sm:$0xff]
  %v136 = vld [vmem:[%s0 + $0x3d0] sm:$0xff]
  %v137 = vld [vmem:[%s0 + $0x3d8] sm:$0xff]
  %v138 = vld [vmem:[%s0 + $0x3e0] sm:$0xff]
  %v139 = vld [vmem:[%s0 + $0x3e8] sm:$0xff]
  %v140 = vld [vmem:[%s0 + $0x3f0] sm:$0xff]
  %v141 = vld [vmem:[%s0 + $0x3f8] sm:$0xff]
  %v142 = vld [vmem:[%s0 + $0x400] sm:$0xff]
  %v143 = vld [vmem:[%s0 + $0x408] sm:$0xff]
  %v144 = vld [vmem:[%s0 + $0x410] sm:$0xff]
  %v145 = vld [vmem:[%s0 + $0x418] sm:$0xff]
  %v146 = vld [vmem:[%s0 + $0x420] sm:$0xff]
  %v147 = vld [vmem:[%s0 + $0x428] sm:$0xff]
  %v148 = vld [vmem:[%s0 + $0x430] sm:$0xff]
  %v149 = vld [vmem:[%s0 + $0x438] sm:$0xff]
  %v150 = vld [vmem:[%s0 + $0x440] sm:$0xff]
  %v151 = vld [vmem:[%s0 + $0x448] sm:$0xff]
  %v152 = vld [vmem:[%s0 + $0x450] sm:$0xff]
  %v153 = vld [vmem:[%s0 + $0x458] sm:$0xff]
  %v154 = vld [vmem:[%s0 + $0x460] sm:$0xff]
  %v155 = vld [vmem:[%s0 + $0x468] sm:$0xff]
  %v156 = vld [vmem:[%s0 + $0x470] sm:$0xff]
  %v157 = vld [vmem:[%s0 + $0x478] sm:$0xff]
  %v158 = vld [vmem:[%s0 + $0x480] sm:$0xff]
  %v159 = vld [vmem:[%s0 + $0x488] sm:$0xff]
  %v160 = vld [vmem:[%s0 + $0x490] sm:$0xff]
  %v161 = vld [vmem:[%s0 + $0x498] sm:$0xff]
  %v162 = vld [vmem:[%s0 + $0x4a0] sm:$0xff]
  %v163 = vld [vmem:[%s0 + $0x4a8] sm:$0xff]
  %v164 = vld [vmem:[%s0 + $0x4b0] sm:$0xff]
  %v165 = vld [vmem:[%s0 + $0x4b8] sm:$0xff]
  %v166 = vld [vmem:[%s0 + $0x4c0] sm:$0xff]
  %v167 = vld [vmem:[%s0 + $0x4c8] sm:$0xff]
  %v168 = vld [vmem:[%s0 + $0x4d0] sm:$0xff]
  %v169 = vld [vmem:[%s0 + $0x4d8] sm:$0xff]
  %v170 = vld [vmem:[%s0 + $0x4e0] sm:$0xff]
  %v171 = vld [vmem:[%s0 + $0x4e8] sm:$0xff]
  %v172 = vld [vmem:[%s0 + $0x4f0] sm:$0xff]
  %v173 = vld [vmem:[%s0 + $0x4f8] sm:$0xff]
  %v174 = vld [vmem:[%s0 + $0x500] sm:$0xff]
  %v175 = vld [vmem:[%s0 + $0x508] sm:$0xff]
  %v176 = vld [vmem:[%s0 + $0x510] sm:$0xff]
  %v177 = vld [vmem:[%s0 + $0x518] sm:$0xff]
  %v178 = vld [vmem:[%s0 + $0x520] sm:$0xff]
  %v179 = vld [vmem:[%s0 + $0x528] sm:$0xff]
  %v180 = vld [vmem:[%s0 + $0x530] sm:$0xff]
  %v181 = vld [vmem:[%s0 + $0x538] sm:$0xff]
  %v182 = vld [vmem:[%s0 + $0x540] sm:$0xff]
  %v183 = vld [vmem:[%s0 + $0x548] sm:$0xff]
  %v184 = vld [vmem:[%s0 + $0x550] sm:$0xff]
  %v185 = vld [vmem:[%s0 + $0x558] sm:$0xff]
  %v186 = vld [vmem:[%s0 + $0x560] sm:$0xff]
  %v187 = vld [vmem:[%s0 + $0x568] sm:$0xff]
  %v188 = vld [vmem:[%s0 + $0x570] sm:$0xff]
  %v189 = vld [vmem:[%s0 + $0x578] sm:$0xff]
  %v190 = vld [vmem:[%s0 + $0x580] sm:$0xff]
  %v191 = vld [vmem:[%s0 + $0x588] sm:$0xff]
  %v192 = vld [vmem:[%s0 + $0x590] sm:$0xff]
  %v193 = vld [vmem:[%s0 + $0x598] sm:$0xff]
  %v194 = vld [vmem:[%s0 + $0x5a0] sm:$0xff]
  %v195 = vld [vmem:[%s0 + $0x5a8] sm:$0xff]
  %v196 = vld [vmem:[%s0 + $0x5b0] sm:$0xff]
  %v197 = vld [vmem:[%s0 + $0x5b8] sm:$0xff]
  %v198 = vld [vmem:[%s0 + $0x5c0] sm:$0xff]
  %v199 = vld [vmem:[%s0 + $0x5c8] sm:$0xff]
  %v200 = vld [vmem:[%s0 + $0x5d0] sm:$0xff]
  %v201 = vld [vmem:[%s0 + $0x5d8] sm:$0xff]
  %v202 = vld [vmem:[%s0 + $0x5e0] sm:$0xff]
  %v203 = vld [vmem:[%s0 + $0x5e8] sm:$0xff]
  %v204 = vld [vmem:[%s0 + $0x5f0] sm:$0xff]
  %v205 = vld [vmem:[%s0 + $0x5f8] sm:$0xff]
  %v206 = vld [vmem:[%s0 + $0x600] sm:$0xff]
  %v207 = vld [vmem:[%s0 + $0x608] sm:$0xff]
  %v208 = vld [vmem:[%s0 + $0x610] sm:$0xff]
  %v209 = vld [vmem:[%s0 + $0x618] sm:$0xff]
  %v210 = vld [vmem:[%s1] sm:$0xff]
  %v211 = vld [vmem:[%s1 + $0x8] sm:$0xff]
  %v212 = vld [vmem:[%s1 + $0x10] sm:$0xff]
  %v213 = vld [vmem:[%s1 + $0x18] sm:$0xff]
  %v214 = vld [vmem:[%s1 + $0x20] sm:$0xff]
  %v215 = vld [vmem:[%s1 + $0x28] sm:$0xff]
  %v216 = vld [vmem:[%s1 + $0x30] sm:$0xff]
  %v217 = vld [vmem:[%s1 + $0x38] sm:$0xff]
  %v218 = vld [vmem:[%s1 + $0x40] sm:$0xff]
  %v219 = vld [vmem:[%s1 + $0x48] sm:$0xff]
  %v220 = vld [vmem:[%s1 + $0x50] sm:$0xff]
  %v221 = vld [vmem:[%s1 + $0x58] sm:$0xff]
  %v222 = vld [vmem:[%s1 + $0x60] sm:$0xff]
  %v223 = vld [vmem:[%s1 + $0x68] sm:$0xff]
  %v224 = vld [vmem:[%s1 + $0x70] sm:$0xff]
  %v225 = vld [vmem:[%s1 + $0x78] sm:$0xff]
  %v226 = vld [vmem:[%s1 + $0x80] sm:$0xff]
  %v227 = vld [vmem:[%s1 + $0x88] sm:$0xff]
  %v228 = vld [vmem:[%s1 + $0x90] sm:$0xff]
  %v229 = vld [vmem:[%s1 + $0x98] sm:$0xff]
  %v230 = vld [vmem:[%s1 + $0xa0] sm:$0xff]
  %v231 = vld [vmem:[%s1 + $0xa8] sm:$0xff]
  %v232 = vld [vmem:[%s1 + $0xb0] sm:$0xff]
  %v233 = vld [vmem:[%s1 + $0xb8] sm:$0xff]
  %v234 = vld [vmem:[%s1 + $0xc0] sm:$0xf]
  %v235 = vlaneseq
  %v236 = vand.u32 %v235, 127
  %v237 = vld [vmem:[%s2] sm:$0xff]
  %v238 = vld [vmem:[%s2 + $0x8] sm:$0xff]
  %v239 = vld [vmem:[%s2 + $0x10] sm:$0xff]
  %v240 = vld [vmem:[%s2 + $0x18] sm:$0xff]
  %v241 = vld [vmem:[%s2 + $0x20] sm:$0xff]
  %v242 = vld [vmem:[%s2 + $0x28] sm:$0xff]
  %v243 = vld [vmem:[%s2 + $0x30] sm:$0xff]
  %v244 = vld [vmem:[%s2 + $0x38] sm:$0xff]
  %v245 = vld [vmem:[%s2 + $0x40] sm:$0xff]
  %v246 = vld [vmem:[%s2 + $0x48] sm:$0xff]
  %v247 = vld [vmem:[%s2 + $0x50] sm:$0xff]
  %v248 = vld [vmem:[%s2 + $0x58] sm:$0xff]
  %v249 = vld [vmem:[%s2 + $0x60] sm:$0xff]
  %v250 = vld [vmem:[%s2 + $0x68] sm:$0xff]
  %v251 = vld [vmem:[%s2 + $0x70] sm:$0xff]
  %v252 = vld [vmem:[%s2 + $0x78] sm:$0xff]
  %v253 = vld [vmem:[%s2 + $0x80] sm:$0xff]
  %v254 = vld [vmem:[%s2 + $0x88] sm:$0xff]
  %v255 = vld [vmem:[%s2 + $0x90] sm:$0xff]
  %v256 = vld [vmem:[%s2 + $0x98] sm:$0xff]
  %v257 = vld [vmem:[%s2 + $0xa0] sm:$0xff]
  %v258 = vld [vmem:[%s2 + $0xa8] sm:$0xff]
  %v259 = vld [vmem:[%s2 + $0xb0] sm:$0xff]
  %v260 = vld [vmem:[%s2 + $0xb8] sm:$0xff]
  %v261 = vld [vmem:[%s2 + $0xc0] sm:$0xf]
  %262 = vset.pattern.permute.xlu0 0
  %263 = vperm.xlu0 %262, %v237
  %v264 = vpop.permute.xlu0 %263
  %265 = vset.pattern.permute.xlu0 0
  %266 = vperm.xlu0 %265, %v238
  %v267 = vpop.permute.xlu0 %266
  %268 = vset.pattern.permute.xlu0 0
  %269 = vperm.xlu0 %268, %v239
  %v270 = vpop.permute.xlu0 %269
  %271 = vset.pattern.permute.xlu0 0
  %272 = vperm.xlu0 %271, %v240
  %v273 = vpop.permute.xlu0 %272
  %274 = vset.pattern.permute.xlu0 0
  %275 = vperm.xlu0 %274, %v241
  %v276 = vpop.permute.xlu0 %275
  %277 = vset.pattern.permute.xlu0 0
  %278 = vperm.xlu0 %277, %v242
  %v279 = vpop.permute.xlu0 %278
  %280 = vset.pattern.permute.xlu0 0
  %281 = vperm.xlu0 %280, %v243
  %v282 = vpop.permute.xlu0 %281
  %283 = vset.pattern.permute.xlu0 0
  %284 = vperm.xlu0 %283, %v244
  %v285 = vpop.permute.xlu0 %284
  %286 = vset.pattern.permute.xlu0 0
  %287 = vperm.xlu0 %286, %v245
  %v288 = vpop.permute.xlu0 %287
  %289 = vset.pattern.permute.xlu0 0
  %290 = vperm.xlu0 %289, %v246
  %v291 = vpop.permute.xlu0 %290
  %292 = vset.pattern.permute.xlu0 0
  %293 = vperm.xlu0 %292, %v247
  %v294 = vpop.permute.xlu0 %293
  %295 = vset.pattern.permute.xlu0 0
  %296 = vperm.xlu0 %295, %v248
  %v297 = vpop.permute.xlu0 %296
  %298 = vset.pattern.permute.xlu0 0
  %299 = vperm.xlu0 %298, %v249
  %v300 = vpop.permute.xlu0 %299
  %301 = vset.pattern.permute.xlu0 0
  %302 = vperm.xlu0 %301, %v250
  %v303 = vpop.permute.xlu0 %302
  %304 = vset.pattern.permute.xlu0 0
  %305 = vperm.xlu0 %304, %v251
  %v306 = vpop.permute.xlu0 %305
  %307 = vset.pattern.permute.xlu0 0
  %308 = vperm.xlu0 %307, %v252
  %v309 = vpop.permute.xlu0 %308
  %310 = vset.pattern.permute.xlu0 0
  %311 = vperm.xlu0 %310, %v253
  %v312 = vpop.permute.xlu0 %311
  %313 = vset.pattern.permute.xlu0 0
  %314 = vperm.xlu0 %313, %v254
  %v315 = vpop.permute.xlu0 %314
  %316 = vset.pattern.permute.xlu0 0
  %317 = vperm.xlu0 %316, %v255
  %v318 = vpop.permute.xlu0 %317
  %319 = vset.pattern.permute.xlu0 0
  %320 = vperm.xlu0 %319, %v256
  %v321 = vpop.permute.xlu0 %320
  %322 = vset.pattern.permute.xlu0 0
  %323 = vperm.xlu0 %322, %v257
  %v324 = vpop.permute.xlu0 %323
  %325 = vset.pattern.permute.xlu0 0
  %326 = vperm.xlu0 %325, %v258
  %v327 = vpop.permute.xlu0 %326
  %328 = vset.pattern.permute.xlu0 0
  %329 = vperm.xlu0 %328, %v259
  %v330 = vpop.permute.xlu0 %329
  %331 = vset.pattern.permute.xlu0 0
  %332 = vperm.xlu0 %331, %v260
  %v333 = vpop.permute.xlu0 %332
  %334 = vset.pattern.permute.xlu0 0
  %335 = vperm.xlu0 %334, %v261
  %v336 = vpop.permute.xlu0 %335
  %vm337 = vcmp.lt.s32.totalorder %v236, %v264
  %vm338 = vcmp.lt.s32.totalorder %v236, %v267
  %vm339 = vcmp.lt.s32.totalorder %v236, %v270
  %vm340 = vcmp.lt.s32.totalorder %v236, %v273
  %vm341 = vcmp.lt.s32.totalorder %v236, %v276
  %vm342 = vcmp.lt.s32.totalorder %v236, %v279
  %vm343 = vcmp.lt.s32.totalorder %v236, %v282
  %vm344 = vcmp.lt.s32.totalorder %v236, %v285
  %vm345 = vcmp.lt.s32.totalorder %v236, %v288
  %vm346 = vcmp.lt.s32.totalorder %v236, %v291
  %vm347 = vcmp.lt.s32.totalorder %v236, %v294
  %vm348 = vcmp.lt.s32.totalorder %v236, %v297
  %vm349 = vcmp.lt.s32.totalorder %v236, %v300
  %vm350 = vcmp.lt.s32.totalorder %v236, %v303
  %vm351 = vcmp.lt.s32.totalorder %v236, %v306
  %vm352 = vcmp.lt.s32.totalorder %v236, %v309
  %vm353 = vcmp.lt.s32.totalorder %v236, %v312
  %vm354 = vcmp.lt.s32.totalorder %v236, %v315
  %vm355 = vcmp.lt.s32.totalorder %v236, %v318
  %vm356 = vcmp.lt.s32.totalorder %v236, %v321
  %vm357 = vcmp.lt.s32.totalorder %v236, %v324
  %vm358 = vcmp.lt.s32.totalorder %v236, %v327
  %vm359 = vcmp.lt.s32.totalorder %v236, %v330
  %vm360 = vcmp.lt.s32.totalorder %v236, %v333
  %vm361 = vcmp.lt.s32.totalorder %v236, %v336
  %v362 = vsel %vm337, %v210, -1e+30
  %v363 = vsel %vm338, %v211, -1e+30
  %v364 = vsel %vm339, %v212, -1e+30
  %v365 = vsel %vm340, %v213, -1e+30
  %v366 = vsel %vm341, %v214, -1e+30
  %v367 = vsel %vm342, %v215, -1e+30
  %v368 = vsel %vm343, %v216, -1e+30
  %v369 = vsel %vm344, %v217, -1e+30
  %v370 = vsel %vm345, %v218, -1e+30
  %v371 = vsel %vm346, %v219, -1e+30
  %v372 = vsel %vm347, %v220, -1e+30
  %v373 = vsel %vm348, %v221, -1e+30
  %v374 = vsel %vm349, %v222, -1e+30
  %v375 = vsel %vm350, %v223, -1e+30
  %v376 = vsel %vm351, %v224, -1e+30
  %v377 = vsel %vm352, %v225, -1e+30
  %v378 = vsel %vm353, %v226, -1e+30
  %v379 = vsel %vm354, %v227, -1e+30
  %v380 = vsel %vm355, %v228, -1e+30
  %v381 = vsel %vm356, %v229, -1e+30
  %v382 = vsel %vm357, %v230, -1e+30
  %v383 = vsel %vm358, %v231, -1e+30
  %v384 = vsel %vm359, %v232, -1e+30
  %v385 = vsel %vm360, %v233, -1e+30
  %v386 = vsel %vm361, %v234, -1e+30
  %vm387 = vcmask 64512
  %v388 = vsel %vm387, %v362, -inf
  %389 = vmax.xlane.f32.xlu0 %v388
  %v390 = vpop.xlane.xlu0 %389
  %v391 = vsel %vm387, %v363, -inf
  %392 = vmax.xlane.f32.xlu0 %v391
  %v393 = vpop.xlane.xlu0 %392
  %v394 = vsel %vm387, %v364, -inf
  %395 = vmax.xlane.f32.xlu0 %v394
  %v396 = vpop.xlane.xlu0 %395
  %v397 = vsel %vm387, %v365, -inf
  %398 = vmax.xlane.f32.xlu0 %v397
  %v399 = vpop.xlane.xlu0 %398
  %v400 = vsel %vm387, %v366, -inf
  %401 = vmax.xlane.f32.xlu0 %v400
  %v402 = vpop.xlane.xlu0 %401
  %v403 = vsel %vm387, %v367, -inf
  %404 = vmax.xlane.f32.xlu0 %v403
  %v405 = vpop.xlane.xlu0 %404
  %v406 = vsel %vm387, %v368, -inf
  %407 = vmax.xlane.f32.xlu0 %v406
  %v408 = vpop.xlane.xlu0 %407
  %v409 = vsel %vm387, %v369, -inf
  %410 = vmax.xlane.f32.xlu0 %v409
  %v411 = vpop.xlane.xlu0 %410
  %v412 = vsel %vm387, %v370, -inf
  %413 = vmax.xlane.f32.xlu0 %v412
  %v414 = vpop.xlane.xlu0 %413
  %v415 = vsel %vm387, %v371, -inf
  %416 = vmax.xlane.f32.xlu0 %v415
  %v417 = vpop.xlane.xlu0 %416
  %v418 = vsel %vm387, %v372, -inf
  %419 = vmax.xlane.f32.xlu0 %v418
  %v420 = vpop.xlane.xlu0 %419
  %v421 = vsel %vm387, %v373, -inf
  %422 = vmax.xlane.f32.xlu0 %v421
  %v423 = vpop.xlane.xlu0 %422
  %v424 = vsel %vm387, %v374, -inf
  %425 = vmax.xlane.f32.xlu0 %v424
  %v426 = vpop.xlane.xlu0 %425
  %v427 = vsel %vm387, %v375, -inf
  %428 = vmax.xlane.f32.xlu0 %v427
  %v429 = vpop.xlane.xlu0 %428
  %v430 = vsel %vm387, %v376, -inf
  %431 = vmax.xlane.f32.xlu0 %v430
  %v432 = vpop.xlane.xlu0 %431
  %v433 = vsel %vm387, %v377, -inf
  %434 = vmax.xlane.f32.xlu0 %v433
  %v435 = vpop.xlane.xlu0 %434
  %v436 = vsel %vm387, %v378, -inf
  %437 = vmax.xlane.f32.xlu0 %v436
  %v438 = vpop.xlane.xlu0 %437
  %v439 = vsel %vm387, %v379, -inf
  %440 = vmax.xlane.f32.xlu0 %v439
  %v441 = vpop.xlane.xlu0 %440
  %v442 = vsel %vm387, %v380, -inf
  %443 = vmax.xlane.f32.xlu0 %v442
  %v444 = vpop.xlane.xlu0 %443
  %v445 = vsel %vm387, %v381, -inf
  %446 = vmax.xlane.f32.xlu0 %v445
  %v447 = vpop.xlane.xlu0 %446
  %v448 = vsel %vm387, %v382, -inf
  %449 = vmax.xlane.f32.xlu0 %v448
  %v450 = vpop.xlane.xlu0 %449
  %v451 = vsel %vm387, %v383, -inf
  %452 = vmax.xlane.f32.xlu0 %v451
  %v453 = vpop.xlane.xlu0 %452
  %v454 = vsel %vm387, %v384, -inf
  %455 = vmax.xlane.f32.xlu0 %v454
  %v456 = vpop.xlane.xlu0 %455
  %v457 = vsel %vm387, %v385, -inf
  %458 = vmax.xlane.f32.xlu0 %v457
  %v459 = vpop.xlane.xlu0 %458
  %vm460 = vcmask 60416
  %v461 = vsel %vm460, %v386, -inf
  %462 = vmax.xlane.f32.xlu0 %v461
  %v463 = vpop.xlane.xlu0 %462
  %v464 = vsub.f32 %v362, %v390
  %v465 = vsub.f32 %v363, %v393
  %v466 = vsub.f32 %v364, %v396
  %v467 = vsub.f32 %v365, %v399
  %v468 = vsub.f32 %v366, %v402
  %v469 = vsub.f32 %v367, %v405
  %v470 = vsub.f32 %v368, %v408
  %v471 = vsub.f32 %v369, %v411
  %v472 = vsub.f32 %v370, %v414
  %v473 = vsub.f32 %v371, %v417
  %v474 = vsub.f32 %v372, %v420
  %v475 = vsub.f32 %v373, %v423
  %v476 = vsub.f32 %v374, %v426
  %v477 = vsub.f32 %v375, %v429
  %v478 = vsub.f32 %v376, %v432
  %v479 = vsub.f32 %v377, %v435
  %v480 = vsub.f32 %v378, %v438
  %v481 = vsub.f32 %v379, %v441
  %v482 = vsub.f32 %v380, %v444
  %v483 = vsub.f32 %v381, %v447
  %v484 = vsub.f32 %v382, %v450
  %v485 = vsub.f32 %v383, %v453
  %v486 = vsub.f32 %v384, %v456
  %v487 = vsub.f32 %v385, %v459
  %v488 = vsub.f32 %v386, %v463
  %v489 = vmul.f32 %v464, 1.442695
  %v490 = vpow.pop %v489
  %v491 = vmul.f32 %v465, 1.442695
  %v492 = vpow.pop %v491
  %v493 = vmul.f32 %v466, 1.442695
  %v494 = vpow.pop %v493
  %v495 = vmul.f32 %v467, 1.442695
  %v496 = vpow.pop %v495
  %v497 = vmul.f32 %v468, 1.442695
  %v498 = vpow.pop %v497
  %v499 = vmul.f32 %v469, 1.442695
  %v500 = vpow.pop %v499
  %v501 = vmul.f32 %v470, 1.442695
  %v502 = vpow.pop %v501
  %v503 = vmul.f32 %v471, 1.442695
  %v504 = vpow.pop %v503
  %v505 = vmul.f32 %v472, 1.442695
  %v506 = vpow.pop %v505
  %v507 = vmul.f32 %v473, 1.442695
  %v508 = vpow.pop %v507
  %v509 = vmul.f32 %v474, 1.442695
  %v510 = vpow.pop %v509
  %v511 = vmul.f32 %v475, 1.442695
  %v512 = vpow.pop %v511
  %v513 = vmul.f32 %v476, 1.442695
  %v514 = vpow.pop %v513
  %v515 = vmul.f32 %v477, 1.442695
  %v516 = vpow.pop %v515
  %v517 = vmul.f32 %v478, 1.442695
  %v518 = vpow.pop %v517
  %v519 = vmul.f32 %v479, 1.442695
  %v520 = vpow.pop %v519
  %v521 = vmul.f32 %v480, 1.442695
  %v522 = vpow.pop %v521
  %v523 = vmul.f32 %v481, 1.442695
  %v524 = vpow.pop %v523
  %v525 = vmul.f32 %v482, 1.442695
  %v526 = vpow.pop %v525
  %v527 = vmul.f32 %v483, 1.442695
  %v528 = vpow.pop %v527
  %v529 = vmul.f32 %v484, 1.442695
  %v530 = vpow.pop %v529
  %v531 = vmul.f32 %v485, 1.442695
  %v532 = vpow.pop %v531
  %v533 = vmul.f32 %v486, 1.442695
  %v534 = vpow.pop %v533
  %v535 = vmul.f32 %v487, 1.442695
  %v536 = vpow.pop %v535
  %v537 = vmul.f32 %v488, 1.442695
  %v538 = vpow.pop %v537
  %v539 = vsel %vm387, %v490, 0.0
  %540 = vadd.xlane.f32.xlu0 %v539
  %v541 = vpop.xlane.xlu0 %540
  %v542 = vsel %vm387, %v492, 0.0
  %543 = vadd.xlane.f32.xlu0 %v542
  %v544 = vpop.xlane.xlu0 %543
  %v545 = vsel %vm387, %v494, 0.0
  %546 = vadd.xlane.f32.xlu0 %v545
  %v547 = vpop.xlane.xlu0 %546
  %v548 = vsel %vm387, %v496, 0.0
  %549 = vadd.xlane.f32.xlu0 %v548
  %v550 = vpop.xlane.xlu0 %549
  %v551 = vsel %vm387, %v498, 0.0
  %552 = vadd.xlane.f32.xlu0 %v551
  %v553 = vpop.xlane.xlu0 %552
  %v554 = vsel %vm387, %v500, 0.0
  %555 = vadd.xlane.f32.xlu0 %v554
  %v556 = vpop.xlane.xlu0 %555
  %v557 = vsel %vm387, %v502, 0.0
  %558 = vadd.xlane.f32.xlu0 %v557
  %v559 = vpop.xlane.xlu0 %558
  %v560 = vsel %vm387, %v504, 0.0
  %561 = vadd.xlane.f32.xlu0 %v560
  %v562 = vpop.xlane.xlu0 %561
  %v563 = vsel %vm387, %v506, 0.0
  %564 = vadd.xlane.f32.xlu0 %v563
  %v565 = vpop.xlane.xlu0 %564
  %v566 = vsel %vm387, %v508, 0.0
  %567 = vadd.xlane.f32.xlu0 %v566
  %v568 = vpop.xlane.xlu0 %567
  %v569 = vsel %vm387, %v510, 0.0
  %570 = vadd.xlane.f32.xlu0 %v569
  %v571 = vpop.xlane.xlu0 %570
  %v572 = vsel %vm387, %v512, 0.0
  %573 = vadd.xlane.f32.xlu0 %v572
  %v574 = vpop.xlane.xlu0 %573
  %v575 = vsel %vm387, %v514, 0.0
  %576 = vadd.xlane.f32.xlu0 %v575
  %v577 = vpop.xlane.xlu0 %576
  %v578 = vsel %vm387, %v516, 0.0
  %579 = vadd.xlane.f32.xlu0 %v578
  %v580 = vpop.xlane.xlu0 %579
  %v581 = vsel %vm387, %v518, 0.0
  %582 = vadd.xlane.f32.xlu0 %v581
  %v583 = vpop.xlane.xlu0 %582
  %v584 = vsel %vm387, %v520, 0.0
  %585 = vadd.xlane.f32.xlu0 %v584
  %v586 = vpop.xlane.xlu0 %585
  %v587 = vsel %vm387, %v522, 0.0
  %588 = vadd.xlane.f32.xlu0 %v587
  %v589 = vpop.xlane.xlu0 %588
  %v590 = vsel %vm387, %v524, 0.0
  %591 = vadd.xlane.f32.xlu0 %v590
  %v592 = vpop.xlane.xlu0 %591
  %v593 = vsel %vm387, %v526, 0.0
  %594 = vadd.xlane.f32.xlu0 %v593
  %v595 = vpop.xlane.xlu0 %594
  %v596 = vsel %vm387, %v528, 0.0
  %597 = vadd.xlane.f32.xlu0 %v596
  %v598 = vpop.xlane.xlu0 %597
  %v599 = vsel %vm387, %v530, 0.0
  %600 = vadd.xlane.f32.xlu0 %v599
  %v601 = vpop.xlane.xlu0 %600
  %v602 = vsel %vm387, %v532, 0.0
  %603 = vadd.xlane.f32.xlu0 %v602
  %v604 = vpop.xlane.xlu0 %603
  %v605 = vsel %vm387, %v534, 0.0
  %606 = vadd.xlane.f32.xlu0 %v605
  %v607 = vpop.xlane.xlu0 %606
  %v608 = vsel %vm387, %v536, 0.0
  %609 = vadd.xlane.f32.xlu0 %v608
  %v610 = vpop.xlane.xlu0 %609
  %v611 = vsel %vm460, %v538, 0.0
  %612 = vadd.xlane.f32.xlu0 %v611
  %v613 = vpop.xlane.xlu0 %612
  %v614 = vrcp.pop %v541
  %v615 = vrcp.pop %v544
  %v616 = vrcp.pop %v547
  %v617 = vrcp.pop %v550
  %v618 = vrcp.pop %v553
  %v619 = vrcp.pop %v556
  %v620 = vrcp.pop %v559
  %v621 = vrcp.pop %v562
  %v622 = vrcp.pop %v565
  %v623 = vrcp.pop %v568
  %v624 = vrcp.pop %v571
  %v625 = vrcp.pop %v574
  %v626 = vrcp.pop %v577
  %v627 = vrcp.pop %v580
  %v628 = vrcp.pop %v583
  %v629 = vrcp.pop %v586
  %v630 = vrcp.pop %v589
  %v631 = vrcp.pop %v592
  %v632 = vrcp.pop %v595
  %v633 = vrcp.pop %v598
  %v634 = vrcp.pop %v601
  %v635 = vrcp.pop %v604
  %v636 = vrcp.pop %v607
  %v637 = vrcp.pop %v610
  %v638 = vrcp.pop %v613
  %v639 = vmul.f32 %v490, %v614
  %v640 = vmul.f32 %v492, %v615
  %v641 = vmul.f32 %v494, %v616
  %v642 = vmul.f32 %v496, %v617
  %v643 = vmul.f32 %v498, %v618
  %v644 = vmul.f32 %v500, %v619
  %v645 = vmul.f32 %v502, %v620
  %v646 = vmul.f32 %v504, %v621
  %v647 = vmul.f32 %v506, %v622
  %v648 = vmul.f32 %v508, %v623
  %v649 = vmul.f32 %v510, %v624
  %v650 = vmul.f32 %v512, %v625
  %v651 = vmul.f32 %v514, %v626
  %v652 = vmul.f32 %v516, %v627
  %v653 = vmul.f32 %v518, %v628
  %v654 = vmul.f32 %v520, %v629
  %v655 = vmul.f32 %v522, %v630
  %v656 = vmul.f32 %v524, %v631
  %v657 = vmul.f32 %v526, %v632
  %v658 = vmul.f32 %v528, %v633
  %v659 = vmul.f32 %v530, %v634
  %v660 = vmul.f32 %v532, %v635
  %v661 = vmul.f32 %v534, %v636
  %v662 = vmul.f32 %v536, %v637
  %v663 = vmul.f32 %v538, %v638
  %v664 = vperm.slane %v639, 0
  %v665 = vlaneseq
  %v666 = vshrl.u32 %v665, 7
  %668 = vset.pattern.permute.xlu0 %v666
  %669 = vperm.xlu0 %668, %v664
  %v670 = vpop.permute.xlu0 %669
  %v671 = vperm.slane %v639, 1
  %v672 = vlaneseq
  %v673 = vshrl.u32 %v672, 7
  %675 = vset.pattern.permute.xlu0 %v673
  %676 = vperm.xlu0 %675, %v671
  %v677 = vpop.permute.xlu0 %676
  %v678 = vperm.slane %v639, 2
  %v679 = vlaneseq
  %v680 = vshrl.u32 %v679, 7
  %682 = vset.pattern.permute.xlu0 %v680
  %683 = vperm.xlu0 %682, %v678
  %v684 = vpop.permute.xlu0 %683
  %v685 = vperm.slane %v639, 3
  %v686 = vlaneseq
  %v687 = vshrl.u32 %v686, 7
  %689 = vset.pattern.permute.xlu0 %v687
  %690 = vperm.xlu0 %689, %v685
  %v691 = vpop.permute.xlu0 %690
  %v692 = vperm.slane %v639, 4
  %v693 = vlaneseq
  %v694 = vshrl.u32 %v693, 7
  %696 = vset.pattern.permute.xlu0 %v694
  %697 = vperm.xlu0 %696, %v692
  %v698 = vpop.permute.xlu0 %697
  %v699 = vperm.slane %v639, 5
  %v700 = vlaneseq
  %v701 = vshrl.u32 %v700, 7
  %703 = vset.pattern.permute.xlu0 %v701
  %704 = vperm.xlu0 %703, %v699
  %v705 = vpop.permute.xlu0 %704
  %v706 = vperm.slane %v639, 6
  %v707 = vlaneseq
  %v708 = vshrl.u32 %v707, 7
  %710 = vset.pattern.permute.xlu0 %v708
  %711 = vperm.xlu0 %710, %v706
  %v712 = vpop.permute.xlu0 %711
  %v713 = vperm.slane %v639, 7
  %v714 = vlaneseq
  %v715 = vshrl.u32 %v714, 7
  %717 = vset.pattern.permute.xlu0 %v715
  %718 = vperm.xlu0 %717, %v713
  %v719 = vpop.permute.xlu0 %718
  %v720 = vperm.slane %v640, 0
  %v721 = vlaneseq
  %v722 = vshrl.u32 %v721, 7
  %724 = vset.pattern.permute.xlu0 %v722
  %725 = vperm.xlu0 %724, %v720
  %v726 = vpop.permute.xlu0 %725
  %v727 = vperm.slane %v640, 1
  %v728 = vlaneseq
  %v729 = vshrl.u32 %v728, 7
  %731 = vset.pattern.permute.xlu0 %v729
  %732 = vperm.xlu0 %731, %v727
  %v733 = vpop.permute.xlu0 %732
  %v734 = vperm.slane %v640, 2
  %v735 = vlaneseq
  %v736 = vshrl.u32 %v735, 7
  %738 = vset.pattern.permute.xlu0 %v736
  %739 = vperm.xlu0 %738, %v734
  %v740 = vpop.permute.xlu0 %739
  %v741 = vperm.slane %v640, 3
  %v742 = vlaneseq
  %v743 = vshrl.u32 %v742, 7
  %745 = vset.pattern.permute.xlu0 %v743
  %746 = vperm.xlu0 %745, %v741
  %v747 = vpop.permute.xlu0 %746
  %v748 = vperm.slane %v640, 4
  %v749 = vlaneseq
  %v750 = vshrl.u32 %v749, 7
  %752 = vset.pattern.permute.xlu0 %v750
  %753 = vperm.xlu0 %752, %v748
  %v754 = vpop.permute.xlu0 %753
  %v755 = vperm.slane %v640, 5
  %v756 = vlaneseq
  %v757 = vshrl.u32 %v756, 7
  %759 = vset.pattern.permute.xlu0 %v757
  %760 = vperm.xlu0 %759, %v755
  %v761 = vpop.permute.xlu0 %760
  %v762 = vperm.slane %v640, 6
  %v763 = vlaneseq
  %v764 = vshrl.u32 %v763, 7
  %766 = vset.pattern.permute.xlu0 %v764
  %767 = vperm.xlu0 %766, %v762
  %v768 = vpop.permute.xlu0 %767
  %v769 = vperm.slane %v640, 7
  %v770 = vlaneseq
  %v771 = vshrl.u32 %v770, 7
  %773 = vset.pattern.permute.xlu0 %v771
  %774 = vperm.xlu0 %773, %v769
  %v775 = vpop.permute.xlu0 %774
  %v776 = vperm.slane %v641, 0
  %v777 = vlaneseq
  %v778 = vshrl.u32 %v777, 7
  %780 = vset.pattern.permute.xlu0 %v778
  %781 = vperm.xlu0 %780, %v776
  %v782 = vpop.permute.xlu0 %781
  %v783 = vperm.slane %v641, 1
  %v784 = vlaneseq
  %v785 = vshrl.u32 %v784, 7
  %787 = vset.pattern.permute.xlu0 %v785
  %788 = vperm.xlu0 %787, %v783
  %v789 = vpop.permute.xlu0 %788
  %v790 = vperm.slane %v641, 2
  %v791 = vlaneseq
  %v792 = vshrl.u32 %v791, 7
  %794 = vset.pattern.permute.xlu0 %v792
  %795 = vperm.xlu0 %794, %v790
  %v796 = vpop.permute.xlu0 %795
  %v797 = vperm.slane %v641, 3
  %v798 = vlaneseq
  %v799 = vshrl.u32 %v798, 7
  %801 = vset.pattern.permute.xlu0 %v799
  %802 = vperm.xlu0 %801, %v797
  %v803 = vpop.permute.xlu0 %802
  %v804 = vperm.slane %v641, 4
  %v805 = vlaneseq
  %v806 = vshrl.u32 %v805, 7
  %808 = vset.pattern.permute.xlu0 %v806
  %809 = vperm.xlu0 %808, %v804
  %v810 = vpop.permute.xlu0 %809
  %v811 = vperm.slane %v641, 5
  %v812 = vlaneseq
  %v813 = vshrl.u32 %v812, 7
  %815 = vset.pattern.permute.xlu0 %v813
  %816 = vperm.xlu0 %815, %v811
  %v817 = vpop.permute.xlu0 %816
  %v818 = vperm.slane %v641, 6
  %v819 = vlaneseq
  %v820 = vshrl.u32 %v819, 7
  %822 = vset.pattern.permute.xlu0 %v820
  %823 = vperm.xlu0 %822, %v818
  %v824 = vpop.permute.xlu0 %823
  %v825 = vperm.slane %v641, 7
  %v826 = vlaneseq
  %v827 = vshrl.u32 %v826, 7
  %829 = vset.pattern.permute.xlu0 %v827
  %830 = vperm.xlu0 %829, %v825
  %v831 = vpop.permute.xlu0 %830
  %v832 = vperm.slane %v642, 0
  %v833 = vlaneseq
  %v834 = vshrl.u32 %v833, 7
  %836 = vset.pattern.permute.xlu0 %v834
  %837 = vperm.xlu0 %836, %v832
  %v838 = vpop.permute.xlu0 %837
  %v839 = vperm.slane %v642, 1
  %v840 = vlaneseq
  %v841 = vshrl.u32 %v840, 7
  %843 = vset.pattern.permute.xlu0 %v841
  %844 = vperm.xlu0 %843, %v839
  %v845 = vpop.permute.xlu0 %844
  %v846 = vperm.slane %v642, 2
  %v847 = vlaneseq
  %v848 = vshrl.u32 %v847, 7
  %850 = vset.pattern.permute.xlu0 %v848
  %851 = vperm.xlu0 %850, %v846
  %v852 = vpop.permute.xlu0 %851
  %v853 = vperm.slane %v642, 3
  %v854 = vlaneseq
  %v855 = vshrl.u32 %v854, 7
  %857 = vset.pattern.permute.xlu0 %v855
  %858 = vperm.xlu0 %857, %v853
  %v859 = vpop.permute.xlu0 %858
  %v860 = vperm.slane %v642, 4
  %v861 = vlaneseq
  %v862 = vshrl.u32 %v861, 7
  %864 = vset.pattern.permute.xlu0 %v862
  %865 = vperm.xlu0 %864, %v860
  %v866 = vpop.permute.xlu0 %865
  %v867 = vperm.slane %v642, 5
  %v868 = vlaneseq
  %v869 = vshrl.u32 %v868, 7
  %871 = vset.pattern.permute.xlu0 %v869
  %872 = vperm.xlu0 %871, %v867
  %v873 = vpop.permute.xlu0 %872
  %v874 = vperm.slane %v642, 6
  %v875 = vlaneseq
  %v876 = vshrl.u32 %v875, 7
  %878 = vset.pattern.permute.xlu0 %v876
  %879 = vperm.xlu0 %878, %v874
  %v880 = vpop.permute.xlu0 %879
  %v881 = vperm.slane %v642, 7
  %v882 = vlaneseq
  %v883 = vshrl.u32 %v882, 7
  %885 = vset.pattern.permute.xlu0 %v883
  %886 = vperm.xlu0 %885, %v881
  %v887 = vpop.permute.xlu0 %886
  %v888 = vperm.slane %v643, 0
  %v889 = vlaneseq
  %v890 = vshrl.u32 %v889, 7
  %892 = vset.pattern.permute.xlu0 %v890
  %893 = vperm.xlu0 %892, %v888
  %v894 = vpop.permute.xlu0 %893
  %v895 = vperm.slane %v643, 1
  %v896 = vlaneseq
  %v897 = vshrl.u32 %v896, 7
  %899 = vset.pattern.permute.xlu0 %v897
  %900 = vperm.xlu0 %899, %v895
  %v901 = vpop.permute.xlu0 %900
  %v902 = vperm.slane %v643, 2
  %v903 = vlaneseq
  %v904 = vshrl.u32 %v903, 7
  %906 = vset.pattern.permute.xlu0 %v904
  %907 = vperm.xlu0 %906, %v902
  %v908 = vpop.permute.xlu0 %907
  %v909 = vperm.slane %v643, 3
  %v910 = vlaneseq
  %v911 = vshrl.u32 %v910, 7
  %913 = vset.pattern.permute.xlu0 %v911
  %914 = vperm.xlu0 %913, %v909
  %v915 = vpop.permute.xlu0 %914
  %v916 = vperm.slane %v643, 4
  %v917 = vlaneseq
  %v918 = vshrl.u32 %v917, 7
  %920 = vset.pattern.permute.xlu0 %v918
  %921 = vperm.xlu0 %920, %v916
  %v922 = vpop.permute.xlu0 %921
  %v923 = vperm.slane %v643, 5
  %v924 = vlaneseq
  %v925 = vshrl.u32 %v924, 7
  %927 = vset.pattern.permute.xlu0 %v925
  %928 = vperm.xlu0 %927, %v923
  %v929 = vpop.permute.xlu0 %928
  %v930 = vperm.slane %v643, 6
  %v931 = vlaneseq
  %v932 = vshrl.u32 %v931, 7
  %934 = vset.pattern.permute.xlu0 %v932
  %935 = vperm.xlu0 %934, %v930
  %v936 = vpop.permute.xlu0 %935
  %v937 = vperm.slane %v643, 7
  %v938 = vlaneseq
  %v939 = vshrl.u32 %v938, 7
  %941 = vset.pattern.permute.xlu0 %v939
  %942 = vperm.xlu0 %941, %v937
  %v943 = vpop.permute.xlu0 %942
  %v944 = vperm.slane %v644, 0
  %v945 = vlaneseq
  %v946 = vshrl.u32 %v945, 7
  %948 = vset.pattern.permute.xlu0 %v946
  %949 = vperm.xlu0 %948, %v944
  %v950 = vpop.permute.xlu0 %949
  %v951 = vperm.slane %v644, 1
  %v952 = vlaneseq
  %v953 = vshrl.u32 %v952, 7
  %955 = vset.pattern.permute.xlu0 %v953
  %956 = vperm.xlu0 %955, %v951
  %v957 = vpop.permute.xlu0 %956
  %v958 = vperm.slane %v644, 2
  %v959 = vlaneseq
  %v960 = vshrl.u32 %v959, 7
  %962 = vset.pattern.permute.xlu0 %v960
  %963 = vperm.xlu0 %962, %v958
  %v964 = vpop.permute.xlu0 %963
  %v965 = vperm.slane %v644, 3
  %v966 = vlaneseq
  %v967 = vshrl.u32 %v966, 7
  %969 = vset.pattern.permute.xlu0 %v967
  %970 = vperm.xlu0 %969, %v965
  %v971 = vpop.permute.xlu0 %970
  %v972 = vperm.slane %v644, 4
  %v973 = vlaneseq
  %v974 = vshrl.u32 %v973, 7
  %976 = vset.pattern.permute.xlu0 %v974
  %977 = vperm.xlu0 %976, %v972
  %v978 = vpop.permute.xlu0 %977
  %v979 = vperm.slane %v644, 5
  %v980 = vlaneseq
  %v981 = vshrl.u32 %v980, 7
  %983 = vset.pattern.permute.xlu0 %v981
  %984 = vperm.xlu0 %983, %v979
  %v985 = vpop.permute.xlu0 %984
  %v986 = vperm.slane %v644, 6
  %v987 = vlaneseq
  %v988 = vshrl.u32 %v987, 7
  %990 = vset.pattern.permute.xlu0 %v988
  %991 = vperm.xlu0 %990, %v986
  %v992 = vpop.permute.xlu0 %991
  %v993 = vperm.slane %v644, 7
  %v994 = vlaneseq
  %v995 = vshrl.u32 %v994, 7
  %997 = vset.pattern.permute.xlu0 %v995
  %998 = vperm.xlu0 %997, %v993
  %v999 = vpop.permute.xlu0 %998
  %v1000 = vperm.slane %v645, 0
  %v1001 = vlaneseq
  %v1002 = vshrl.u32 %v1001, 7
  %1004 = vset.pattern.permute.xlu0 %v1002
  %1005 = vperm.xlu0 %1004, %v1000
  %v1006 = vpop.permute.xlu0 %1005
  %v1007 = vperm.slane %v645, 1
  %v1008 = vlaneseq
  %v1009 = vshrl.u32 %v1008, 7
  %1011 = vset.pattern.permute.xlu0 %v1009
  %1012 = vperm.xlu0 %1011, %v1007
  %v1013 = vpop.permute.xlu0 %1012
  %v1014 = vperm.slane %v645, 2
  %v1015 = vlaneseq
  %v1016 = vshrl.u32 %v1015, 7
  %1018 = vset.pattern.permute.xlu0 %v1016
  %1019 = vperm.xlu0 %1018, %v1014
  %v1020 = vpop.permute.xlu0 %1019
  %v1021 = vperm.slane %v645, 3
  %v1022 = vlaneseq
  %v1023 = vshrl.u32 %v1022, 7
  %1025 = vset.pattern.permute.xlu0 %v1023
  %1026 = vperm.xlu0 %1025, %v1021
  %v1027 = vpop.permute.xlu0 %1026
  %v1028 = vperm.slane %v645, 4
  %v1029 = vlaneseq
  %v1030 = vshrl.u32 %v1029, 7
  %1032 = vset.pattern.permute.xlu0 %v1030
  %1033 = vperm.xlu0 %1032, %v1028
  %v1034 = vpop.permute.xlu0 %1033
  %v1035 = vperm.slane %v645, 5
  %v1036 = vlaneseq
  %v1037 = vshrl.u32 %v1036, 7
  %1039 = vset.pattern.permute.xlu0 %v1037
  %1040 = vperm.xlu0 %1039, %v1035
  %v1041 = vpop.permute.xlu0 %1040
  %v1042 = vperm.slane %v645, 6
  %v1043 = vlaneseq
  %v1044 = vshrl.u32 %v1043, 7
  %1046 = vset.pattern.permute.xlu0 %v1044
  %1047 = vperm.xlu0 %1046, %v1042
  %v1048 = vpop.permute.xlu0 %1047
  %v1049 = vperm.slane %v645, 7
  %v1050 = vlaneseq
  %v1051 = vshrl.u32 %v1050, 7
  %1053 = vset.pattern.permute.xlu0 %v1051
  %1054 = vperm.xlu0 %1053, %v1049
  %v1055 = vpop.permute.xlu0 %1054
  %v1056 = vperm.slane %v646, 0
  %v1057 = vlaneseq
  %v1058 = vshrl.u32 %v1057, 7
  %1060 = vset.pattern.permute.xlu0 %v1058
  %1061 = vperm.xlu0 %1060, %v1056
  %v1062 = vpop.permute.xlu0 %1061
  %v1063 = vperm.slane %v646, 1
  %v1064 = vlaneseq
  %v1065 = vshrl.u32 %v1064, 7
  %1067 = vset.pattern.permute.xlu0 %v1065
  %1068 = vperm.xlu0 %1067, %v1063
  %v1069 = vpop.permute.xlu0 %1068
  %v1070 = vperm.slane %v646, 2
  %v1071 = vlaneseq
  %v1072 = vshrl.u32 %v1071, 7
  %1074 = vset.pattern.permute.xlu0 %v1072
  %1075 = vperm.xlu0 %1074, %v1070
  %v1076 = vpop.permute.xlu0 %1075
  %v1077 = vperm.slane %v646, 3
  %v1078 = vlaneseq
  %v1079 = vshrl.u32 %v1078, 7
  %1081 = vset.pattern.permute.xlu0 %v1079
  %1082 = vperm.xlu0 %1081, %v1077
  %v1083 = vpop.permute.xlu0 %1082
  %v1084 = vperm.slane %v646, 4
  %v1085 = vlaneseq
  %v1086 = vshrl.u32 %v1085, 7
  %1088 = vset.pattern.permute.xlu0 %v1086
  %1089 = vperm.xlu0 %1088, %v1084
  %v1090 = vpop.permute.xlu0 %1089
  %v1091 = vperm.slane %v646, 5
  %v1092 = vlaneseq
  %v1093 = vshrl.u32 %v1092, 7
  %1095 = vset.pattern.permute.xlu0 %v1093
  %1096 = vperm.xlu0 %1095, %v1091
  %v1097 = vpop.permute.xlu0 %1096
  %v1098 = vperm.slane %v646, 6
  %v1099 = vlaneseq
  %v1100 = vshrl.u32 %v1099, 7
  %1102 = vset.pattern.permute.xlu0 %v1100
  %1103 = vperm.xlu0 %1102, %v1098
  %v1104 = vpop.permute.xlu0 %1103
  %v1105 = vperm.slane %v646, 7
  %v1106 = vlaneseq
  %v1107 = vshrl.u32 %v1106, 7
  %1109 = vset.pattern.permute.xlu0 %v1107
  %1110 = vperm.xlu0 %1109, %v1105
  %v1111 = vpop.permute.xlu0 %1110
  %v1112 = vperm.slane %v647, 0
  %v1113 = vlaneseq
  %v1114 = vshrl.u32 %v1113, 7
  %1116 = vset.pattern.permute.xlu0 %v1114
  %1117 = vperm.xlu0 %1116, %v1112
  %v1118 = vpop.permute.xlu0 %1117
  %v1119 = vperm.slane %v647, 1
  %v1120 = vlaneseq
  %v1121 = vshrl.u32 %v1120, 7
  %1123 = vset.pattern.permute.xlu0 %v1121
  %1124 = vperm.xlu0 %1123, %v1119
  %v1125 = vpop.permute.xlu0 %1124
  %v1126 = vperm.slane %v647, 2
  %v1127 = vlaneseq
  %v1128 = vshrl.u32 %v1127, 7
  %1130 = vset.pattern.permute.xlu0 %v1128
  %1131 = vperm.xlu0 %1130, %v1126
  %v1132 = vpop.permute.xlu0 %1131
  %v1133 = vperm.slane %v647, 3
  %v1134 = vlaneseq
  %v1135 = vshrl.u32 %v1134, 7
  %1137 = vset.pattern.permute.xlu0 %v1135
  %1138 = vperm.xlu0 %1137, %v1133
  %v1139 = vpop.permute.xlu0 %1138
  %v1140 = vperm.slane %v647, 4
  %v1141 = vlaneseq
  %v1142 = vshrl.u32 %v1141, 7
  %1144 = vset.pattern.permute.xlu0 %v1142
  %1145 = vperm.xlu0 %1144, %v1140
  %v1146 = vpop.permute.xlu0 %1145
  %v1147 = vperm.slane %v647, 5
  %v1148 = vlaneseq
  %v1149 = vshrl.u32 %v1148, 7
  %1151 = vset.pattern.permute.xlu0 %v1149
  %1152 = vperm.xlu0 %1151, %v1147
  %v1153 = vpop.permute.xlu0 %1152
  %v1154 = vperm.slane %v647, 6
  %v1155 = vlaneseq
  %v1156 = vshrl.u32 %v1155, 7
  %1158 = vset.pattern.permute.xlu0 %v1156
  %1159 = vperm.xlu0 %1158, %v1154
  %v1160 = vpop.permute.xlu0 %1159
  %v1161 = vperm.slane %v647, 7
  %v1162 = vlaneseq
  %v1163 = vshrl.u32 %v1162, 7
  %1165 = vset.pattern.permute.xlu0 %v1163
  %1166 = vperm.xlu0 %1165, %v1161
  %v1167 = vpop.permute.xlu0 %1166
  %v1168 = vperm.slane %v648, 0
  %v1169 = vlaneseq
  %v1170 = vshrl.u32 %v1169, 7
  %1172 = vset.pattern.permute.xlu0 %v1170
  %1173 = vperm.xlu0 %1172, %v1168
  %v1174 = vpop.permute.xlu0 %1173
  %v1175 = vperm.slane %v648, 1
  %v1176 = vlaneseq
  %v1177 = vshrl.u32 %v1176, 7
  %1179 = vset.pattern.permute.xlu0 %v1177
  %1180 = vperm.xlu0 %1179, %v1175
  %v1181 = vpop.permute.xlu0 %1180
  %v1182 = vperm.slane %v648, 2
  %v1183 = vlaneseq
  %v1184 = vshrl.u32 %v1183, 7
  %1186 = vset.pattern.permute.xlu0 %v1184
  %1187 = vperm.xlu0 %1186, %v1182
  %v1188 = vpop.permute.xlu0 %1187
  %v1189 = vperm.slane %v648, 3
  %v1190 = vlaneseq
  %v1191 = vshrl.u32 %v1190, 7
  %1193 = vset.pattern.permute.xlu0 %v1191
  %1194 = vperm.xlu0 %1193, %v1189
  %v1195 = vpop.permute.xlu0 %1194
  %v1196 = vperm.slane %v648, 4
  %v1197 = vlaneseq
  %v1198 = vshrl.u32 %v1197, 7
  %1200 = vset.pattern.permute.xlu0 %v1198
  %1201 = vperm.xlu0 %1200, %v1196
  %v1202 = vpop.permute.xlu0 %1201
  %v1203 = vperm.slane %v648, 5
  %v1204 = vlaneseq
  %v1205 = vshrl.u32 %v1204, 7
  %1207 = vset.pattern.permute.xlu0 %v1205
  %1208 = vperm.xlu0 %1207, %v1203
  %v1209 = vpop.permute.xlu0 %1208
  %v1210 = vperm.slane %v648, 6
  %v1211 = vlaneseq
  %v1212 = vshrl.u32 %v1211, 7
  %1214 = vset.pattern.permute.xlu0 %v1212
  %1215 = vperm.xlu0 %1214, %v1210
  %v1216 = vpop.permute.xlu0 %1215
  %v1217 = vperm.slane %v648, 7
  %v1218 = vlaneseq
  %v1219 = vshrl.u32 %v1218, 7
  %1221 = vset.pattern.permute.xlu0 %v1219
  %1222 = vperm.xlu0 %1221, %v1217
  %v1223 = vpop.permute.xlu0 %1222
  %v1224 = vperm.slane %v649, 0
  %v1225 = vlaneseq
  %v1226 = vshrl.u32 %v1225, 7
  %1228 = vset.pattern.permute.xlu0 %v1226
  %1229 = vperm.xlu0 %1228, %v1224
  %v1230 = vpop.permute.xlu0 %1229
  %v1231 = vperm.slane %v649, 1
  %v1232 = vlaneseq
  %v1233 = vshrl.u32 %v1232, 7
  %1235 = vset.pattern.permute.xlu0 %v1233
  %1236 = vperm.xlu0 %1235, %v1231
  %v1237 = vpop.permute.xlu0 %1236
  %v1238 = vperm.slane %v649, 2
  %v1239 = vlaneseq
  %v1240 = vshrl.u32 %v1239, 7
  %1242 = vset.pattern.permute.xlu0 %v1240
  %1243 = vperm.xlu0 %1242, %v1238
  %v1244 = vpop.permute.xlu0 %1243
  %v1245 = vperm.slane %v649, 3
  %v1246 = vlaneseq
  %v1247 = vshrl.u32 %v1246, 7
  %1249 = vset.pattern.permute.xlu0 %v1247
  %1250 = vperm.xlu0 %1249, %v1245
  %v1251 = vpop.permute.xlu0 %1250
  %v1252 = vperm.slane %v649, 4
  %v1253 = vlaneseq
  %v1254 = vshrl.u32 %v1253, 7
  %1256 = vset.pattern.permute.xlu0 %v1254
  %1257 = vperm.xlu0 %1256, %v1252
  %v1258 = vpop.permute.xlu0 %1257
  %v1259 = vperm.slane %v649, 5
  %v1260 = vlaneseq
  %v1261 = vshrl.u32 %v1260, 7
  %1263 = vset.pattern.permute.xlu0 %v1261
  %1264 = vperm.xlu0 %1263, %v1259
  %v1265 = vpop.permute.xlu0 %1264
  %v1266 = vperm.slane %v649, 6
  %v1267 = vlaneseq
  %v1268 = vshrl.u32 %v1267, 7
  %1270 = vset.pattern.permute.xlu0 %v1268
  %1271 = vperm.xlu0 %1270, %v1266
  %v1272 = vpop.permute.xlu0 %1271
  %v1273 = vperm.slane %v649, 7
  %v1274 = vlaneseq
  %v1275 = vshrl.u32 %v1274, 7
  %1277 = vset.pattern.permute.xlu0 %v1275
  %1278 = vperm.xlu0 %1277, %v1273
  %v1279 = vpop.permute.xlu0 %1278
  %v1280 = vperm.slane %v650, 0
  %v1281 = vlaneseq
  %v1282 = vshrl.u32 %v1281, 7
  %1284 = vset.pattern.permute.xlu0 %v1282
  %1285 = vperm.xlu0 %1284, %v1280
  %v1286 = vpop.permute.xlu0 %1285
  %v1287 = vperm.slane %v650, 1
  %v1288 = vlaneseq
  %v1289 = vshrl.u32 %v1288, 7
  %1291 = vset.pattern.permute.xlu0 %v1289
  %1292 = vperm.xlu0 %1291, %v1287
  %v1293 = vpop.permute.xlu0 %1292
  %v1294 = vperm.slane %v650, 2
  %v1295 = vlaneseq
  %v1296 = vshrl.u32 %v1295, 7
  %1298 = vset.pattern.permute.xlu0 %v1296
  %1299 = vperm.xlu0 %1298, %v1294
  %v1300 = vpop.permute.xlu0 %1299
  %v1301 = vperm.slane %v650, 3
  %v1302 = vlaneseq
  %v1303 = vshrl.u32 %v1302, 7
  %1305 = vset.pattern.permute.xlu0 %v1303
  %1306 = vperm.xlu0 %1305, %v1301
  %v1307 = vpop.permute.xlu0 %1306
  %v1308 = vperm.slane %v650, 4
  %v1309 = vlaneseq
  %v1310 = vshrl.u32 %v1309, 7
  %1312 = vset.pattern.permute.xlu0 %v1310
  %1313 = vperm.xlu0 %1312, %v1308
  %v1314 = vpop.permute.xlu0 %1313
  %v1315 = vperm.slane %v650, 5
  %v1316 = vlaneseq
  %v1317 = vshrl.u32 %v1316, 7
  %1319 = vset.pattern.permute.xlu0 %v1317
  %1320 = vperm.xlu0 %1319, %v1315
  %v1321 = vpop.permute.xlu0 %1320
  %v1322 = vperm.slane %v650, 6
  %v1323 = vlaneseq
  %v1324 = vshrl.u32 %v1323, 7
  %1326 = vset.pattern.permute.xlu0 %v1324
  %1327 = vperm.xlu0 %1326, %v1322
  %v1328 = vpop.permute.xlu0 %1327
  %v1329 = vperm.slane %v650, 7
  %v1330 = vlaneseq
  %v1331 = vshrl.u32 %v1330, 7
  %1333 = vset.pattern.permute.xlu0 %v1331
  %1334 = vperm.xlu0 %1333, %v1329
  %v1335 = vpop.permute.xlu0 %1334
  %v1336 = vperm.slane %v651, 0
  %v1337 = vlaneseq
  %v1338 = vshrl.u32 %v1337, 7
  %1340 = vset.pattern.permute.xlu0 %v1338
  %1341 = vperm.xlu0 %1340, %v1336
  %v1342 = vpop.permute.xlu0 %1341
  %v1343 = vperm.slane %v651, 1
  %v1344 = vlaneseq
  %v1345 = vshrl.u32 %v1344, 7
  %1347 = vset.pattern.permute.xlu0 %v1345
  %1348 = vperm.xlu0 %1347, %v1343
  %v1349 = vpop.permute.xlu0 %1348
  %v1350 = vperm.slane %v651, 2
  %v1351 = vlaneseq
  %v1352 = vshrl.u32 %v1351, 7
  %1354 = vset.pattern.permute.xlu0 %v1352
  %1355 = vperm.xlu0 %1354, %v1350
  %v1356 = vpop.permute.xlu0 %1355
  %v1357 = vperm.slane %v651, 3
  %v1358 = vlaneseq
  %v1359 = vshrl.u32 %v1358, 7
  %1361 = vset.pattern.permute.xlu0 %v1359
  %1362 = vperm.xlu0 %1361, %v1357
  %v1363 = vpop.permute.xlu0 %1362
  %v1364 = vperm.slane %v651, 4
  %v1365 = vlaneseq
  %v1366 = vshrl.u32 %v1365, 7
  %1368 = vset.pattern.permute.xlu0 %v1366
  %1369 = vperm.xlu0 %1368, %v1364
  %v1370 = vpop.permute.xlu0 %1369
  %v1371 = vperm.slane %v651, 5
  %v1372 = vlaneseq
  %v1373 = vshrl.u32 %v1372, 7
  %1375 = vset.pattern.permute.xlu0 %v1373
  %1376 = vperm.xlu0 %1375, %v1371
  %v1377 = vpop.permute.xlu0 %1376
  %v1378 = vperm.slane %v651, 6
  %v1379 = vlaneseq
  %v1380 = vshrl.u32 %v1379, 7
  %1382 = vset.pattern.permute.xlu0 %v1380
  %1383 = vperm.xlu0 %1382, %v1378
  %v1384 = vpop.permute.xlu0 %1383
  %v1385 = vperm.slane %v651, 7
  %v1386 = vlaneseq
  %v1387 = vshrl.u32 %v1386, 7
  %1389 = vset.pattern.permute.xlu0 %v1387
  %1390 = vperm.xlu0 %1389, %v1385
  %v1391 = vpop.permute.xlu0 %1390
  %v1392 = vperm.slane %v652, 0
  %v1393 = vlaneseq
  %v1394 = vshrl.u32 %v1393, 7
  %1396 = vset.pattern.permute.xlu0 %v1394
  %1397 = vperm.xlu0 %1396, %v1392
  %v1398 = vpop.permute.xlu0 %1397
  %v1399 = vperm.slane %v652, 1
  %v1400 = vlaneseq
  %v1401 = vshrl.u32 %v1400, 7
  %1403 = vset.pattern.permute.xlu0 %v1401
  %1404 = vperm.xlu0 %1403, %v1399
  %v1405 = vpop.permute.xlu0 %1404
  %v1406 = vperm.slane %v652, 2
  %v1407 = vlaneseq
  %v1408 = vshrl.u32 %v1407, 7
  %1410 = vset.pattern.permute.xlu0 %v1408
  %1411 = vperm.xlu0 %1410, %v1406
  %v1412 = vpop.permute.xlu0 %1411
  %v1413 = vperm.slane %v652, 3
  %v1414 = vlaneseq
  %v1415 = vshrl.u32 %v1414, 7
  %1417 = vset.pattern.permute.xlu0 %v1415
  %1418 = vperm.xlu0 %1417, %v1413
  %v1419 = vpop.permute.xlu0 %1418
  %v1420 = vperm.slane %v652, 4
  %v1421 = vlaneseq
  %v1422 = vshrl.u32 %v1421, 7
  %1424 = vset.pattern.permute.xlu0 %v1422
  %1425 = vperm.xlu0 %1424, %v1420
  %v1426 = vpop.permute.xlu0 %1425
  %v1427 = vperm.slane %v652, 5
  %v1428 = vlaneseq
  %v1429 = vshrl.u32 %v1428, 7
  %1431 = vset.pattern.permute.xlu0 %v1429
  %1432 = vperm.xlu0 %1431, %v1427
  %v1433 = vpop.permute.xlu0 %1432
  %v1434 = vperm.slane %v652, 6
  %v1435 = vlaneseq
  %v1436 = vshrl.u32 %v1435, 7
  %1438 = vset.pattern.permute.xlu0 %v1436
  %1439 = vperm.xlu0 %1438, %v1434
  %v1440 = vpop.permute.xlu0 %1439
  %v1441 = vperm.slane %v652, 7
  %v1442 = vlaneseq
  %v1443 = vshrl.u32 %v1442, 7
  %1445 = vset.pattern.permute.xlu0 %v1443
  %1446 = vperm.xlu0 %1445, %v1441
  %v1447 = vpop.permute.xlu0 %1446
  %v1448 = vperm.slane %v653, 0
  %v1449 = vlaneseq
  %v1450 = vshrl.u32 %v1449, 7
  %1452 = vset.pattern.permute.xlu0 %v1450
  %1453 = vperm.xlu0 %1452, %v1448
  %v1454 = vpop.permute.xlu0 %1453
  %v1455 = vperm.slane %v653, 1
  %v1456 = vlaneseq
  %v1457 = vshrl.u32 %v1456, 7
  %1459 = vset.pattern.permute.xlu0 %v1457
  %1460 = vperm.xlu0 %1459, %v1455
  %v1461 = vpop.permute.xlu0 %1460
  %v1462 = vperm.slane %v653, 2
  %v1463 = vlaneseq
  %v1464 = vshrl.u32 %v1463, 7
  %1466 = vset.pattern.permute.xlu0 %v1464
  %1467 = vperm.xlu0 %1466, %v1462
  %v1468 = vpop.permute.xlu0 %1467
  %v1469 = vperm.slane %v653, 3
  %v1470 = vlaneseq
  %v1471 = vshrl.u32 %v1470, 7
  %1473 = vset.pattern.permute.xlu0 %v1471
  %1474 = vperm.xlu0 %1473, %v1469
  %v1475 = vpop.permute.xlu0 %1474
  %v1476 = vperm.slane %v653, 4
  %v1477 = vlaneseq
  %v1478 = vshrl.u32 %v1477, 7
  %1480 = vset.pattern.permute.xlu0 %v1478
  %1481 = vperm.xlu0 %1480, %v1476
  %v1482 = vpop.permute.xlu0 %1481
  %v1483 = vperm.slane %v653, 5
  %v1484 = vlaneseq
  %v1485 = vshrl.u32 %v1484, 7
  %1487 = vset.pattern.permute.xlu0 %v1485
  %1488 = vperm.xlu0 %1487, %v1483
  %v1489 = vpop.permute.xlu0 %1488
  %v1490 = vperm.slane %v653, 6
  %v1491 = vlaneseq
  %v1492 = vshrl.u32 %v1491, 7
  %1494 = vset.pattern.permute.xlu0 %v1492
  %1495 = vperm.xlu0 %1494, %v1490
  %v1496 = vpop.permute.xlu0 %1495
  %v1497 = vperm.slane %v653, 7
  %v1498 = vlaneseq
  %v1499 = vshrl.u32 %v1498, 7
  %1501 = vset.pattern.permute.xlu0 %v1499
  %1502 = vperm.xlu0 %1501, %v1497
  %v1503 = vpop.permute.xlu0 %1502
  %v1504 = vperm.slane %v654, 0
  %v1505 = vlaneseq
  %v1506 = vshrl.u32 %v1505, 7
  %1508 = vset.pattern.permute.xlu0 %v1506
  %1509 = vperm.xlu0 %1508, %v1504
  %v1510 = vpop.permute.xlu0 %1509
  %v1511 = vperm.slane %v654, 1
  %v1512 = vlaneseq
  %v1513 = vshrl.u32 %v1512, 7
  %1515 = vset.pattern.permute.xlu0 %v1513
  %1516 = vperm.xlu0 %1515, %v1511
  %v1517 = vpop.permute.xlu0 %1516
  %v1518 = vperm.slane %v654, 2
  %v1519 = vlaneseq
  %v1520 = vshrl.u32 %v1519, 7
  %1522 = vset.pattern.permute.xlu0 %v1520
  %1523 = vperm.xlu0 %1522, %v1518
  %v1524 = vpop.permute.xlu0 %1523
  %v1525 = vperm.slane %v654, 3
  %v1526 = vlaneseq
  %v1527 = vshrl.u32 %v1526, 7
  %1529 = vset.pattern.permute.xlu0 %v1527
  %1530 = vperm.xlu0 %1529, %v1525
  %v1531 = vpop.permute.xlu0 %1530
  %v1532 = vperm.slane %v654, 4
  %v1533 = vlaneseq
  %v1534 = vshrl.u32 %v1533, 7
  %1536 = vset.pattern.permute.xlu0 %v1534
  %1537 = vperm.xlu0 %1536, %v1532
  %v1538 = vpop.permute.xlu0 %1537
  %v1539 = vperm.slane %v654, 5
  %v1540 = vlaneseq
  %v1541 = vshrl.u32 %v1540, 7
  %1543 = vset.pattern.permute.xlu0 %v1541
  %1544 = vperm.xlu0 %1543, %v1539
  %v1545 = vpop.permute.xlu0 %1544
  %v1546 = vperm.slane %v654, 6
  %v1547 = vlaneseq
  %v1548 = vshrl.u32 %v1547, 7
  %1550 = vset.pattern.permute.xlu0 %v1548
  %1551 = vperm.xlu0 %1550, %v1546
  %v1552 = vpop.permute.xlu0 %1551
  %v1553 = vperm.slane %v654, 7
  %v1554 = vlaneseq
  %v1555 = vshrl.u32 %v1554, 7
  %1557 = vset.pattern.permute.xlu0 %v1555
  %1558 = vperm.xlu0 %1557, %v1553
  %v1559 = vpop.permute.xlu0 %1558
  %v1560 = vperm.slane %v655, 0
  %v1561 = vlaneseq
  %v1562 = vshrl.u32 %v1561, 7
  %1564 = vset.pattern.permute.xlu0 %v1562
  %1565 = vperm.xlu0 %1564, %v1560
  %v1566 = vpop.permute.xlu0 %1565
  %v1567 = vperm.slane %v655, 1
  %v1568 = vlaneseq
  %v1569 = vshrl.u32 %v1568, 7
  %1571 = vset.pattern.permute.xlu0 %v1569
  %1572 = vperm.xlu0 %1571, %v1567
  %v1573 = vpop.permute.xlu0 %1572
  %v1574 = vperm.slane %v655, 2
  %v1575 = vlaneseq
  %v1576 = vshrl.u32 %v1575, 7
  %1578 = vset.pattern.permute.xlu0 %v1576
  %1579 = vperm.xlu0 %1578, %v1574
  %v1580 = vpop.permute.xlu0 %1579
  %v1581 = vperm.slane %v655, 3
  %v1582 = vlaneseq
  %v1583 = vshrl.u32 %v1582, 7
  %1585 = vset.pattern.permute.xlu0 %v1583
  %1586 = vperm.xlu0 %1585, %v1581
  %v1587 = vpop.permute.xlu0 %1586
  %v1588 = vperm.slane %v655, 4
  %v1589 = vlaneseq
  %v1590 = vshrl.u32 %v1589, 7
  %1592 = vset.pattern.permute.xlu0 %v1590
  %1593 = vperm.xlu0 %1592, %v1588
  %v1594 = vpop.permute.xlu0 %1593
  %v1595 = vperm.slane %v655, 5
  %v1596 = vlaneseq
  %v1597 = vshrl.u32 %v1596, 7
  %1599 = vset.pattern.permute.xlu0 %v1597
  %1600 = vperm.xlu0 %1599, %v1595
  %v1601 = vpop.permute.xlu0 %1600
  %v1602 = vperm.slane %v655, 6
  %v1603 = vlaneseq
  %v1604 = vshrl.u32 %v1603, 7
  %1606 = vset.pattern.permute.xlu0 %v1604
  %1607 = vperm.xlu0 %1606, %v1602
  %v1608 = vpop.permute.xlu0 %1607
  %v1609 = vperm.slane %v655, 7
  %v1610 = vlaneseq
  %v1611 = vshrl.u32 %v1610, 7
  %1613 = vset.pattern.permute.xlu0 %v1611
  %1614 = vperm.xlu0 %1613, %v1609
  %v1615 = vpop.permute.xlu0 %1614
  %v1616 = vperm.slane %v656, 0
  %v1617 = vlaneseq
  %v1618 = vshrl.u32 %v1617, 7
  %1620 = vset.pattern.permute.xlu0 %v1618
  %1621 = vperm.xlu0 %1620, %v1616
  %v1622 = vpop.permute.xlu0 %1621
  %v1623 = vperm.slane %v656, 1
  %v1624 = vlaneseq
  %v1625 = vshrl.u32 %v1624, 7
  %1627 = vset.pattern.permute.xlu0 %v1625
  %1628 = vperm.xlu0 %1627, %v1623
  %v1629 = vpop.permute.xlu0 %1628
  %v1630 = vperm.slane %v656, 2
  %v1631 = vlaneseq
  %v1632 = vshrl.u32 %v1631, 7
  %1634 = vset.pattern.permute.xlu0 %v1632
  %1635 = vperm.xlu0 %1634, %v1630
  %v1636 = vpop.permute.xlu0 %1635
  %v1637 = vperm.slane %v656, 3
  %v1638 = vlaneseq
  %v1639 = vshrl.u32 %v1638, 7
  %1641 = vset.pattern.permute.xlu0 %v1639
  %1642 = vperm.xlu0 %1641, %v1637
  %v1643 = vpop.permute.xlu0 %1642
  %v1644 = vperm.slane %v656, 4
  %v1645 = vlaneseq
  %v1646 = vshrl.u32 %v1645, 7
  %1648 = vset.pattern.permute.xlu0 %v1646
  %1649 = vperm.xlu0 %1648, %v1644
  %v1650 = vpop.permute.xlu0 %1649
  %v1651 = vperm.slane %v656, 5
  %v1652 = vlaneseq
  %v1653 = vshrl.u32 %v1652, 7
  %1655 = vset.pattern.permute.xlu0 %v1653
  %1656 = vperm.xlu0 %1655, %v1651
  %v1657 = vpop.permute.xlu0 %1656
  %v1658 = vperm.slane %v656, 6
  %v1659 = vlaneseq
  %v1660 = vshrl.u32 %v1659, 7
  %1662 = vset.pattern.permute.xlu0 %v1660
  %1663 = vperm.xlu0 %1662, %v1658
  %v1664 = vpop.permute.xlu0 %1663
  %v1665 = vperm.slane %v656, 7
  %v1666 = vlaneseq
  %v1667 = vshrl.u32 %v1666, 7
  %1669 = vset.pattern.permute.xlu0 %v1667
  %1670 = vperm.xlu0 %1669, %v1665
  %v1671 = vpop.permute.xlu0 %1670
  %v1672 = vperm.slane %v657, 0
  %v1673 = vlaneseq
  %v1674 = vshrl.u32 %v1673, 7
  %1676 = vset.pattern.permute.xlu0 %v1674
  %1677 = vperm.xlu0 %1676, %v1672
  %v1678 = vpop.permute.xlu0 %1677
  %v1679 = vperm.slane %v657, 1
  %v1680 = vlaneseq
  %v1681 = vshrl.u32 %v1680, 7
  %1683 = vset.pattern.permute.xlu0 %v1681
  %1684 = vperm.xlu0 %1683, %v1679
  %v1685 = vpop.permute.xlu0 %1684
  %v1686 = vperm.slane %v657, 2
  %v1687 = vlaneseq
  %v1688 = vshrl.u32 %v1687, 7
  %1690 = vset.pattern.permute.xlu0 %v1688
  %1691 = vperm.xlu0 %1690, %v1686
  %v1692 = vpop.permute.xlu0 %1691
  %v1693 = vperm.slane %v657, 3
  %v1694 = vlaneseq
  %v1695 = vshrl.u32 %v1694, 7
  %1697 = vset.pattern.permute.xlu0 %v1695
  %1698 = vperm.xlu0 %1697, %v1693
  %v1699 = vpop.permute.xlu0 %1698
  %v1700 = vperm.slane %v657, 4
  %v1701 = vlaneseq
  %v1702 = vshrl.u32 %v1701, 7
  %1704 = vset.pattern.permute.xlu0 %v1702
  %1705 = vperm.xlu0 %1704, %v1700
  %v1706 = vpop.permute.xlu0 %1705
  %v1707 = vperm.slane %v657, 5
  %v1708 = vlaneseq
  %v1709 = vshrl.u32 %v1708, 7
  %1711 = vset.pattern.permute.xlu0 %v1709
  %1712 = vperm.xlu0 %1711, %v1707
  %v1713 = vpop.permute.xlu0 %1712
  %v1714 = vperm.slane %v657, 6
  %v1715 = vlaneseq
  %v1716 = vshrl.u32 %v1715, 7
  %1718 = vset.pattern.permute.xlu0 %v1716
  %1719 = vperm.xlu0 %1718, %v1714
  %v1720 = vpop.permute.xlu0 %1719
  %v1721 = vperm.slane %v657, 7
  %v1722 = vlaneseq
  %v1723 = vshrl.u32 %v1722, 7
  %1725 = vset.pattern.permute.xlu0 %v1723
  %1726 = vperm.xlu0 %1725, %v1721
  %v1727 = vpop.permute.xlu0 %1726
  %v1728 = vperm.slane %v658, 0
  %v1729 = vlaneseq
  %v1730 = vshrl.u32 %v1729, 7
  %1732 = vset.pattern.permute.xlu0 %v1730
  %1733 = vperm.xlu0 %1732, %v1728
  %v1734 = vpop.permute.xlu0 %1733
  %v1735 = vperm.slane %v658, 1
  %v1736 = vlaneseq
  %v1737 = vshrl.u32 %v1736, 7
  %1739 = vset.pattern.permute.xlu0 %v1737
  %1740 = vperm.xlu0 %1739, %v1735
  %v1741 = vpop.permute.xlu0 %1740
  %v1742 = vperm.slane %v658, 2
  %v1743 = vlaneseq
  %v1744 = vshrl.u32 %v1743, 7
  %1746 = vset.pattern.permute.xlu0 %v1744
  %1747 = vperm.xlu0 %1746, %v1742
  %v1748 = vpop.permute.xlu0 %1747
  %v1749 = vperm.slane %v658, 3
  %v1750 = vlaneseq
  %v1751 = vshrl.u32 %v1750, 7
  %1753 = vset.pattern.permute.xlu0 %v1751
  %1754 = vperm.xlu0 %1753, %v1749
  %v1755 = vpop.permute.xlu0 %1754
  %v1756 = vperm.slane %v658, 4
  %v1757 = vlaneseq
  %v1758 = vshrl.u32 %v1757, 7
  %1760 = vset.pattern.permute.xlu0 %v1758
  %1761 = vperm.xlu0 %1760, %v1756
  %v1762 = vpop.permute.xlu0 %1761
  %v1763 = vperm.slane %v658, 5
  %v1764 = vlaneseq
  %v1765 = vshrl.u32 %v1764, 7
  %1767 = vset.pattern.permute.xlu0 %v1765
  %1768 = vperm.xlu0 %1767, %v1763
  %v1769 = vpop.permute.xlu0 %1768
  %v1770 = vperm.slane %v658, 6
  %v1771 = vlaneseq
  %v1772 = vshrl.u32 %v1771, 7
  %1774 = vset.pattern.permute.xlu0 %v1772
  %1775 = vperm.xlu0 %1774, %v1770
  %v1776 = vpop.permute.xlu0 %1775
  %v1777 = vperm.slane %v658, 7
  %v1778 = vlaneseq
  %v1779 = vshrl.u32 %v1778, 7
  %1781 = vset.pattern.permute.xlu0 %v1779
  %1782 = vperm.xlu0 %1781, %v1777
  %v1783 = vpop.permute.xlu0 %1782
  %v1784 = vperm.slane %v659, 0
  %v1785 = vlaneseq
  %v1786 = vshrl.u32 %v1785, 7
  %1788 = vset.pattern.permute.xlu0 %v1786
  %1789 = vperm.xlu0 %1788, %v1784
  %v1790 = vpop.permute.xlu0 %1789
  %v1791 = vperm.slane %v659, 1
  %v1792 = vlaneseq
  %v1793 = vshrl.u32 %v1792, 7
  %1795 = vset.pattern.permute.xlu0 %v1793
  %1796 = vperm.xlu0 %1795, %v1791
  %v1797 = vpop.permute.xlu0 %1796
  %v1798 = vperm.slane %v659, 2
  %v1799 = vlaneseq
  %v1800 = vshrl.u32 %v1799, 7
  %1802 = vset.pattern.permute.xlu0 %v1800
  %1803 = vperm.xlu0 %1802, %v1798
  %v1804 = vpop.permute.xlu0 %1803
  %v1805 = vperm.slane %v659, 3
  %v1806 = vlaneseq
  %v1807 = vshrl.u32 %v1806, 7
  %1809 = vset.pattern.permute.xlu0 %v1807
  %1810 = vperm.xlu0 %1809, %v1805
  %v1811 = vpop.permute.xlu0 %1810
  %v1812 = vperm.slane %v659, 4
  %v1813 = vlaneseq
  %v1814 = vshrl.u32 %v1813, 7
  %1816 = vset.pattern.permute.xlu0 %v1814
  %1817 = vperm.xlu0 %1816, %v1812
  %v1818 = vpop.permute.xlu0 %1817
  %v1819 = vperm.slane %v659, 5
  %v1820 = vlaneseq
  %v1821 = vshrl.u32 %v1820, 7
  %1823 = vset.pattern.permute.xlu0 %v1821
  %1824 = vperm.xlu0 %1823, %v1819
  %v1825 = vpop.permute.xlu0 %1824
  %v1826 = vperm.slane %v659, 6
  %v1827 = vlaneseq
  %v1828 = vshrl.u32 %v1827, 7
  %1830 = vset.pattern.permute.xlu0 %v1828
  %1831 = vperm.xlu0 %1830, %v1826
  %v1832 = vpop.permute.xlu0 %1831
  %v1833 = vperm.slane %v659, 7
  %v1834 = vlaneseq
  %v1835 = vshrl.u32 %v1834, 7
  %1837 = vset.pattern.permute.xlu0 %v1835
  %1838 = vperm.xlu0 %1837, %v1833
  %v1839 = vpop.permute.xlu0 %1838
  %v1840 = vperm.slane %v660, 0
  %v1841 = vlaneseq
  %v1842 = vshrl.u32 %v1841, 7
  %1844 = vset.pattern.permute.xlu0 %v1842
  %1845 = vperm.xlu0 %1844, %v1840
  %v1846 = vpop.permute.xlu0 %1845
  %v1847 = vperm.slane %v660, 1
  %v1848 = vlaneseq
  %v1849 = vshrl.u32 %v1848, 7
  %1851 = vset.pattern.permute.xlu0 %v1849
  %1852 = vperm.xlu0 %1851, %v1847
  %v1853 = vpop.permute.xlu0 %1852
  %v1854 = vperm.slane %v660, 2
  %v1855 = vlaneseq
  %v1856 = vshrl.u32 %v1855, 7
  %1858 = vset.pattern.permute.xlu0 %v1856
  %1859 = vperm.xlu0 %1858, %v1854
  %v1860 = vpop.permute.xlu0 %1859
  %v1861 = vperm.slane %v660, 3
  %v1862 = vlaneseq
  %v1863 = vshrl.u32 %v1862, 7
  %1865 = vset.pattern.permute.xlu0 %v1863
  %1866 = vperm.xlu0 %1865, %v1861
  %v1867 = vpop.permute.xlu0 %1866
  %v1868 = vperm.slane %v660, 4
  %v1869 = vlaneseq
  %v1870 = vshrl.u32 %v1869, 7
  %1872 = vset.pattern.permute.xlu0 %v1870
  %1873 = vperm.xlu0 %1872, %v1868
  %v1874 = vpop.permute.xlu0 %1873
  %v1875 = vperm.slane %v660, 5
  %v1876 = vlaneseq
  %v1877 = vshrl.u32 %v1876, 7
  %1879 = vset.pattern.permute.xlu0 %v1877
  %1880 = vperm.xlu0 %1879, %v1875
  %v1881 = vpop.permute.xlu0 %1880
  %v1882 = vperm.slane %v660, 6
  %v1883 = vlaneseq
  %v1884 = vshrl.u32 %v1883, 7
  %1886 = vset.pattern.permute.xlu0 %v1884
  %1887 = vperm.xlu0 %1886, %v1882
  %v1888 = vpop.permute.xlu0 %1887
  %v1889 = vperm.slane %v660, 7
  %v1890 = vlaneseq
  %v1891 = vshrl.u32 %v1890, 7
  %1893 = vset.pattern.permute.xlu0 %v1891
  %1894 = vperm.xlu0 %1893, %v1889
  %v1895 = vpop.permute.xlu0 %1894
  %v1896 = vperm.slane %v661, 0
  %v1897 = vlaneseq
  %v1898 = vshrl.u32 %v1897, 7
  %1900 = vset.pattern.permute.xlu0 %v1898
  %1901 = vperm.xlu0 %1900, %v1896
  %v1902 = vpop.permute.xlu0 %1901
  %v1903 = vperm.slane %v661, 1
  %v1904 = vlaneseq
  %v1905 = vshrl.u32 %v1904, 7
  %1907 = vset.pattern.permute.xlu0 %v1905
  %1908 = vperm.xlu0 %1907, %v1903
  %v1909 = vpop.permute.xlu0 %1908
  %v1910 = vperm.slane %v661, 2
  %v1911 = vlaneseq
  %v1912 = vshrl.u32 %v1911, 7
  %1914 = vset.pattern.permute.xlu0 %v1912
  %1915 = vperm.xlu0 %1914, %v1910
  %v1916 = vpop.permute.xlu0 %1915
  %v1917 = vperm.slane %v661, 3
  %v1918 = vlaneseq
  %v1919 = vshrl.u32 %v1918, 7
  %1921 = vset.pattern.permute.xlu0 %v1919
  %1922 = vperm.xlu0 %1921, %v1917
  %v1923 = vpop.permute.xlu0 %1922
  %v1924 = vperm.slane %v661, 4
  %v1925 = vlaneseq
  %v1926 = vshrl.u32 %v1925, 7
  %1928 = vset.pattern.permute.xlu0 %v1926
  %1929 = vperm.xlu0 %1928, %v1924
  %v1930 = vpop.permute.xlu0 %1929
  %v1931 = vperm.slane %v661, 5
  %v1932 = vlaneseq
  %v1933 = vshrl.u32 %v1932, 7
  %1935 = vset.pattern.permute.xlu0 %v1933
  %1936 = vperm.xlu0 %1935, %v1931
  %v1937 = vpop.permute.xlu0 %1936
  %v1938 = vperm.slane %v661, 6
  %v1939 = vlaneseq
  %v1940 = vshrl.u32 %v1939, 7
  %1942 = vset.pattern.permute.xlu0 %v1940
  %1943 = vperm.xlu0 %1942, %v1938
  %v1944 = vpop.permute.xlu0 %1943
  %v1945 = vperm.slane %v661, 7
  %v1946 = vlaneseq
  %v1947 = vshrl.u32 %v1946, 7
  %1949 = vset.pattern.permute.xlu0 %v1947
  %1950 = vperm.xlu0 %1949, %v1945
  %v1951 = vpop.permute.xlu0 %1950
  %v1952 = vperm.slane %v662, 0
  %v1953 = vlaneseq
  %v1954 = vshrl.u32 %v1953, 7
  %1956 = vset.pattern.permute.xlu0 %v1954
  %1957 = vperm.xlu0 %1956, %v1952
  %v1958 = vpop.permute.xlu0 %1957
  %v1959 = vperm.slane %v662, 1
  %v1960 = vlaneseq
  %v1961 = vshrl.u32 %v1960, 7
  %1963 = vset.pattern.permute.xlu0 %v1961
  %1964 = vperm.xlu0 %1963, %v1959
  %v1965 = vpop.permute.xlu0 %1964
  %v1966 = vperm.slane %v662, 2
  %v1967 = vlaneseq
  %v1968 = vshrl.u32 %v1967, 7
  %1970 = vset.pattern.permute.xlu0 %v1968
  %1971 = vperm.xlu0 %1970, %v1966
  %v1972 = vpop.permute.xlu0 %1971
  %v1973 = vperm.slane %v662, 3
  %v1974 = vlaneseq
  %v1975 = vshrl.u32 %v1974, 7
  %1977 = vset.pattern.permute.xlu0 %v1975
  %1978 = vperm.xlu0 %1977, %v1973
  %v1979 = vpop.permute.xlu0 %1978
  %v1980 = vperm.slane %v662, 4
  %v1981 = vlaneseq
  %v1982 = vshrl.u32 %v1981, 7
  %1984 = vset.pattern.permute.xlu0 %v1982
  %1985 = vperm.xlu0 %1984, %v1980
  %v1986 = vpop.permute.xlu0 %1985
  %v1987 = vperm.slane %v662, 5
  %v1988 = vlaneseq
  %v1989 = vshrl.u32 %v1988, 7
  %1991 = vset.pattern.permute.xlu0 %v1989
  %1992 = vperm.xlu0 %1991, %v1987
  %v1993 = vpop.permute.xlu0 %1992
  %v1994 = vperm.slane %v662, 6
  %v1995 = vlaneseq
  %v1996 = vshrl.u32 %v1995, 7
  %1998 = vset.pattern.permute.xlu0 %v1996
  %1999 = vperm.xlu0 %1998, %v1994
  %v2000 = vpop.permute.xlu0 %1999
  %v2001 = vperm.slane %v662, 7
  %v2002 = vlaneseq
  %v2003 = vshrl.u32 %v2002, 7
  %2005 = vset.pattern.permute.xlu0 %v2003
  %2006 = vperm.xlu0 %2005, %v2001
  %v2007 = vpop.permute.xlu0 %2006
  %v2008 = vperm.slane %v663, 0
  %v2009 = vlaneseq
  %v2010 = vshrl.u32 %v2009, 7
  %2012 = vset.pattern.permute.xlu0 %v2010
  %2013 = vperm.xlu0 %2012, %v2008
  %v2014 = vpop.permute.xlu0 %2013
  %v2015 = vperm.slane %v663, 1
  %v2016 = vlaneseq
  %v2017 = vshrl.u32 %v2016, 7
  %2019 = vset.pattern.permute.xlu0 %v2017
  %2020 = vperm.xlu0 %2019, %v2015
  %v2021 = vpop.permute.xlu0 %2020
  %v2022 = vperm.slane %v663, 2
  %v2023 = vlaneseq
  %v2024 = vshrl.u32 %v2023, 7
  %2026 = vset.pattern.permute.xlu0 %v2024
  %2027 = vperm.xlu0 %2026, %v2022
  %v2028 = vpop.permute.xlu0 %2027
  %v2029 = vperm.slane %v663, 3
  %v2030 = vlaneseq
  %v2031 = vshrl.u32 %v2030, 7
  %2033 = vset.pattern.permute.xlu0 %v2031
  %2034 = vperm.xlu0 %2033, %v2029
  %v2035 = vpop.permute.xlu0 %2034
  %v2036 = vmul.f32 %v670, %v14
  %v2037 = vmul.f32 %v677, %v15
  %v2038 = vmul.f32 %v684, %v16
  %v2039 = vmul.f32 %v691, %v17
  %v2040 = vmul.f32 %v698, %v18
  %v2041 = vmul.f32 %v705, %v19
  %v2042 = vmul.f32 %v712, %v20
  %v2043 = vmul.f32 %v719, %v21
  %v2044 = vmul.f32 %v726, %v22
  %v2045 = vmul.f32 %v733, %v23
  %v2046 = vmul.f32 %v740, %v24
  %v2047 = vmul.f32 %v747, %v25
  %v2048 = vmul.f32 %v754, %v26
  %v2049 = vmul.f32 %v761, %v27
  %v2050 = vmul.f32 %v768, %v28
  %v2051 = vmul.f32 %v775, %v29
  %v2052 = vmul.f32 %v782, %v30
  %v2053 = vmul.f32 %v789, %v31
  %v2054 = vmul.f32 %v796, %v32
  %v2055 = vmul.f32 %v803, %v33
  %v2056 = vmul.f32 %v810, %v34
  %v2057 = vmul.f32 %v817, %v35
  %v2058 = vmul.f32 %v824, %v36
  %v2059 = vmul.f32 %v831, %v37
  %v2060 = vmul.f32 %v838, %v38
  %v2061 = vmul.f32 %v845, %v39
  %v2062 = vmul.f32 %v852, %v40
  %v2063 = vmul.f32 %v859, %v41
  %v2064 = vmul.f32 %v866, %v42
  %v2065 = vmul.f32 %v873, %v43
  %v2066 = vmul.f32 %v880, %v44
  %v2067 = vmul.f32 %v887, %v45
  %v2068 = vmul.f32 %v894, %v46
  %v2069 = vmul.f32 %v901, %v47
  %v2070 = vmul.f32 %v908, %v48
  %v2071 = vmul.f32 %v915, %v49
  %v2072 = vmul.f32 %v922, %v50
  %v2073 = vmul.f32 %v929, %v51
  %v2074 = vmul.f32 %v936, %v52
  %v2075 = vmul.f32 %v943, %v53
  %v2076 = vmul.f32 %v950, %v54
  %v2077 = vmul.f32 %v957, %v55
  %v2078 = vmul.f32 %v964, %v56
  %v2079 = vmul.f32 %v971, %v57
  %v2080 = vmul.f32 %v978, %v58
  %v2081 = vmul.f32 %v985, %v59
  %v2082 = vmul.f32 %v992, %v60
  %v2083 = vmul.f32 %v999, %v61
  %v2084 = vmul.f32 %v1006, %v62
  %v2085 = vmul.f32 %v1013, %v63
  %v2086 = vmul.f32 %v1020, %v64
  %v2087 = vmul.f32 %v1027, %v65
  %v2088 = vmul.f32 %v1034, %v66
  %v2089 = vmul.f32 %v1041, %v67
  %v2090 = vmul.f32 %v1048, %v68
  %v2091 = vmul.f32 %v1055, %v69
  %v2092 = vmul.f32 %v1062, %v70
  %v2093 = vmul.f32 %v1069, %v71
  %v2094 = vmul.f32 %v1076, %v72
  %v2095 = vmul.f32 %v1083, %v73
  %v2096 = vmul.f32 %v1090, %v74
  %v2097 = vmul.f32 %v1097, %v75
  %v2098 = vmul.f32 %v1104, %v76
  %v2099 = vmul.f32 %v1111, %v77
  %v2100 = vmul.f32 %v1118, %v78
  %v2101 = vmul.f32 %v1125, %v79
  %v2102 = vmul.f32 %v1132, %v80
  %v2103 = vmul.f32 %v1139, %v81
  %v2104 = vmul.f32 %v1146, %v82
  %v2105 = vmul.f32 %v1153, %v83
  %v2106 = vmul.f32 %v1160, %v84
  %v2107 = vmul.f32 %v1167, %v85
  %v2108 = vmul.f32 %v1174, %v86
  %v2109 = vmul.f32 %v1181, %v87
  %v2110 = vmul.f32 %v1188, %v88
  %v2111 = vmul.f32 %v1195, %v89
  %v2112 = vmul.f32 %v1202, %v90
  %v2113 = vmul.f32 %v1209, %v91
  %v2114 = vmul.f32 %v1216, %v92
  %v2115 = vmul.f32 %v1223, %v93
  %v2116 = vmul.f32 %v1230, %v94
  %v2117 = vmul.f32 %v1237, %v95
  %v2118 = vmul.f32 %v1244, %v96
  %v2119 = vmul.f32 %v1251, %v97
  %v2120 = vmul.f32 %v1258, %v98
  %v2121 = vmul.f32 %v1265, %v99
  %v2122 = vmul.f32 %v1272, %v100
  %v2123 = vmul.f32 %v1279, %v101
  %v2124 = vmul.f32 %v1286, %v102
  %v2125 = vmul.f32 %v1293, %v103
  %v2126 = vmul.f32 %v1300, %v104
  %v2127 = vmul.f32 %v1307, %v105
  %v2128 = vmul.f32 %v1314, %v106
  %v2129 = vmul.f32 %v1321, %v107
  %v2130 = vmul.f32 %v1328, %v108
  %v2131 = vmul.f32 %v1335, %v109
  %v2132 = vmul.f32 %v1342, %v110
  %v2133 = vmul.f32 %v1349, %v111
  %v2134 = vmul.f32 %v1356, %v112
  %v2135 = vmul.f32 %v1363, %v113
  %v2136 = vmul.f32 %v1370, %v114
  %v2137 = vmul.f32 %v1377, %v115
  %v2138 = vmul.f32 %v1384, %v116
  %v2139 = vmul.f32 %v1391, %v117
  %v2140 = vmul.f32 %v1398, %v118
  %v2141 = vmul.f32 %v1405, %v119
  %v2142 = vmul.f32 %v1412, %v120
  %v2143 = vmul.f32 %v1419, %v121
  %v2144 = vmul.f32 %v1426, %v122
  %v2145 = vmul.f32 %v1433, %v123
  %v2146 = vmul.f32 %v1440, %v124
  %v2147 = vmul.f32 %v1447, %v125
  %v2148 = vmul.f32 %v1454, %v126
  %v2149 = vmul.f32 %v1461, %v127
  %v2150 = vmul.f32 %v1468, %v128
  %v2151 = vmul.f32 %v1475, %v129
  %v2152 = vmul.f32 %v1482, %v130
  %v2153 = vmul.f32 %v1489, %v131
  %v2154 = vmul.f32 %v1496, %v132
  %v2155 = vmul.f32 %v1503, %v133
  %v2156 = vmul.f32 %v1510, %v134
  %v2157 = vmul.f32 %v1517, %v135
  %v2158 = vmul.f32 %v1524, %v136
  %v2159 = vmul.f32 %v1531, %v137
  %v2160 = vmul.f32 %v1538, %v138
  %v2161 = vmul.f32 %v1545, %v139
  %v2162 = vmul.f32 %v1552, %v140
  %v2163 = vmul.f32 %v1559, %v141
  %v2164 = vmul.f32 %v1566, %v142
  %v2165 = vmul.f32 %v1573, %v143
  %v2166 = vmul.f32 %v1580, %v144
  %v2167 = vmul.f32 %v1587, %v145
  %v2168 = vmul.f32 %v1594, %v146
  %v2169 = vmul.f32 %v1601, %v147
  %v2170 = vmul.f32 %v1608, %v148
  %v2171 = vmul.f32 %v1615, %v149
  %v2172 = vmul.f32 %v1622, %v150
  %v2173 = vmul.f32 %v1629, %v151
  %v2174 = vmul.f32 %v1636, %v152
  %v2175 = vmul.f32 %v1643, %v153
  %v2176 = vmul.f32 %v1650, %v154
  %v2177 = vmul.f32 %v1657, %v155
  %v2178 = vmul.f32 %v1664, %v156
  %v2179 = vmul.f32 %v1671, %v157
  %v2180 = vmul.f32 %v1678, %v158
  %v2181 = vmul.f32 %v1685, %v159
  %v2182 = vmul.f32 %v1692, %v160
  %v2183 = vmul.f32 %v1699, %v161
  %v2184 = vmul.f32 %v1706, %v162
  %v2185 = vmul.f32 %v1713, %v163
  %v2186 = vmul.f32 %v1720, %v164
  %v2187 = vmul.f32 %v1727, %v165
  %v2188 = vmul.f32 %v1734, %v166
  %v2189 = vmul.f32 %v1741, %v167
  %v2190 = vmul.f32 %v1748, %v168
  %v2191 = vmul.f32 %v1755, %v169
  %v2192 = vmul.f32 %v1762, %v170
  %v2193 = vmul.f32 %v1769, %v171
  %v2194 = vmul.f32 %v1776, %v172
  %v2195 = vmul.f32 %v1783, %v173
  %v2196 = vmul.f32 %v1790, %v174
  %v2197 = vmul.f32 %v1797, %v175
  %v2198 = vmul.f32 %v1804, %v176
  %v2199 = vmul.f32 %v1811, %v177
  %v2200 = vmul.f32 %v1818, %v178
  %v2201 = vmul.f32 %v1825, %v179
  %v2202 = vmul.f32 %v1832, %v180
  %v2203 = vmul.f32 %v1839, %v181
  %v2204 = vmul.f32 %v1846, %v182
  %v2205 = vmul.f32 %v1853, %v183
  %v2206 = vmul.f32 %v1860, %v184
  %v2207 = vmul.f32 %v1867, %v185
  %v2208 = vmul.f32 %v1874, %v186
  %v2209 = vmul.f32 %v1881, %v187
  %v2210 = vmul.f32 %v1888, %v188
  %v2211 = vmul.f32 %v1895, %v189
  %v2212 = vmul.f32 %v1902, %v190
  %v2213 = vmul.f32 %v1909, %v191
  %v2214 = vmul.f32 %v1916, %v192
  %v2215 = vmul.f32 %v1923, %v193
  %v2216 = vmul.f32 %v1930, %v194
  %v2217 = vmul.f32 %v1937, %v195
  %v2218 = vmul.f32 %v1944, %v196
  %v2219 = vmul.f32 %v1951, %v197
  %v2220 = vmul.f32 %v1958, %v198
  %v2221 = vmul.f32 %v1965, %v199
  %v2222 = vmul.f32 %v1972, %v200
  %v2223 = vmul.f32 %v1979, %v201
  %v2224 = vmul.f32 %v1986, %v202
  %v2225 = vmul.f32 %v1993, %v203
  %v2226 = vmul.f32 %v2000, %v204
  %v2227 = vmul.f32 %v2007, %v205
  %v2228 = vmul.f32 %v2014, %v206
  %v2229 = vmul.f32 %v2021, %v207
  %v2230 = vmul.f32 %v2028, %v208
  %v2231 = vmul.f32 %v2035, %v209
  %vm2232 = vcmask 523264
  %v2233 = vsel %vm2232, %v2036, 0.0
  %v2234 = vrot.slane %v2233, 4
  %v2235 = vadd.f32 %v2233, %v2234
  %v2236 = vrot.slane %v2235, 2
  %v2237 = vadd.f32 %v2235, %v2236
  %v2238 = vrot.slane %v2237, 1
  %v2239 = vadd.f32 %v2237, %v2238
  %v2240 = vsel %vm2232, %v2037, 0.0
  %v2241 = vrot.slane %v2240, 4
  %v2242 = vadd.f32 %v2240, %v2241
  %v2243 = vrot.slane %v2242, 2
  %v2244 = vadd.f32 %v2242, %v2243
  %v2245 = vrot.slane %v2244, 1
  %v2246 = vadd.f32 %v2244, %v2245
  %v2247 = vsel %vm2232, %v2038, 0.0
  %v2248 = vrot.slane %v2247, 4
  %v2249 = vadd.f32 %v2247, %v2248
  %v2250 = vrot.slane %v2249, 2
  %v2251 = vadd.f32 %v2249, %v2250
  %v2252 = vrot.slane %v2251, 1
  %v2253 = vadd.f32 %v2251, %v2252
  %v2254 = vsel %vm2232, %v2039, 0.0
  %v2255 = vrot.slane %v2254, 4
  %v2256 = vadd.f32 %v2254, %v2255
  %v2257 = vrot.slane %v2256, 2
  %v2258 = vadd.f32 %v2256, %v2257
  %v2259 = vrot.slane %v2258, 1
  %v2260 = vadd.f32 %v2258, %v2259
  %v2261 = vsel %vm2232, %v2040, 0.0
  %v2262 = vrot.slane %v2261, 4
  %v2263 = vadd.f32 %v2261, %v2262
  %v2264 = vrot.slane %v2263, 2
  %v2265 = vadd.f32 %v2263, %v2264
  %v2266 = vrot.slane %v2265, 1
  %v2267 = vadd.f32 %v2265, %v2266
  %v2268 = vsel %vm2232, %v2041, 0.0
  %v2269 = vrot.slane %v2268, 4
  %v2270 = vadd.f32 %v2268, %v2269
  %v2271 = vrot.slane %v2270, 2
  %v2272 = vadd.f32 %v2270, %v2271
  %v2273 = vrot.slane %v2272, 1
  %v2274 = vadd.f32 %v2272, %v2273
  %v2275 = vsel %vm2232, %v2042, 0.0
  %v2276 = vrot.slane %v2275, 4
  %v2277 = vadd.f32 %v2275, %v2276
  %v2278 = vrot.slane %v2277, 2
  %v2279 = vadd.f32 %v2277, %v2278
  %v2280 = vrot.slane %v2279, 1
  %v2281 = vadd.f32 %v2279, %v2280
  %v2282 = vsel %vm2232, %v2043, 0.0
  %v2283 = vrot.slane %v2282, 4
  %v2284 = vadd.f32 %v2282, %v2283
  %v2285 = vrot.slane %v2284, 2
  %v2286 = vadd.f32 %v2284, %v2285
  %v2287 = vrot.slane %v2286, 1
  %v2288 = vadd.f32 %v2286, %v2287
  %v2289 = vsel %vm2232, %v2044, 0.0
  %v2290 = vrot.slane %v2289, 4
  %v2291 = vadd.f32 %v2289, %v2290
  %v2292 = vrot.slane %v2291, 2
  %v2293 = vadd.f32 %v2291, %v2292
  %v2294 = vrot.slane %v2293, 1
  %v2295 = vadd.f32 %v2293, %v2294
  %v2296 = vsel %vm2232, %v2045, 0.0
  %v2297 = vrot.slane %v2296, 4
  %v2298 = vadd.f32 %v2296, %v2297
  %v2299 = vrot.slane %v2298, 2
  %v2300 = vadd.f32 %v2298, %v2299
  %v2301 = vrot.slane %v2300, 1
  %v2302 = vadd.f32 %v2300, %v2301
  %v2303 = vsel %vm2232, %v2046, 0.0
  %v2304 = vrot.slane %v2303, 4
  %v2305 = vadd.f32 %v2303, %v2304
  %v2306 = vrot.slane %v2305, 2
  %v2307 = vadd.f32 %v2305, %v2306
  %v2308 = vrot.slane %v2307, 1
  %v2309 = vadd.f32 %v2307, %v2308
  %v2310 = vsel %vm2232, %v2047, 0.0
  %v2311 = vrot.slane %v2310, 4
  %v2312 = vadd.f32 %v2310, %v2311
  %v2313 = vrot.slane %v2312, 2
  %v2314 = vadd.f32 %v2312, %v2313
  %v2315 = vrot.slane %v2314, 1
  %v2316 = vadd.f32 %v2314, %v2315
  %v2317 = vsel %vm2232, %v2048, 0.0
  %v2318 = vrot.slane %v2317, 4
  %v2319 = vadd.f32 %v2317, %v2318
  %v2320 = vrot.slane %v2319, 2
  %v2321 = vadd.f32 %v2319, %v2320
  %v2322 = vrot.slane %v2321, 1
  %v2323 = vadd.f32 %v2321, %v2322
  %v2324 = vsel %vm2232, %v2049, 0.0
  %v2325 = vrot.slane %v2324, 4
  %v2326 = vadd.f32 %v2324, %v2325
  %v2327 = vrot.slane %v2326, 2
  %v2328 = vadd.f32 %v2326, %v2327
  %v2329 = vrot.slane %v2328, 1
  %v2330 = vadd.f32 %v2328, %v2329
  %v2331 = vsel %vm2232, %v2050, 0.0
  %v2332 = vrot.slane %v2331, 4
  %v2333 = vadd.f32 %v2331, %v2332
  %v2334 = vrot.slane %v2333, 2
  %v2335 = vadd.f32 %v2333, %v2334
  %v2336 = vrot.slane %v2335, 1
  %v2337 = vadd.f32 %v2335, %v2336
  %v2338 = vsel %vm2232, %v2051, 0.0
  %v2339 = vrot.slane %v2338, 4
  %v2340 = vadd.f32 %v2338, %v2339
  %v2341 = vrot.slane %v2340, 2
  %v2342 = vadd.f32 %v2340, %v2341
  %v2343 = vrot.slane %v2342, 1
  %v2344 = vadd.f32 %v2342, %v2343
  %v2345 = vsel %vm2232, %v2052, 0.0
  %v2346 = vrot.slane %v2345, 4
  %v2347 = vadd.f32 %v2345, %v2346
  %v2348 = vrot.slane %v2347, 2
  %v2349 = vadd.f32 %v2347, %v2348
  %v2350 = vrot.slane %v2349, 1
  %v2351 = vadd.f32 %v2349, %v2350
  %v2352 = vsel %vm2232, %v2053, 0.0
  %v2353 = vrot.slane %v2352, 4
  %v2354 = vadd.f32 %v2352, %v2353
  %v2355 = vrot.slane %v2354, 2
  %v2356 = vadd.f32 %v2354, %v2355
  %v2357 = vrot.slane %v2356, 1
  %v2358 = vadd.f32 %v2356, %v2357
  %v2359 = vsel %vm2232, %v2054, 0.0
  %v2360 = vrot.slane %v2359, 4
  %v2361 = vadd.f32 %v2359, %v2360
  %v2362 = vrot.slane %v2361, 2
  %v2363 = vadd.f32 %v2361, %v2362
  %v2364 = vrot.slane %v2363, 1
  %v2365 = vadd.f32 %v2363, %v2364
  %v2366 = vsel %vm2232, %v2055, 0.0
  %v2367 = vrot.slane %v2366, 4
  %v2368 = vadd.f32 %v2366, %v2367
  %v2369 = vrot.slane %v2368, 2
  %v2370 = vadd.f32 %v2368, %v2369
  %v2371 = vrot.slane %v2370, 1
  %v2372 = vadd.f32 %v2370, %v2371
  %v2373 = vsel %vm2232, %v2056, 0.0
  %v2374 = vrot.slane %v2373, 4
  %v2375 = vadd.f32 %v2373, %v2374
  %v2376 = vrot.slane %v2375, 2
  %v2377 = vadd.f32 %v2375, %v2376
  %v2378 = vrot.slane %v2377, 1
  %v2379 = vadd.f32 %v2377, %v2378
  %v2380 = vsel %vm2232, %v2057, 0.0
  %v2381 = vrot.slane %v2380, 4
  %v2382 = vadd.f32 %v2380, %v2381
  %v2383 = vrot.slane %v2382, 2
  %v2384 = vadd.f32 %v2382, %v2383
  %v2385 = vrot.slane %v2384, 1
  %v2386 = vadd.f32 %v2384, %v2385
  %v2387 = vsel %vm2232, %v2058, 0.0
  %v2388 = vrot.slane %v2387, 4
  %v2389 = vadd.f32 %v2387, %v2388
  %v2390 = vrot.slane %v2389, 2
  %v2391 = vadd.f32 %v2389, %v2390
  %v2392 = vrot.slane %v2391, 1
  %v2393 = vadd.f32 %v2391, %v2392
  %v2394 = vsel %vm2232, %v2059, 0.0
  %v2395 = vrot.slane %v2394, 4
  %v2396 = vadd.f32 %v2394, %v2395
  %v2397 = vrot.slane %v2396, 2
  %v2398 = vadd.f32 %v2396, %v2397
  %v2399 = vrot.slane %v2398, 1
  %v2400 = vadd.f32 %v2398, %v2399
  %v2401 = vsel %vm2232, %v2060, 0.0
  %v2402 = vrot.slane %v2401, 4
  %v2403 = vadd.f32 %v2401, %v2402
  %v2404 = vrot.slane %v2403, 2
  %v2405 = vadd.f32 %v2403, %v2404
  %v2406 = vrot.slane %v2405, 1
  %v2407 = vadd.f32 %v2405, %v2406
  %v2408 = vsel %vm2232, %v2061, 0.0
  %v2409 = vrot.slane %v2408, 4
  %v2410 = vadd.f32 %v2408, %v2409
  %v2411 = vrot.slane %v2410, 2
  %v2412 = vadd.f32 %v2410, %v2411
  %v2413 = vrot.slane %v2412, 1
  %v2414 = vadd.f32 %v2412, %v2413
  %v2415 = vsel %vm2232, %v2062, 0.0
  %v2416 = vrot.slane %v2415, 4
  %v2417 = vadd.f32 %v2415, %v2416
  %v2418 = vrot.slane %v2417, 2
  %v2419 = vadd.f32 %v2417, %v2418
  %v2420 = vrot.slane %v2419, 1
  %v2421 = vadd.f32 %v2419, %v2420
  %v2422 = vsel %vm2232, %v2063, 0.0
  %v2423 = vrot.slane %v2422, 4
  %v2424 = vadd.f32 %v2422, %v2423
  %v2425 = vrot.slane %v2424, 2
  %v2426 = vadd.f32 %v2424, %v2425
  %v2427 = vrot.slane %v2426, 1
  %v2428 = vadd.f32 %v2426, %v2427
  %v2429 = vsel %vm2232, %v2064, 0.0
  %v2430 = vrot.slane %v2429, 4
  %v2431 = vadd.f32 %v2429, %v2430
  %v2432 = vrot.slane %v2431, 2
  %v2433 = vadd.f32 %v2431, %v2432
  %v2434 = vrot.slane %v2433, 1
  %v2435 = vadd.f32 %v2433, %v2434
  %v2436 = vsel %vm2232, %v2065, 0.0
  %v2437 = vrot.slane %v2436, 4
  %v2438 = vadd.f32 %v2436, %v2437
  %v2439 = vrot.slane %v2438, 2
  %v2440 = vadd.f32 %v2438, %v2439
  %v2441 = vrot.slane %v2440, 1
  %v2442 = vadd.f32 %v2440, %v2441
  %v2443 = vsel %vm2232, %v2066, 0.0
  %v2444 = vrot.slane %v2443, 4
  %v2445 = vadd.f32 %v2443, %v2444
  %v2446 = vrot.slane %v2445, 2
  %v2447 = vadd.f32 %v2445, %v2446
  %v2448 = vrot.slane %v2447, 1
  %v2449 = vadd.f32 %v2447, %v2448
  %v2450 = vsel %vm2232, %v2067, 0.0
  %v2451 = vrot.slane %v2450, 4
  %v2452 = vadd.f32 %v2450, %v2451
  %v2453 = vrot.slane %v2452, 2
  %v2454 = vadd.f32 %v2452, %v2453
  %v2455 = vrot.slane %v2454, 1
  %v2456 = vadd.f32 %v2454, %v2455
  %v2457 = vsel %vm2232, %v2068, 0.0
  %v2458 = vrot.slane %v2457, 4
  %v2459 = vadd.f32 %v2457, %v2458
  %v2460 = vrot.slane %v2459, 2
  %v2461 = vadd.f32 %v2459, %v2460
  %v2462 = vrot.slane %v2461, 1
  %v2463 = vadd.f32 %v2461, %v2462
  %v2464 = vsel %vm2232, %v2069, 0.0
  %v2465 = vrot.slane %v2464, 4
  %v2466 = vadd.f32 %v2464, %v2465
  %v2467 = vrot.slane %v2466, 2
  %v2468 = vadd.f32 %v2466, %v2467
  %v2469 = vrot.slane %v2468, 1
  %v2470 = vadd.f32 %v2468, %v2469
  %v2471 = vsel %vm2232, %v2070, 0.0
  %v2472 = vrot.slane %v2471, 4
  %v2473 = vadd.f32 %v2471, %v2472
  %v2474 = vrot.slane %v2473, 2
  %v2475 = vadd.f32 %v2473, %v2474
  %v2476 = vrot.slane %v2475, 1
  %v2477 = vadd.f32 %v2475, %v2476
  %v2478 = vsel %vm2232, %v2071, 0.0
  %v2479 = vrot.slane %v2478, 4
  %v2480 = vadd.f32 %v2478, %v2479
  %v2481 = vrot.slane %v2480, 2
  %v2482 = vadd.f32 %v2480, %v2481
  %v2483 = vrot.slane %v2482, 1
  %v2484 = vadd.f32 %v2482, %v2483
  %v2485 = vsel %vm2232, %v2072, 0.0
  %v2486 = vrot.slane %v2485, 4
  %v2487 = vadd.f32 %v2485, %v2486
  %v2488 = vrot.slane %v2487, 2
  %v2489 = vadd.f32 %v2487, %v2488
  %v2490 = vrot.slane %v2489, 1
  %v2491 = vadd.f32 %v2489, %v2490
  %v2492 = vsel %vm2232, %v2073, 0.0
  %v2493 = vrot.slane %v2492, 4
  %v2494 = vadd.f32 %v2492, %v2493
  %v2495 = vrot.slane %v2494, 2
  %v2496 = vadd.f32 %v2494, %v2495
  %v2497 = vrot.slane %v2496, 1
  %v2498 = vadd.f32 %v2496, %v2497
  %v2499 = vsel %vm2232, %v2074, 0.0
  %v2500 = vrot.slane %v2499, 4
  %v2501 = vadd.f32 %v2499, %v2500
  %v2502 = vrot.slane %v2501, 2
  %v2503 = vadd.f32 %v2501, %v2502
  %v2504 = vrot.slane %v2503, 1
  %v2505 = vadd.f32 %v2503, %v2504
  %v2506 = vsel %vm2232, %v2075, 0.0
  %v2507 = vrot.slane %v2506, 4
  %v2508 = vadd.f32 %v2506, %v2507
  %v2509 = vrot.slane %v2508, 2
  %v2510 = vadd.f32 %v2508, %v2509
  %v2511 = vrot.slane %v2510, 1
  %v2512 = vadd.f32 %v2510, %v2511
  %v2513 = vsel %vm2232, %v2076, 0.0
  %v2514 = vrot.slane %v2513, 4
  %v2515 = vadd.f32 %v2513, %v2514
  %v2516 = vrot.slane %v2515, 2
  %v2517 = vadd.f32 %v2515, %v2516
  %v2518 = vrot.slane %v2517, 1
  %v2519 = vadd.f32 %v2517, %v2518
  %v2520 = vsel %vm2232, %v2077, 0.0
  %v2521 = vrot.slane %v2520, 4
  %v2522 = vadd.f32 %v2520, %v2521
  %v2523 = vrot.slane %v2522, 2
  %v2524 = vadd.f32 %v2522, %v2523
  %v2525 = vrot.slane %v2524, 1
  %v2526 = vadd.f32 %v2524, %v2525
  %v2527 = vsel %vm2232, %v2078, 0.0
  %v2528 = vrot.slane %v2527, 4
  %v2529 = vadd.f32 %v2527, %v2528
  %v2530 = vrot.slane %v2529, 2
  %v2531 = vadd.f32 %v2529, %v2530
  %v2532 = vrot.slane %v2531, 1
  %v2533 = vadd.f32 %v2531, %v2532
  %v2534 = vsel %vm2232, %v2079, 0.0
  %v2535 = vrot.slane %v2534, 4
  %v2536 = vadd.f32 %v2534, %v2535
  %v2537 = vrot.slane %v2536, 2
  %v2538 = vadd.f32 %v2536, %v2537
  %v2539 = vrot.slane %v2538, 1
  %v2540 = vadd.f32 %v2538, %v2539
  %v2541 = vsel %vm2232, %v2080, 0.0
  %v2542 = vrot.slane %v2541, 4
  %v2543 = vadd.f32 %v2541, %v2542
  %v2544 = vrot.slane %v2543, 2
  %v2545 = vadd.f32 %v2543, %v2544
  %v2546 = vrot.slane %v2545, 1
  %v2547 = vadd.f32 %v2545, %v2546
  %v2548 = vsel %vm2232, %v2081, 0.0
  %v2549 = vrot.slane %v2548, 4
  %v2550 = vadd.f32 %v2548, %v2549
  %v2551 = vrot.slane %v2550, 2
  %v2552 = vadd.f32 %v2550, %v2551
  %v2553 = vrot.slane %v2552, 1
  %v2554 = vadd.f32 %v2552, %v2553
  %v2555 = vsel %vm2232, %v2082, 0.0
  %v2556 = vrot.slane %v2555, 4
  %v2557 = vadd.f32 %v2555, %v2556
  %v2558 = vrot.slane %v2557, 2
  %v2559 = vadd.f32 %v2557, %v2558
  %v2560 = vrot.slane %v2559, 1
  %v2561 = vadd.f32 %v2559, %v2560
  %v2562 = vsel %vm2232, %v2083, 0.0
  %v2563 = vrot.slane %v2562, 4
  %v2564 = vadd.f32 %v2562, %v2563
  %v2565 = vrot.slane %v2564, 2
  %v2566 = vadd.f32 %v2564, %v2565
  %v2567 = vrot.slane %v2566, 1
  %v2568 = vadd.f32 %v2566, %v2567
  %v2569 = vsel %vm2232, %v2084, 0.0
  %v2570 = vrot.slane %v2569, 4
  %v2571 = vadd.f32 %v2569, %v2570
  %v2572 = vrot.slane %v2571, 2
  %v2573 = vadd.f32 %v2571, %v2572
  %v2574 = vrot.slane %v2573, 1
  %v2575 = vadd.f32 %v2573, %v2574
  %v2576 = vsel %vm2232, %v2085, 0.0
  %v2577 = vrot.slane %v2576, 4
  %v2578 = vadd.f32 %v2576, %v2577
  %v2579 = vrot.slane %v2578, 2
  %v2580 = vadd.f32 %v2578, %v2579
  %v2581 = vrot.slane %v2580, 1
  %v2582 = vadd.f32 %v2580, %v2581
  %v2583 = vsel %vm2232, %v2086, 0.0
  %v2584 = vrot.slane %v2583, 4
  %v2585 = vadd.f32 %v2583, %v2584
  %v2586 = vrot.slane %v2585, 2
  %v2587 = vadd.f32 %v2585, %v2586
  %v2588 = vrot.slane %v2587, 1
  %v2589 = vadd.f32 %v2587, %v2588
  %v2590 = vsel %vm2232, %v2087, 0.0
  %v2591 = vrot.slane %v2590, 4
  %v2592 = vadd.f32 %v2590, %v2591
  %v2593 = vrot.slane %v2592, 2
  %v2594 = vadd.f32 %v2592, %v2593
  %v2595 = vrot.slane %v2594, 1
  %v2596 = vadd.f32 %v2594, %v2595
  %v2597 = vsel %vm2232, %v2088, 0.0
  %v2598 = vrot.slane %v2597, 4
  %v2599 = vadd.f32 %v2597, %v2598
  %v2600 = vrot.slane %v2599, 2
  %v2601 = vadd.f32 %v2599, %v2600
  %v2602 = vrot.slane %v2601, 1
  %v2603 = vadd.f32 %v2601, %v2602
  %v2604 = vsel %vm2232, %v2089, 0.0
  %v2605 = vrot.slane %v2604, 4
  %v2606 = vadd.f32 %v2604, %v2605
  %v2607 = vrot.slane %v2606, 2
  %v2608 = vadd.f32 %v2606, %v2607
  %v2609 = vrot.slane %v2608, 1
  %v2610 = vadd.f32 %v2608, %v2609
  %v2611 = vsel %vm2232, %v2090, 0.0
  %v2612 = vrot.slane %v2611, 4
  %v2613 = vadd.f32 %v2611, %v2612
  %v2614 = vrot.slane %v2613, 2
  %v2615 = vadd.f32 %v2613, %v2614
  %v2616 = vrot.slane %v2615, 1
  %v2617 = vadd.f32 %v2615, %v2616
  %v2618 = vsel %vm2232, %v2091, 0.0
  %v2619 = vrot.slane %v2618, 4
  %v2620 = vadd.f32 %v2618, %v2619
  %v2621 = vrot.slane %v2620, 2
  %v2622 = vadd.f32 %v2620, %v2621
  %v2623 = vrot.slane %v2622, 1
  %v2624 = vadd.f32 %v2622, %v2623
  %v2625 = vsel %vm2232, %v2092, 0.0
  %v2626 = vrot.slane %v2625, 4
  %v2627 = vadd.f32 %v2625, %v2626
  %v2628 = vrot.slane %v2627, 2
  %v2629 = vadd.f32 %v2627, %v2628
  %v2630 = vrot.slane %v2629, 1
  %v2631 = vadd.f32 %v2629, %v2630
  %v2632 = vsel %vm2232, %v2093, 0.0
  %v2633 = vrot.slane %v2632, 4
  %v2634 = vadd.f32 %v2632, %v2633
  %v2635 = vrot.slane %v2634, 2
  %v2636 = vadd.f32 %v2634, %v2635
  %v2637 = vrot.slane %v2636, 1
  %v2638 = vadd.f32 %v2636, %v2637
  %v2639 = vsel %vm2232, %v2094, 0.0
  %v2640 = vrot.slane %v2639, 4
  %v2641 = vadd.f32 %v2639, %v2640
  %v2642 = vrot.slane %v2641, 2
  %v2643 = vadd.f32 %v2641, %v2642
  %v2644 = vrot.slane %v2643, 1
  %v2645 = vadd.f32 %v2643, %v2644
  %v2646 = vsel %vm2232, %v2095, 0.0
  %v2647 = vrot.slane %v2646, 4
  %v2648 = vadd.f32 %v2646, %v2647
  %v2649 = vrot.slane %v2648, 2
  %v2650 = vadd.f32 %v2648, %v2649
  %v2651 = vrot.slane %v2650, 1
  %v2652 = vadd.f32 %v2650, %v2651
  %v2653 = vsel %vm2232, %v2096, 0.0
  %v2654 = vrot.slane %v2653, 4
  %v2655 = vadd.f32 %v2653, %v2654
  %v2656 = vrot.slane %v2655, 2
  %v2657 = vadd.f32 %v2655, %v2656
  %v2658 = vrot.slane %v2657, 1
  %v2659 = vadd.f32 %v2657, %v2658
  %v2660 = vsel %vm2232, %v2097, 0.0
  %v2661 = vrot.slane %v2660, 4
  %v2662 = vadd.f32 %v2660, %v2661
  %v2663 = vrot.slane %v2662, 2
  %v2664 = vadd.f32 %v2662, %v2663
  %v2665 = vrot.slane %v2664, 1
  %v2666 = vadd.f32 %v2664, %v2665
  %v2667 = vsel %vm2232, %v2098, 0.0
  %v2668 = vrot.slane %v2667, 4
  %v2669 = vadd.f32 %v2667, %v2668
  %v2670 = vrot.slane %v2669, 2
  %v2671 = vadd.f32 %v2669, %v2670
  %v2672 = vrot.slane %v2671, 1
  %v2673 = vadd.f32 %v2671, %v2672
  %v2674 = vsel %vm2232, %v2099, 0.0
  %v2675 = vrot.slane %v2674, 4
  %v2676 = vadd.f32 %v2674, %v2675
  %v2677 = vrot.slane %v2676, 2
  %v2678 = vadd.f32 %v2676, %v2677
  %v2679 = vrot.slane %v2678, 1
  %v2680 = vadd.f32 %v2678, %v2679
  %v2681 = vsel %vm2232, %v2100, 0.0
  %v2682 = vrot.slane %v2681, 4
  %v2683 = vadd.f32 %v2681, %v2682
  %v2684 = vrot.slane %v2683, 2
  %v2685 = vadd.f32 %v2683, %v2684
  %v2686 = vrot.slane %v2685, 1
  %v2687 = vadd.f32 %v2685, %v2686
  %v2688 = vsel %vm2232, %v2101, 0.0
  %v2689 = vrot.slane %v2688, 4
  %v2690 = vadd.f32 %v2688, %v2689
  %v2691 = vrot.slane %v2690, 2
  %v2692 = vadd.f32 %v2690, %v2691
  %v2693 = vrot.slane %v2692, 1
  %v2694 = vadd.f32 %v2692, %v2693
  %v2695 = vsel %vm2232, %v2102, 0.0
  %v2696 = vrot.slane %v2695, 4
  %v2697 = vadd.f32 %v2695, %v2696
  %v2698 = vrot.slane %v2697, 2
  %v2699 = vadd.f32 %v2697, %v2698
  %v2700 = vrot.slane %v2699, 1
  %v2701 = vadd.f32 %v2699, %v2700
  %v2702 = vsel %vm2232, %v2103, 0.0
  %v2703 = vrot.slane %v2702, 4
  %v2704 = vadd.f32 %v2702, %v2703
  %v2705 = vrot.slane %v2704, 2
  %v2706 = vadd.f32 %v2704, %v2705
  %v2707 = vrot.slane %v2706, 1
  %v2708 = vadd.f32 %v2706, %v2707
  %v2709 = vsel %vm2232, %v2104, 0.0
  %v2710 = vrot.slane %v2709, 4
  %v2711 = vadd.f32 %v2709, %v2710
  %v2712 = vrot.slane %v2711, 2
  %v2713 = vadd.f32 %v2711, %v2712
  %v2714 = vrot.slane %v2713, 1
  %v2715 = vadd.f32 %v2713, %v2714
  %v2716 = vsel %vm2232, %v2105, 0.0
  %v2717 = vrot.slane %v2716, 4
  %v2718 = vadd.f32 %v2716, %v2717
  %v2719 = vrot.slane %v2718, 2
  %v2720 = vadd.f32 %v2718, %v2719
  %v2721 = vrot.slane %v2720, 1
  %v2722 = vadd.f32 %v2720, %v2721
  %v2723 = vsel %vm2232, %v2106, 0.0
  %v2724 = vrot.slane %v2723, 4
  %v2725 = vadd.f32 %v2723, %v2724
  %v2726 = vrot.slane %v2725, 2
  %v2727 = vadd.f32 %v2725, %v2726
  %v2728 = vrot.slane %v2727, 1
  %v2729 = vadd.f32 %v2727, %v2728
  %v2730 = vsel %vm2232, %v2107, 0.0
  %v2731 = vrot.slane %v2730, 4
  %v2732 = vadd.f32 %v2730, %v2731
  %v2733 = vrot.slane %v2732, 2
  %v2734 = vadd.f32 %v2732, %v2733
  %v2735 = vrot.slane %v2734, 1
  %v2736 = vadd.f32 %v2734, %v2735
  %v2737 = vsel %vm2232, %v2108, 0.0
  %v2738 = vrot.slane %v2737, 4
  %v2739 = vadd.f32 %v2737, %v2738
  %v2740 = vrot.slane %v2739, 2
  %v2741 = vadd.f32 %v2739, %v2740
  %v2742 = vrot.slane %v2741, 1
  %v2743 = vadd.f32 %v2741, %v2742
  %v2744 = vsel %vm2232, %v2109, 0.0
  %v2745 = vrot.slane %v2744, 4
  %v2746 = vadd.f32 %v2744, %v2745
  %v2747 = vrot.slane %v2746, 2
  %v2748 = vadd.f32 %v2746, %v2747
  %v2749 = vrot.slane %v2748, 1
  %v2750 = vadd.f32 %v2748, %v2749
  %v2751 = vsel %vm2232, %v2110, 0.0
  %v2752 = vrot.slane %v2751, 4
  %v2753 = vadd.f32 %v2751, %v2752
  %v2754 = vrot.slane %v2753, 2
  %v2755 = vadd.f32 %v2753, %v2754
  %v2756 = vrot.slane %v2755, 1
  %v2757 = vadd.f32 %v2755, %v2756
  %v2758 = vsel %vm2232, %v2111, 0.0
  %v2759 = vrot.slane %v2758, 4
  %v2760 = vadd.f32 %v2758, %v2759
  %v2761 = vrot.slane %v2760, 2
  %v2762 = vadd.f32 %v2760, %v2761
  %v2763 = vrot.slane %v2762, 1
  %v2764 = vadd.f32 %v2762, %v2763
  %v2765 = vsel %vm2232, %v2112, 0.0
  %v2766 = vrot.slane %v2765, 4
  %v2767 = vadd.f32 %v2765, %v2766
  %v2768 = vrot.slane %v2767, 2
  %v2769 = vadd.f32 %v2767, %v2768
  %v2770 = vrot.slane %v2769, 1
  %v2771 = vadd.f32 %v2769, %v2770
  %v2772 = vsel %vm2232, %v2113, 0.0
  %v2773 = vrot.slane %v2772, 4
  %v2774 = vadd.f32 %v2772, %v2773
  %v2775 = vrot.slane %v2774, 2
  %v2776 = vadd.f32 %v2774, %v2775
  %v2777 = vrot.slane %v2776, 1
  %v2778 = vadd.f32 %v2776, %v2777
  %v2779 = vsel %vm2232, %v2114, 0.0
  %v2780 = vrot.slane %v2779, 4
  %v2781 = vadd.f32 %v2779, %v2780
  %v2782 = vrot.slane %v2781, 2
  %v2783 = vadd.f32 %v2781, %v2782
  %v2784 = vrot.slane %v2783, 1
  %v2785 = vadd.f32 %v2783, %v2784
  %v2786 = vsel %vm2232, %v2115, 0.0
  %v2787 = vrot.slane %v2786, 4
  %v2788 = vadd.f32 %v2786, %v2787
  %v2789 = vrot.slane %v2788, 2
  %v2790 = vadd.f32 %v2788, %v2789
  %v2791 = vrot.slane %v2790, 1
  %v2792 = vadd.f32 %v2790, %v2791
  %v2793 = vsel %vm2232, %v2116, 0.0
  %v2794 = vrot.slane %v2793, 4
  %v2795 = vadd.f32 %v2793, %v2794
  %v2796 = vrot.slane %v2795, 2
  %v2797 = vadd.f32 %v2795, %v2796
  %v2798 = vrot.slane %v2797, 1
  %v2799 = vadd.f32 %v2797, %v2798
  %v2800 = vsel %vm2232, %v2117, 0.0
  %v2801 = vrot.slane %v2800, 4
  %v2802 = vadd.f32 %v2800, %v2801
  %v2803 = vrot.slane %v2802, 2
  %v2804 = vadd.f32 %v2802, %v2803
  %v2805 = vrot.slane %v2804, 1
  %v2806 = vadd.f32 %v2804, %v2805
  %v2807 = vsel %vm2232, %v2118, 0.0
  %v2808 = vrot.slane %v2807, 4
  %v2809 = vadd.f32 %v2807, %v2808
  %v2810 = vrot.slane %v2809, 2
  %v2811 = vadd.f32 %v2809, %v2810
  %v2812 = vrot.slane %v2811, 1
  %v2813 = vadd.f32 %v2811, %v2812
  %v2814 = vsel %vm2232, %v2119, 0.0
  %v2815 = vrot.slane %v2814, 4
  %v2816 = vadd.f32 %v2814, %v2815
  %v2817 = vrot.slane %v2816, 2
  %v2818 = vadd.f32 %v2816, %v2817
  %v2819 = vrot.slane %v2818, 1
  %v2820 = vadd.f32 %v2818, %v2819
  %v2821 = vsel %vm2232, %v2120, 0.0
  %v2822 = vrot.slane %v2821, 4
  %v2823 = vadd.f32 %v2821, %v2822
  %v2824 = vrot.slane %v2823, 2
  %v2825 = vadd.f32 %v2823, %v2824
  %v2826 = vrot.slane %v2825, 1
  %v2827 = vadd.f32 %v2825, %v2826
  %v2828 = vsel %vm2232, %v2121, 0.0
  %v2829 = vrot.slane %v2828, 4
  %v2830 = vadd.f32 %v2828, %v2829
  %v2831 = vrot.slane %v2830, 2
  %v2832 = vadd.f32 %v2830, %v2831
  %v2833 = vrot.slane %v2832, 1
  %v2834 = vadd.f32 %v2832, %v2833
  %v2835 = vsel %vm2232, %v2122, 0.0
  %v2836 = vrot.slane %v2835, 4
  %v2837 = vadd.f32 %v2835, %v2836
  %v2838 = vrot.slane %v2837, 2
  %v2839 = vadd.f32 %v2837, %v2838
  %v2840 = vrot.slane %v2839, 1
  %v2841 = vadd.f32 %v2839, %v2840
  %v2842 = vsel %vm2232, %v2123, 0.0
  %v2843 = vrot.slane %v2842, 4
  %v2844 = vadd.f32 %v2842, %v2843
  %v2845 = vrot.slane %v2844, 2
  %v2846 = vadd.f32 %v2844, %v2845
  %v2847 = vrot.slane %v2846, 1
  %v2848 = vadd.f32 %v2846, %v2847
  %v2849 = vsel %vm2232, %v2124, 0.0
  %v2850 = vrot.slane %v2849, 4
  %v2851 = vadd.f32 %v2849, %v2850
  %v2852 = vrot.slane %v2851, 2
  %v2853 = vadd.f32 %v2851, %v2852
  %v2854 = vrot.slane %v2853, 1
  %v2855 = vadd.f32 %v2853, %v2854
  %v2856 = vsel %vm2232, %v2125, 0.0
  %v2857 = vrot.slane %v2856, 4
  %v2858 = vadd.f32 %v2856, %v2857
  %v2859 = vrot.slane %v2858, 2
  %v2860 = vadd.f32 %v2858, %v2859
  %v2861 = vrot.slane %v2860, 1
  %v2862 = vadd.f32 %v2860, %v2861
  %v2863 = vsel %vm2232, %v2126, 0.0
  %v2864 = vrot.slane %v2863, 4
  %v2865 = vadd.f32 %v2863, %v2864
  %v2866 = vrot.slane %v2865, 2
  %v2867 = vadd.f32 %v2865, %v2866
  %v2868 = vrot.slane %v2867, 1
  %v2869 = vadd.f32 %v2867, %v2868
  %v2870 = vsel %vm2232, %v2127, 0.0
  %v2871 = vrot.slane %v2870, 4
  %v2872 = vadd.f32 %v2870, %v2871
  %v2873 = vrot.slane %v2872, 2
  %v2874 = vadd.f32 %v2872, %v2873
  %v2875 = vrot.slane %v2874, 1
  %v2876 = vadd.f32 %v2874, %v2875
  %v2877 = vsel %vm2232, %v2128, 0.0
  %v2878 = vrot.slane %v2877, 4
  %v2879 = vadd.f32 %v2877, %v2878
  %v2880 = vrot.slane %v2879, 2
  %v2881 = vadd.f32 %v2879, %v2880
  %v2882 = vrot.slane %v2881, 1
  %v2883 = vadd.f32 %v2881, %v2882
  %v2884 = vsel %vm2232, %v2129, 0.0
  %v2885 = vrot.slane %v2884, 4
  %v2886 = vadd.f32 %v2884, %v2885
  %v2887 = vrot.slane %v2886, 2
  %v2888 = vadd.f32 %v2886, %v2887
  %v2889 = vrot.slane %v2888, 1
  %v2890 = vadd.f32 %v2888, %v2889
  %v2891 = vsel %vm2232, %v2130, 0.0
  %v2892 = vrot.slane %v2891, 4
  %v2893 = vadd.f32 %v2891, %v2892
  %v2894 = vrot.slane %v2893, 2
  %v2895 = vadd.f32 %v2893, %v2894
  %v2896 = vrot.slane %v2895, 1
  %v2897 = vadd.f32 %v2895, %v2896
  %v2898 = vsel %vm2232, %v2131, 0.0
  %v2899 = vrot.slane %v2898, 4
  %v2900 = vadd.f32 %v2898, %v2899
  %v2901 = vrot.slane %v2900, 2
  %v2902 = vadd.f32 %v2900, %v2901
  %v2903 = vrot.slane %v2902, 1
  %v2904 = vadd.f32 %v2902, %v2903
  %v2905 = vsel %vm2232, %v2132, 0.0
  %v2906 = vrot.slane %v2905, 4
  %v2907 = vadd.f32 %v2905, %v2906
  %v2908 = vrot.slane %v2907, 2
  %v2909 = vadd.f32 %v2907, %v2908
  %v2910 = vrot.slane %v2909, 1
  %v2911 = vadd.f32 %v2909, %v2910
  %v2912 = vsel %vm2232, %v2133, 0.0
  %v2913 = vrot.slane %v2912, 4
  %v2914 = vadd.f32 %v2912, %v2913
  %v2915 = vrot.slane %v2914, 2
  %v2916 = vadd.f32 %v2914, %v2915
  %v2917 = vrot.slane %v2916, 1
  %v2918 = vadd.f32 %v2916, %v2917
  %v2919 = vsel %vm2232, %v2134, 0.0
  %v2920 = vrot.slane %v2919, 4
  %v2921 = vadd.f32 %v2919, %v2920
  %v2922 = vrot.slane %v2921, 2
  %v2923 = vadd.f32 %v2921, %v2922
  %v2924 = vrot.slane %v2923, 1
  %v2925 = vadd.f32 %v2923, %v2924
  %v2926 = vsel %vm2232, %v2135, 0.0
  %v2927 = vrot.slane %v2926, 4
  %v2928 = vadd.f32 %v2926, %v2927
  %v2929 = vrot.slane %v2928, 2
  %v2930 = vadd.f32 %v2928, %v2929
  %v2931 = vrot.slane %v2930, 1
  %v2932 = vadd.f32 %v2930, %v2931
  %v2933 = vsel %vm2232, %v2136, 0.0
  %v2934 = vrot.slane %v2933, 4
  %v2935 = vadd.f32 %v2933, %v2934
  %v2936 = vrot.slane %v2935, 2
  %v2937 = vadd.f32 %v2935, %v2936
  %v2938 = vrot.slane %v2937, 1
  %v2939 = vadd.f32 %v2937, %v2938
  %v2940 = vsel %vm2232, %v2137, 0.0
  %v2941 = vrot.slane %v2940, 4
  %v2942 = vadd.f32 %v2940, %v2941
  %v2943 = vrot.slane %v2942, 2
  %v2944 = vadd.f32 %v2942, %v2943
  %v2945 = vrot.slane %v2944, 1
  %v2946 = vadd.f32 %v2944, %v2945
  %v2947 = vsel %vm2232, %v2138, 0.0
  %v2948 = vrot.slane %v2947, 4
  %v2949 = vadd.f32 %v2947, %v2948
  %v2950 = vrot.slane %v2949, 2
  %v2951 = vadd.f32 %v2949, %v2950
  %v2952 = vrot.slane %v2951, 1
  %v2953 = vadd.f32 %v2951, %v2952
  %v2954 = vsel %vm2232, %v2139, 0.0
  %v2955 = vrot.slane %v2954, 4
  %v2956 = vadd.f32 %v2954, %v2955
  %v2957 = vrot.slane %v2956, 2
  %v2958 = vadd.f32 %v2956, %v2957
  %v2959 = vrot.slane %v2958, 1
  %v2960 = vadd.f32 %v2958, %v2959
  %v2961 = vsel %vm2232, %v2140, 0.0
  %v2962 = vrot.slane %v2961, 4
  %v2963 = vadd.f32 %v2961, %v2962
  %v2964 = vrot.slane %v2963, 2
  %v2965 = vadd.f32 %v2963, %v2964
  %v2966 = vrot.slane %v2965, 1
  %v2967 = vadd.f32 %v2965, %v2966
  %v2968 = vsel %vm2232, %v2141, 0.0
  %v2969 = vrot.slane %v2968, 4
  %v2970 = vadd.f32 %v2968, %v2969
  %v2971 = vrot.slane %v2970, 2
  %v2972 = vadd.f32 %v2970, %v2971
  %v2973 = vrot.slane %v2972, 1
  %v2974 = vadd.f32 %v2972, %v2973
  %v2975 = vsel %vm2232, %v2142, 0.0
  %v2976 = vrot.slane %v2975, 4
  %v2977 = vadd.f32 %v2975, %v2976
  %v2978 = vrot.slane %v2977, 2
  %v2979 = vadd.f32 %v2977, %v2978
  %v2980 = vrot.slane %v2979, 1
  %v2981 = vadd.f32 %v2979, %v2980
  %v2982 = vsel %vm2232, %v2143, 0.0
  %v2983 = vrot.slane %v2982, 4
  %v2984 = vadd.f32 %v2982, %v2983
  %v2985 = vrot.slane %v2984, 2
  %v2986 = vadd.f32 %v2984, %v2985
  %v2987 = vrot.slane %v2986, 1
  %v2988 = vadd.f32 %v2986, %v2987
  %v2989 = vsel %vm2232, %v2144, 0.0
  %v2990 = vrot.slane %v2989, 4
  %v2991 = vadd.f32 %v2989, %v2990
  %v2992 = vrot.slane %v2991, 2
  %v2993 = vadd.f32 %v2991, %v2992
  %v2994 = vrot.slane %v2993, 1
  %v2995 = vadd.f32 %v2993, %v2994
  %v2996 = vsel %vm2232, %v2145, 0.0
  %v2997 = vrot.slane %v2996, 4
  %v2998 = vadd.f32 %v2996, %v2997
  %v2999 = vrot.slane %v2998, 2
  %v3000 = vadd.f32 %v2998, %v2999
  %v3001 = vrot.slane %v3000, 1
  %v3002 = vadd.f32 %v3000, %v3001
  %v3003 = vsel %vm2232, %v2146, 0.0
  %v3004 = vrot.slane %v3003, 4
  %v3005 = vadd.f32 %v3003, %v3004
  %v3006 = vrot.slane %v3005, 2
  %v3007 = vadd.f32 %v3005, %v3006
  %v3008 = vrot.slane %v3007, 1
  %v3009 = vadd.f32 %v3007, %v3008
  %v3010 = vsel %vm2232, %v2147, 0.0
  %v3011 = vrot.slane %v3010, 4
  %v3012 = vadd.f32 %v3010, %v3011
  %v3013 = vrot.slane %v3012, 2
  %v3014 = vadd.f32 %v3012, %v3013
  %v3015 = vrot.slane %v3014, 1
  %v3016 = vadd.f32 %v3014, %v3015
  %v3017 = vsel %vm2232, %v2148, 0.0
  %v3018 = vrot.slane %v3017, 4
  %v3019 = vadd.f32 %v3017, %v3018
  %v3020 = vrot.slane %v3019, 2
  %v3021 = vadd.f32 %v3019, %v3020
  %v3022 = vrot.slane %v3021, 1
  %v3023 = vadd.f32 %v3021, %v3022
  %v3024 = vsel %vm2232, %v2149, 0.0
  %v3025 = vrot.slane %v3024, 4
  %v3026 = vadd.f32 %v3024, %v3025
  %v3027 = vrot.slane %v3026, 2
  %v3028 = vadd.f32 %v3026, %v3027
  %v3029 = vrot.slane %v3028, 1
  %v3030 = vadd.f32 %v3028, %v3029
  %v3031 = vsel %vm2232, %v2150, 0.0
  %v3032 = vrot.slane %v3031, 4
  %v3033 = vadd.f32 %v3031, %v3032
  %v3034 = vrot.slane %v3033, 2
  %v3035 = vadd.f32 %v3033, %v3034
  %v3036 = vrot.slane %v3035, 1
  %v3037 = vadd.f32 %v3035, %v3036
  %v3038 = vsel %vm2232, %v2151, 0.0
  %v3039 = vrot.slane %v3038, 4
  %v3040 = vadd.f32 %v3038, %v3039
  %v3041 = vrot.slane %v3040, 2
  %v3042 = vadd.f32 %v3040, %v3041
  %v3043 = vrot.slane %v3042, 1
  %v3044 = vadd.f32 %v3042, %v3043
  %v3045 = vsel %vm2232, %v2152, 0.0
  %v3046 = vrot.slane %v3045, 4
  %v3047 = vadd.f32 %v3045, %v3046
  %v3048 = vrot.slane %v3047, 2
  %v3049 = vadd.f32 %v3047, %v3048
  %v3050 = vrot.slane %v3049, 1
  %v3051 = vadd.f32 %v3049, %v3050
  %v3052 = vsel %vm2232, %v2153, 0.0
  %v3053 = vrot.slane %v3052, 4
  %v3054 = vadd.f32 %v3052, %v3053
  %v3055 = vrot.slane %v3054, 2
  %v3056 = vadd.f32 %v3054, %v3055
  %v3057 = vrot.slane %v3056, 1
  %v3058 = vadd.f32 %v3056, %v3057
  %v3059 = vsel %vm2232, %v2154, 0.0
  %v3060 = vrot.slane %v3059, 4
  %v3061 = vadd.f32 %v3059, %v3060
  %v3062 = vrot.slane %v3061, 2
  %v3063 = vadd.f32 %v3061, %v3062
  %v3064 = vrot.slane %v3063, 1
  %v3065 = vadd.f32 %v3063, %v3064
  %v3066 = vsel %vm2232, %v2155, 0.0
  %v3067 = vrot.slane %v3066, 4
  %v3068 = vadd.f32 %v3066, %v3067
  %v3069 = vrot.slane %v3068, 2
  %v3070 = vadd.f32 %v3068, %v3069
  %v3071 = vrot.slane %v3070, 1
  %v3072 = vadd.f32 %v3070, %v3071
  %v3073 = vsel %vm2232, %v2156, 0.0
  %v3074 = vrot.slane %v3073, 4
  %v3075 = vadd.f32 %v3073, %v3074
  %v3076 = vrot.slane %v3075, 2
  %v3077 = vadd.f32 %v3075, %v3076
  %v3078 = vrot.slane %v3077, 1
  %v3079 = vadd.f32 %v3077, %v3078
  %v3080 = vsel %vm2232, %v2157, 0.0
  %v3081 = vrot.slane %v3080, 4
  %v3082 = vadd.f32 %v3080, %v3081
  %v3083 = vrot.slane %v3082, 2
  %v3084 = vadd.f32 %v3082, %v3083
  %v3085 = vrot.slane %v3084, 1
  %v3086 = vadd.f32 %v3084, %v3085
  %v3087 = vsel %vm2232, %v2158, 0.0
  %v3088 = vrot.slane %v3087, 4
  %v3089 = vadd.f32 %v3087, %v3088
  %v3090 = vrot.slane %v3089, 2
  %v3091 = vadd.f32 %v3089, %v3090
  %v3092 = vrot.slane %v3091, 1
  %v3093 = vadd.f32 %v3091, %v3092
  %v3094 = vsel %vm2232, %v2159, 0.0
  %v3095 = vrot.slane %v3094, 4
  %v3096 = vadd.f32 %v3094, %v3095
  %v3097 = vrot.slane %v3096, 2
  %v3098 = vadd.f32 %v3096, %v3097
  %v3099 = vrot.slane %v3098, 1
  %v3100 = vadd.f32 %v3098, %v3099
  %v3101 = vsel %vm2232, %v2160, 0.0
  %v3102 = vrot.slane %v3101, 4
  %v3103 = vadd.f32 %v3101, %v3102
  %v3104 = vrot.slane %v3103, 2
  %v3105 = vadd.f32 %v3103, %v3104
  %v3106 = vrot.slane %v3105, 1
  %v3107 = vadd.f32 %v3105, %v3106
  %v3108 = vsel %vm2232, %v2161, 0.0
  %v3109 = vrot.slane %v3108, 4
  %v3110 = vadd.f32 %v3108, %v3109
  %v3111 = vrot.slane %v3110, 2
  %v3112 = vadd.f32 %v3110, %v3111
  %v3113 = vrot.slane %v3112, 1
  %v3114 = vadd.f32 %v3112, %v3113
  %v3115 = vsel %vm2232, %v2162, 0.0
  %v3116 = vrot.slane %v3115, 4
  %v3117 = vadd.f32 %v3115, %v3116
  %v3118 = vrot.slane %v3117, 2
  %v3119 = vadd.f32 %v3117, %v3118
  %v3120 = vrot.slane %v3119, 1
  %v3121 = vadd.f32 %v3119, %v3120
  %v3122 = vsel %vm2232, %v2163, 0.0
  %v3123 = vrot.slane %v3122, 4
  %v3124 = vadd.f32 %v3122, %v3123
  %v3125 = vrot.slane %v3124, 2
  %v3126 = vadd.f32 %v3124, %v3125
  %v3127 = vrot.slane %v3126, 1
  %v3128 = vadd.f32 %v3126, %v3127
  %v3129 = vsel %vm2232, %v2164, 0.0
  %v3130 = vrot.slane %v3129, 4
  %v3131 = vadd.f32 %v3129, %v3130
  %v3132 = vrot.slane %v3131, 2
  %v3133 = vadd.f32 %v3131, %v3132
  %v3134 = vrot.slane %v3133, 1
  %v3135 = vadd.f32 %v3133, %v3134
  %v3136 = vsel %vm2232, %v2165, 0.0
  %v3137 = vrot.slane %v3136, 4
  %v3138 = vadd.f32 %v3136, %v3137
  %v3139 = vrot.slane %v3138, 2
  %v3140 = vadd.f32 %v3138, %v3139
  %v3141 = vrot.slane %v3140, 1
  %v3142 = vadd.f32 %v3140, %v3141
  %v3143 = vsel %vm2232, %v2166, 0.0
  %v3144 = vrot.slane %v3143, 4
  %v3145 = vadd.f32 %v3143, %v3144
  %v3146 = vrot.slane %v3145, 2
  %v3147 = vadd.f32 %v3145, %v3146
  %v3148 = vrot.slane %v3147, 1
  %v3149 = vadd.f32 %v3147, %v3148
  %v3150 = vsel %vm2232, %v2167, 0.0
  %v3151 = vrot.slane %v3150, 4
  %v3152 = vadd.f32 %v3150, %v3151
  %v3153 = vrot.slane %v3152, 2
  %v3154 = vadd.f32 %v3152, %v3153
  %v3155 = vrot.slane %v3154, 1
  %v3156 = vadd.f32 %v3154, %v3155
  %v3157 = vsel %vm2232, %v2168, 0.0
  %v3158 = vrot.slane %v3157, 4
  %v3159 = vadd.f32 %v3157, %v3158
  %v3160 = vrot.slane %v3159, 2
  %v3161 = vadd.f32 %v3159, %v3160
  %v3162 = vrot.slane %v3161, 1
  %v3163 = vadd.f32 %v3161, %v3162
  %v3164 = vsel %vm2232, %v2169, 0.0
  %v3165 = vrot.slane %v3164, 4
  %v3166 = vadd.f32 %v3164, %v3165
  %v3167 = vrot.slane %v3166, 2
  %v3168 = vadd.f32 %v3166, %v3167
  %v3169 = vrot.slane %v3168, 1
  %v3170 = vadd.f32 %v3168, %v3169
  %v3171 = vsel %vm2232, %v2170, 0.0
  %v3172 = vrot.slane %v3171, 4
  %v3173 = vadd.f32 %v3171, %v3172
  %v3174 = vrot.slane %v3173, 2
  %v3175 = vadd.f32 %v3173, %v3174
  %v3176 = vrot.slane %v3175, 1
  %v3177 = vadd.f32 %v3175, %v3176
  %v3178 = vsel %vm2232, %v2171, 0.0
  %v3179 = vrot.slane %v3178, 4
  %v3180 = vadd.f32 %v3178, %v3179
  %v3181 = vrot.slane %v3180, 2
  %v3182 = vadd.f32 %v3180, %v3181
  %v3183 = vrot.slane %v3182, 1
  %v3184 = vadd.f32 %v3182, %v3183
  %v3185 = vsel %vm2232, %v2172, 0.0
  %v3186 = vrot.slane %v3185, 4
  %v3187 = vadd.f32 %v3185, %v3186
  %v3188 = vrot.slane %v3187, 2
  %v3189 = vadd.f32 %v3187, %v3188
  %v3190 = vrot.slane %v3189, 1
  %v3191 = vadd.f32 %v3189, %v3190
  %v3192 = vsel %vm2232, %v2173, 0.0
  %v3193 = vrot.slane %v3192, 4
  %v3194 = vadd.f32 %v3192, %v3193
  %v3195 = vrot.slane %v3194, 2
  %v3196 = vadd.f32 %v3194, %v3195
  %v3197 = vrot.slane %v3196, 1
  %v3198 = vadd.f32 %v3196, %v3197
  %v3199 = vsel %vm2232, %v2174, 0.0
  %v3200 = vrot.slane %v3199, 4
  %v3201 = vadd.f32 %v3199, %v3200
  %v3202 = vrot.slane %v3201, 2
  %v3203 = vadd.f32 %v3201, %v3202
  %v3204 = vrot.slane %v3203, 1
  %v3205 = vadd.f32 %v3203, %v3204
  %v3206 = vsel %vm2232, %v2175, 0.0
  %v3207 = vrot.slane %v3206, 4
  %v3208 = vadd.f32 %v3206, %v3207
  %v3209 = vrot.slane %v3208, 2
  %v3210 = vadd.f32 %v3208, %v3209
  %v3211 = vrot.slane %v3210, 1
  %v3212 = vadd.f32 %v3210, %v3211
  %v3213 = vsel %vm2232, %v2176, 0.0
  %v3214 = vrot.slane %v3213, 4
  %v3215 = vadd.f32 %v3213, %v3214
  %v3216 = vrot.slane %v3215, 2
  %v3217 = vadd.f32 %v3215, %v3216
  %v3218 = vrot.slane %v3217, 1
  %v3219 = vadd.f32 %v3217, %v3218
  %v3220 = vsel %vm2232, %v2177, 0.0
  %v3221 = vrot.slane %v3220, 4
  %v3222 = vadd.f32 %v3220, %v3221
  %v3223 = vrot.slane %v3222, 2
  %v3224 = vadd.f32 %v3222, %v3223
  %v3225 = vrot.slane %v3224, 1
  %v3226 = vadd.f32 %v3224, %v3225
  %v3227 = vsel %vm2232, %v2178, 0.0
  %v3228 = vrot.slane %v3227, 4
  %v3229 = vadd.f32 %v3227, %v3228
  %v3230 = vrot.slane %v3229, 2
  %v3231 = vadd.f32 %v3229, %v3230
  %v3232 = vrot.slane %v3231, 1
  %v3233 = vadd.f32 %v3231, %v3232
  %v3234 = vsel %vm2232, %v2179, 0.0
  %v3235 = vrot.slane %v3234, 4
  %v3236 = vadd.f32 %v3234, %v3235
  %v3237 = vrot.slane %v3236, 2
  %v3238 = vadd.f32 %v3236, %v3237
  %v3239 = vrot.slane %v3238, 1
  %v3240 = vadd.f32 %v3238, %v3239
  %v3241 = vsel %vm2232, %v2180, 0.0
  %v3242 = vrot.slane %v3241, 4
  %v3243 = vadd.f32 %v3241, %v3242
  %v3244 = vrot.slane %v3243, 2
  %v3245 = vadd.f32 %v3243, %v3244
  %v3246 = vrot.slane %v3245, 1
  %v3247 = vadd.f32 %v3245, %v3246
  %v3248 = vsel %vm2232, %v2181, 0.0
  %v3249 = vrot.slane %v3248, 4
  %v3250 = vadd.f32 %v3248, %v3249
  %v3251 = vrot.slane %v3250, 2
  %v3252 = vadd.f32 %v3250, %v3251
  %v3253 = vrot.slane %v3252, 1
  %v3254 = vadd.f32 %v3252, %v3253
  %v3255 = vsel %vm2232, %v2182, 0.0
  %v3256 = vrot.slane %v3255, 4
  %v3257 = vadd.f32 %v3255, %v3256
  %v3258 = vrot.slane %v3257, 2
  %v3259 = vadd.f32 %v3257, %v3258
  %v3260 = vrot.slane %v3259, 1
  %v3261 = vadd.f32 %v3259, %v3260
  %v3262 = vsel %vm2232, %v2183, 0.0
  %v3263 = vrot.slane %v3262, 4
  %v3264 = vadd.f32 %v3262, %v3263
  %v3265 = vrot.slane %v3264, 2
  %v3266 = vadd.f32 %v3264, %v3265
  %v3267 = vrot.slane %v3266, 1
  %v3268 = vadd.f32 %v3266, %v3267
  %v3269 = vsel %vm2232, %v2184, 0.0
  %v3270 = vrot.slane %v3269, 4
  %v3271 = vadd.f32 %v3269, %v3270
  %v3272 = vrot.slane %v3271, 2
  %v3273 = vadd.f32 %v3271, %v3272
  %v3274 = vrot.slane %v3273, 1
  %v3275 = vadd.f32 %v3273, %v3274
  %v3276 = vsel %vm2232, %v2185, 0.0
  %v3277 = vrot.slane %v3276, 4
  %v3278 = vadd.f32 %v3276, %v3277
  %v3279 = vrot.slane %v3278, 2
  %v3280 = vadd.f32 %v3278, %v3279
  %v3281 = vrot.slane %v3280, 1
  %v3282 = vadd.f32 %v3280, %v3281
  %v3283 = vsel %vm2232, %v2186, 0.0
  %v3284 = vrot.slane %v3283, 4
  %v3285 = vadd.f32 %v3283, %v3284
  %v3286 = vrot.slane %v3285, 2
  %v3287 = vadd.f32 %v3285, %v3286
  %v3288 = vrot.slane %v3287, 1
  %v3289 = vadd.f32 %v3287, %v3288
  %v3290 = vsel %vm2232, %v2187, 0.0
  %v3291 = vrot.slane %v3290, 4
  %v3292 = vadd.f32 %v3290, %v3291
  %v3293 = vrot.slane %v3292, 2
  %v3294 = vadd.f32 %v3292, %v3293
  %v3295 = vrot.slane %v3294, 1
  %v3296 = vadd.f32 %v3294, %v3295
  %v3297 = vsel %vm2232, %v2188, 0.0
  %v3298 = vrot.slane %v3297, 4
  %v3299 = vadd.f32 %v3297, %v3298
  %v3300 = vrot.slane %v3299, 2
  %v3301 = vadd.f32 %v3299, %v3300
  %v3302 = vrot.slane %v3301, 1
  %v3303 = vadd.f32 %v3301, %v3302
  %v3304 = vsel %vm2232, %v2189, 0.0
  %v3305 = vrot.slane %v3304, 4
  %v3306 = vadd.f32 %v3304, %v3305
  %v3307 = vrot.slane %v3306, 2
  %v3308 = vadd.f32 %v3306, %v3307
  %v3309 = vrot.slane %v3308, 1
  %v3310 = vadd.f32 %v3308, %v3309
  %v3311 = vsel %vm2232, %v2190, 0.0
  %v3312 = vrot.slane %v3311, 4
  %v3313 = vadd.f32 %v3311, %v3312
  %v3314 = vrot.slane %v3313, 2
  %v3315 = vadd.f32 %v3313, %v3314
  %v3316 = vrot.slane %v3315, 1
  %v3317 = vadd.f32 %v3315, %v3316
  %v3318 = vsel %vm2232, %v2191, 0.0
  %v3319 = vrot.slane %v3318, 4
  %v3320 = vadd.f32 %v3318, %v3319
  %v3321 = vrot.slane %v3320, 2
  %v3322 = vadd.f32 %v3320, %v3321
  %v3323 = vrot.slane %v3322, 1
  %v3324 = vadd.f32 %v3322, %v3323
  %v3325 = vsel %vm2232, %v2192, 0.0
  %v3326 = vrot.slane %v3325, 4
  %v3327 = vadd.f32 %v3325, %v3326
  %v3328 = vrot.slane %v3327, 2
  %v3329 = vadd.f32 %v3327, %v3328
  %v3330 = vrot.slane %v3329, 1
  %v3331 = vadd.f32 %v3329, %v3330
  %v3332 = vsel %vm2232, %v2193, 0.0
  %v3333 = vrot.slane %v3332, 4
  %v3334 = vadd.f32 %v3332, %v3333
  %v3335 = vrot.slane %v3334, 2
  %v3336 = vadd.f32 %v3334, %v3335
  %v3337 = vrot.slane %v3336, 1
  %v3338 = vadd.f32 %v3336, %v3337
  %v3339 = vsel %vm2232, %v2194, 0.0
  %v3340 = vrot.slane %v3339, 4
  %v3341 = vadd.f32 %v3339, %v3340
  %v3342 = vrot.slane %v3341, 2
  %v3343 = vadd.f32 %v3341, %v3342
  %v3344 = vrot.slane %v3343, 1
  %v3345 = vadd.f32 %v3343, %v3344
  %v3346 = vsel %vm2232, %v2195, 0.0
  %v3347 = vrot.slane %v3346, 4
  %v3348 = vadd.f32 %v3346, %v3347
  %v3349 = vrot.slane %v3348, 2
  %v3350 = vadd.f32 %v3348, %v3349
  %v3351 = vrot.slane %v3350, 1
  %v3352 = vadd.f32 %v3350, %v3351
  %v3353 = vsel %vm2232, %v2196, 0.0
  %v3354 = vrot.slane %v3353, 4
  %v3355 = vadd.f32 %v3353, %v3354
  %v3356 = vrot.slane %v3355, 2
  %v3357 = vadd.f32 %v3355, %v3356
  %v3358 = vrot.slane %v3357, 1
  %v3359 = vadd.f32 %v3357, %v3358
  %v3360 = vsel %vm2232, %v2197, 0.0
  %v3361 = vrot.slane %v3360, 4
  %v3362 = vadd.f32 %v3360, %v3361
  %v3363 = vrot.slane %v3362, 2
  %v3364 = vadd.f32 %v3362, %v3363
  %v3365 = vrot.slane %v3364, 1
  %v3366 = vadd.f32 %v3364, %v3365
  %v3367 = vsel %vm2232, %v2198, 0.0
  %v3368 = vrot.slane %v3367, 4
  %v3369 = vadd.f32 %v3367, %v3368
  %v3370 = vrot.slane %v3369, 2
  %v3371 = vadd.f32 %v3369, %v3370
  %v3372 = vrot.slane %v3371, 1
  %v3373 = vadd.f32 %v3371, %v3372
  %v3374 = vsel %vm2232, %v2199, 0.0
  %v3375 = vrot.slane %v3374, 4
  %v3376 = vadd.f32 %v3374, %v3375
  %v3377 = vrot.slane %v3376, 2
  %v3378 = vadd.f32 %v3376, %v3377
  %v3379 = vrot.slane %v3378, 1
  %v3380 = vadd.f32 %v3378, %v3379
  %v3381 = vsel %vm2232, %v2200, 0.0
  %v3382 = vrot.slane %v3381, 4
  %v3383 = vadd.f32 %v3381, %v3382
  %v3384 = vrot.slane %v3383, 2
  %v3385 = vadd.f32 %v3383, %v3384
  %v3386 = vrot.slane %v3385, 1
  %v3387 = vadd.f32 %v3385, %v3386
  %v3388 = vsel %vm2232, %v2201, 0.0
  %v3389 = vrot.slane %v3388, 4
  %v3390 = vadd.f32 %v3388, %v3389
  %v3391 = vrot.slane %v3390, 2
  %v3392 = vadd.f32 %v3390, %v3391
  %v3393 = vrot.slane %v3392, 1
  %v3394 = vadd.f32 %v3392, %v3393
  %v3395 = vsel %vm2232, %v2202, 0.0
  %v3396 = vrot.slane %v3395, 4
  %v3397 = vadd.f32 %v3395, %v3396
  %v3398 = vrot.slane %v3397, 2
  %v3399 = vadd.f32 %v3397, %v3398
  %v3400 = vrot.slane %v3399, 1
  %v3401 = vadd.f32 %v3399, %v3400
  %v3402 = vsel %vm2232, %v2203, 0.0
  %v3403 = vrot.slane %v3402, 4
  %v3404 = vadd.f32 %v3402, %v3403
  %v3405 = vrot.slane %v3404, 2
  %v3406 = vadd.f32 %v3404, %v3405
  %v3407 = vrot.slane %v3406, 1
  %v3408 = vadd.f32 %v3406, %v3407
  %v3409 = vsel %vm2232, %v2204, 0.0
  %v3410 = vrot.slane %v3409, 4
  %v3411 = vadd.f32 %v3409, %v3410
  %v3412 = vrot.slane %v3411, 2
  %v3413 = vadd.f32 %v3411, %v3412
  %v3414 = vrot.slane %v3413, 1
  %v3415 = vadd.f32 %v3413, %v3414
  %v3416 = vsel %vm2232, %v2205, 0.0
  %v3417 = vrot.slane %v3416, 4
  %v3418 = vadd.f32 %v3416, %v3417
  %v3419 = vrot.slane %v3418, 2
  %v3420 = vadd.f32 %v3418, %v3419
  %v3421 = vrot.slane %v3420, 1
  %v3422 = vadd.f32 %v3420, %v3421
  %v3423 = vsel %vm2232, %v2206, 0.0
  %v3424 = vrot.slane %v3423, 4
  %v3425 = vadd.f32 %v3423, %v3424
  %v3426 = vrot.slane %v3425, 2
  %v3427 = vadd.f32 %v3425, %v3426
  %v3428 = vrot.slane %v3427, 1
  %v3429 = vadd.f32 %v3427, %v3428
  %v3430 = vsel %vm2232, %v2207, 0.0
  %v3431 = vrot.slane %v3430, 4
  %v3432 = vadd.f32 %v3430, %v3431
  %v3433 = vrot.slane %v3432, 2
  %v3434 = vadd.f32 %v3432, %v3433
  %v3435 = vrot.slane %v3434, 1
  %v3436 = vadd.f32 %v3434, %v3435
  %v3437 = vsel %vm2232, %v2208, 0.0
  %v3438 = vrot.slane %v3437, 4
  %v3439 = vadd.f32 %v3437, %v3438
  %v3440 = vrot.slane %v3439, 2
  %v3441 = vadd.f32 %v3439, %v3440
  %v3442 = vrot.slane %v3441, 1
  %v3443 = vadd.f32 %v3441, %v3442
  %v3444 = vsel %vm2232, %v2209, 0.0
  %v3445 = vrot.slane %v3444, 4
  %v3446 = vadd.f32 %v3444, %v3445
  %v3447 = vrot.slane %v3446, 2
  %v3448 = vadd.f32 %v3446, %v3447
  %v3449 = vrot.slane %v3448, 1
  %v3450 = vadd.f32 %v3448, %v3449
  %v3451 = vsel %vm2232, %v2210, 0.0
  %v3452 = vrot.slane %v3451, 4
  %v3453 = vadd.f32 %v3451, %v3452
  %v3454 = vrot.slane %v3453, 2
  %v3455 = vadd.f32 %v3453, %v3454
  %v3456 = vrot.slane %v3455, 1
  %v3457 = vadd.f32 %v3455, %v3456
  %v3458 = vsel %vm2232, %v2211, 0.0
  %v3459 = vrot.slane %v3458, 4
  %v3460 = vadd.f32 %v3458, %v3459
  %v3461 = vrot.slane %v3460, 2
  %v3462 = vadd.f32 %v3460, %v3461
  %v3463 = vrot.slane %v3462, 1
  %v3464 = vadd.f32 %v3462, %v3463
  %v3465 = vsel %vm2232, %v2212, 0.0
  %v3466 = vrot.slane %v3465, 4
  %v3467 = vadd.f32 %v3465, %v3466
  %v3468 = vrot.slane %v3467, 2
  %v3469 = vadd.f32 %v3467, %v3468
  %v3470 = vrot.slane %v3469, 1
  %v3471 = vadd.f32 %v3469, %v3470
  %v3472 = vsel %vm2232, %v2213, 0.0
  %v3473 = vrot.slane %v3472, 4
  %v3474 = vadd.f32 %v3472, %v3473
  %v3475 = vrot.slane %v3474, 2
  %v3476 = vadd.f32 %v3474, %v3475
  %v3477 = vrot.slane %v3476, 1
  %v3478 = vadd.f32 %v3476, %v3477
  %v3479 = vsel %vm2232, %v2214, 0.0
  %v3480 = vrot.slane %v3479, 4
  %v3481 = vadd.f32 %v3479, %v3480
  %v3482 = vrot.slane %v3481, 2
  %v3483 = vadd.f32 %v3481, %v3482
  %v3484 = vrot.slane %v3483, 1
  %v3485 = vadd.f32 %v3483, %v3484
  %v3486 = vsel %vm2232, %v2215, 0.0
  %v3487 = vrot.slane %v3486, 4
  %v3488 = vadd.f32 %v3486, %v3487
  %v3489 = vrot.slane %v3488, 2
  %v3490 = vadd.f32 %v3488, %v3489
  %v3491 = vrot.slane %v3490, 1
  %v3492 = vadd.f32 %v3490, %v3491
  %v3493 = vsel %vm2232, %v2216, 0.0
  %v3494 = vrot.slane %v3493, 4
  %v3495 = vadd.f32 %v3493, %v3494
  %v3496 = vrot.slane %v3495, 2
  %v3497 = vadd.f32 %v3495, %v3496
  %v3498 = vrot.slane %v3497, 1
  %v3499 = vadd.f32 %v3497, %v3498
  %v3500 = vsel %vm2232, %v2217, 0.0
  %v3501 = vrot.slane %v3500, 4
  %v3502 = vadd.f32 %v3500, %v3501
  %v3503 = vrot.slane %v3502, 2
  %v3504 = vadd.f32 %v3502, %v3503
  %v3505 = vrot.slane %v3504, 1
  %v3506 = vadd.f32 %v3504, %v3505
  %v3507 = vsel %vm2232, %v2218, 0.0
  %v3508 = vrot.slane %v3507, 4
  %v3509 = vadd.f32 %v3507, %v3508
  %v3510 = vrot.slane %v3509, 2
  %v3511 = vadd.f32 %v3509, %v3510
  %v3512 = vrot.slane %v3511, 1
  %v3513 = vadd.f32 %v3511, %v3512
  %v3514 = vsel %vm2232, %v2219, 0.0
  %v3515 = vrot.slane %v3514, 4
  %v3516 = vadd.f32 %v3514, %v3515
  %v3517 = vrot.slane %v3516, 2
  %v3518 = vadd.f32 %v3516, %v3517
  %v3519 = vrot.slane %v3518, 1
  %v3520 = vadd.f32 %v3518, %v3519
  %v3521 = vsel %vm2232, %v2220, 0.0
  %v3522 = vrot.slane %v3521, 4
  %v3523 = vadd.f32 %v3521, %v3522
  %v3524 = vrot.slane %v3523, 2
  %v3525 = vadd.f32 %v3523, %v3524
  %v3526 = vrot.slane %v3525, 1
  %v3527 = vadd.f32 %v3525, %v3526
  %v3528 = vsel %vm2232, %v2221, 0.0
  %v3529 = vrot.slane %v3528, 4
  %v3530 = vadd.f32 %v3528, %v3529
  %v3531 = vrot.slane %v3530, 2
  %v3532 = vadd.f32 %v3530, %v3531
  %v3533 = vrot.slane %v3532, 1
  %v3534 = vadd.f32 %v3532, %v3533
  %v3535 = vsel %vm2232, %v2222, 0.0
  %v3536 = vrot.slane %v3535, 4
  %v3537 = vadd.f32 %v3535, %v3536
  %v3538 = vrot.slane %v3537, 2
  %v3539 = vadd.f32 %v3537, %v3538
  %v3540 = vrot.slane %v3539, 1
  %v3541 = vadd.f32 %v3539, %v3540
  %v3542 = vsel %vm2232, %v2223, 0.0
  %v3543 = vrot.slane %v3542, 4
  %v3544 = vadd.f32 %v3542, %v3543
  %v3545 = vrot.slane %v3544, 2
  %v3546 = vadd.f32 %v3544, %v3545
  %v3547 = vrot.slane %v3546, 1
  %v3548 = vadd.f32 %v3546, %v3547
  %v3549 = vsel %vm2232, %v2224, 0.0
  %v3550 = vrot.slane %v3549, 4
  %v3551 = vadd.f32 %v3549, %v3550
  %v3552 = vrot.slane %v3551, 2
  %v3553 = vadd.f32 %v3551, %v3552
  %v3554 = vrot.slane %v3553, 1
  %v3555 = vadd.f32 %v3553, %v3554
  %v3556 = vsel %vm2232, %v2225, 0.0
  %v3557 = vrot.slane %v3556, 4
  %v3558 = vadd.f32 %v3556, %v3557
  %v3559 = vrot.slane %v3558, 2
  %v3560 = vadd.f32 %v3558, %v3559
  %v3561 = vrot.slane %v3560, 1
  %v3562 = vadd.f32 %v3560, %v3561
  %v3563 = vsel %vm2232, %v2226, 0.0
  %v3564 = vrot.slane %v3563, 4
  %v3565 = vadd.f32 %v3563, %v3564
  %v3566 = vrot.slane %v3565, 2
  %v3567 = vadd.f32 %v3565, %v3566
  %v3568 = vrot.slane %v3567, 1
  %v3569 = vadd.f32 %v3567, %v3568
  %v3570 = vsel %vm2232, %v2227, 0.0
  %v3571 = vrot.slane %v3570, 4
  %v3572 = vadd.f32 %v3570, %v3571
  %v3573 = vrot.slane %v3572, 2
  %v3574 = vadd.f32 %v3572, %v3573
  %v3575 = vrot.slane %v3574, 1
  %v3576 = vadd.f32 %v3574, %v3575
  %v3577 = vsel %vm2232, %v2228, 0.0
  %v3578 = vrot.slane %v3577, 4
  %v3579 = vadd.f32 %v3577, %v3578
  %v3580 = vrot.slane %v3579, 2
  %v3581 = vadd.f32 %v3579, %v3580
  %v3582 = vrot.slane %v3581, 1
  %v3583 = vadd.f32 %v3581, %v3582
  %v3584 = vsel %vm2232, %v2229, 0.0
  %v3585 = vrot.slane %v3584, 4
  %v3586 = vadd.f32 %v3584, %v3585
  %v3587 = vrot.slane %v3586, 2
  %v3588 = vadd.f32 %v3586, %v3587
  %v3589 = vrot.slane %v3588, 1
  %v3590 = vadd.f32 %v3588, %v3589
  %v3591 = vsel %vm2232, %v2230, 0.0
  %v3592 = vrot.slane %v3591, 4
  %v3593 = vadd.f32 %v3591, %v3592
  %v3594 = vrot.slane %v3593, 2
  %v3595 = vadd.f32 %v3593, %v3594
  %v3596 = vrot.slane %v3595, 1
  %v3597 = vadd.f32 %v3595, %v3596
  %v3598 = vsel %vm2232, %v2231, 0.0
  %v3599 = vrot.slane %v3598, 4
  %v3600 = vadd.f32 %v3598, %v3599
  %v3601 = vrot.slane %v3600, 2
  %v3602 = vadd.f32 %v3600, %v3601
  %v3603 = vrot.slane %v3602, 1
  %v3604 = vadd.f32 %v3602, %v3603
  %vm3801 = vcmask 1041409
  %v3802 = vsel %vm3801, %v2246, %v2239
  %vm3803 = vcmask 1042434
  %v3804 = vsel %vm3803, %v2253, %v3802
  %vm3805 = vcmask 1043459
  %v3806 = vsel %vm3805, %v2260, %v3804
  %vm3807 = vcmask 1044484
  %v3808 = vsel %vm3807, %v2267, %v3806
  %vm3809 = vcmask 1045509
  %v3810 = vsel %vm3809, %v2274, %v3808
  %vm3811 = vcmask 1046534
  %v3812 = vsel %vm3811, %v2281, %v3810
  %vm3813 = vcmask 1047559
  %v3814 = vsel %vm3813, %v2288, %v3812
  %v3815 = vsel %vm3801, %v2302, %v2295
  %v3816 = vsel %vm3803, %v2309, %v3815
  %v3817 = vsel %vm3805, %v2316, %v3816
  %v3818 = vsel %vm3807, %v2323, %v3817
  %v3819 = vsel %vm3809, %v2330, %v3818
  %v3820 = vsel %vm3811, %v2337, %v3819
  %v3821 = vsel %vm3813, %v2344, %v3820
  %v3822 = vsel %vm3801, %v2358, %v2351
  %v3823 = vsel %vm3803, %v2365, %v3822
  %v3824 = vsel %vm3805, %v2372, %v3823
  %v3825 = vsel %vm3807, %v2379, %v3824
  %v3826 = vsel %vm3809, %v2386, %v3825
  %v3827 = vsel %vm3811, %v2393, %v3826
  %v3828 = vsel %vm3813, %v2400, %v3827
  %v3829 = vsel %vm3801, %v2414, %v2407
  %v3830 = vsel %vm3803, %v2421, %v3829
  %v3831 = vsel %vm3805, %v2428, %v3830
  %v3832 = vsel %vm3807, %v2435, %v3831
  %v3833 = vsel %vm3809, %v2442, %v3832
  %v3834 = vsel %vm3811, %v2449, %v3833
  %v3835 = vsel %vm3813, %v2456, %v3834
  %v3836 = vsel %vm3801, %v2470, %v2463
  %v3837 = vsel %vm3803, %v2477, %v3836
  %v3838 = vsel %vm3805, %v2484, %v3837
  %v3839 = vsel %vm3807, %v2491, %v3838
  %v3840 = vsel %vm3809, %v2498, %v3839
  %v3841 = vsel %vm3811, %v2505, %v3840
  %v3842 = vsel %vm3813, %v2512, %v3841
  %v3843 = vsel %vm3801, %v2526, %v2519
  %v3844 = vsel %vm3803, %v2533, %v3843
  %v3845 = vsel %vm3805, %v2540, %v3844
  %v3846 = vsel %vm3807, %v2547, %v3845
  %v3847 = vsel %vm3809, %v2554, %v3846
  %v3848 = vsel %vm3811, %v2561, %v3847
  %v3849 = vsel %vm3813, %v2568, %v3848
  %v3850 = vsel %vm3801, %v2582, %v2575
  %v3851 = vsel %vm3803, %v2589, %v3850
  %v3852 = vsel %vm3805, %v2596, %v3851
  %v3853 = vsel %vm3807, %v2603, %v3852
  %v3854 = vsel %vm3809, %v2610, %v3853
  %v3855 = vsel %vm3811, %v2617, %v3854
  %v3856 = vsel %vm3813, %v2624, %v3855
  %v3857 = vsel %vm3801, %v2638, %v2631
  %v3858 = vsel %vm3803, %v2645, %v3857
  %v3859 = vsel %vm3805, %v2652, %v3858
  %v3860 = vsel %vm3807, %v2659, %v3859
  %v3861 = vsel %vm3809, %v2666, %v3860
  %v3862 = vsel %vm3811, %v2673, %v3861
  %v3863 = vsel %vm3813, %v2680, %v3862
  %v3864 = vsel %vm3801, %v2694, %v2687
  %v3865 = vsel %vm3803, %v2701, %v3864
  %v3866 = vsel %vm3805, %v2708, %v3865
  %v3867 = vsel %vm3807, %v2715, %v3866
  %v3868 = vsel %vm3809, %v2722, %v3867
  %v3869 = vsel %vm3811, %v2729, %v3868
  %v3870 = vsel %vm3813, %v2736, %v3869
  %v3871 = vsel %vm3801, %v2750, %v2743
  %v3872 = vsel %vm3803, %v2757, %v3871
  %v3873 = vsel %vm3805, %v2764, %v3872
  %v3874 = vsel %vm3807, %v2771, %v3873
  %v3875 = vsel %vm3809, %v2778, %v3874
  %v3876 = vsel %vm3811, %v2785, %v3875
  %v3877 = vsel %vm3813, %v2792, %v3876
  %v3878 = vsel %vm3801, %v2806, %v2799
  %v3879 = vsel %vm3803, %v2813, %v3878
  %v3880 = vsel %vm3805, %v2820, %v3879
  %v3881 = vsel %vm3807, %v2827, %v3880
  %v3882 = vsel %vm3809, %v2834, %v3881
  %v3883 = vsel %vm3811, %v2841, %v3882
  %v3884 = vsel %vm3813, %v2848, %v3883
  %v3885 = vsel %vm3801, %v2862, %v2855
  %v3886 = vsel %vm3803, %v2869, %v3885
  %v3887 = vsel %vm3805, %v2876, %v3886
  %v3888 = vsel %vm3807, %v2883, %v3887
  %v3889 = vsel %vm3809, %v2890, %v3888
  %v3890 = vsel %vm3811, %v2897, %v3889
  %v3891 = vsel %vm3813, %v2904, %v3890
  %v3892 = vsel %vm3801, %v2918, %v2911
  %v3893 = vsel %vm3803, %v2925, %v3892
  %v3894 = vsel %vm3805, %v2932, %v3893
  %v3895 = vsel %vm3807, %v2939, %v3894
  %v3896 = vsel %vm3809, %v2946, %v3895
  %v3897 = vsel %vm3811, %v2953, %v3896
  %v3898 = vsel %vm3813, %v2960, %v3897
  %v3899 = vsel %vm3801, %v2974, %v2967
  %v3900 = vsel %vm3803, %v2981, %v3899
  %v3901 = vsel %vm3805, %v2988, %v3900
  %v3902 = vsel %vm3807, %v2995, %v3901
  %v3903 = vsel %vm3809, %v3002, %v3902
  %v3904 = vsel %vm3811, %v3009, %v3903
  %v3905 = vsel %vm3813, %v3016, %v3904
  %v3906 = vsel %vm3801, %v3030, %v3023
  %v3907 = vsel %vm3803, %v3037, %v3906
  %v3908 = vsel %vm3805, %v3044, %v3907
  %v3909 = vsel %vm3807, %v3051, %v3908
  %v3910 = vsel %vm3809, %v3058, %v3909
  %v3911 = vsel %vm3811, %v3065, %v3910
  %v3912 = vsel %vm3813, %v3072, %v3911
  %v3913 = vsel %vm3801, %v3086, %v3079
  %v3914 = vsel %vm3803, %v3093, %v3913
  %v3915 = vsel %vm3805, %v3100, %v3914
  %v3916 = vsel %vm3807, %v3107, %v3915
  %v3917 = vsel %vm3809, %v3114, %v3916
  %v3918 = vsel %vm3811, %v3121, %v3917
  %v3919 = vsel %vm3813, %v3128, %v3918
  %v3920 = vsel %vm3801, %v3142, %v3135
  %v3921 = vsel %vm3803, %v3149, %v3920
  %v3922 = vsel %vm3805, %v3156, %v3921
  %v3923 = vsel %vm3807, %v3163, %v3922
  %v3924 = vsel %vm3809, %v3170, %v3923
  %v3925 = vsel %vm3811, %v3177, %v3924
  %v3926 = vsel %vm3813, %v3184, %v3925
  %v3927 = vsel %vm3801, %v3198, %v3191
  %v3928 = vsel %vm3803, %v3205, %v3927
  %v3929 = vsel %vm3805, %v3212, %v3928
  %v3930 = vsel %vm3807, %v3219, %v3929
  %v3931 = vsel %vm3809, %v3226, %v3930
  %v3932 = vsel %vm3811, %v3233, %v3931
  %v3933 = vsel %vm3813, %v3240, %v3932
  %v3934 = vsel %vm3801, %v3254, %v3247
  %v3935 = vsel %vm3803, %v3261, %v3934
  %v3936 = vsel %vm3805, %v3268, %v3935
  %v3937 = vsel %vm3807, %v3275, %v3936
  %v3938 = vsel %vm3809, %v3282, %v3937
  %v3939 = vsel %vm3811, %v3289, %v3938
  %v3940 = vsel %vm3813, %v3296, %v3939
  %v3941 = vsel %vm3801, %v3310, %v3303
  %v3942 = vsel %vm3803, %v3317, %v3941
  %v3943 = vsel %vm3805, %v3324, %v3942
  %v3944 = vsel %vm3807, %v3331, %v3943
  %v3945 = vsel %vm3809, %v3338, %v3944
  %v3946 = vsel %vm3811, %v3345, %v3945
  %v3947 = vsel %vm3813, %v3352, %v3946
  %v3948 = vsel %vm3801, %v3366, %v3359
  %v3949 = vsel %vm3803, %v3373, %v3948
  %v3950 = vsel %vm3805, %v3380, %v3949
  %v3951 = vsel %vm3807, %v3387, %v3950
  %v3952 = vsel %vm3809, %v3394, %v3951
  %v3953 = vsel %vm3811, %v3401, %v3952
  %v3954 = vsel %vm3813, %v3408, %v3953
  %v3955 = vsel %vm3801, %v3422, %v3415
  %v3956 = vsel %vm3803, %v3429, %v3955
  %v3957 = vsel %vm3805, %v3436, %v3956
  %v3958 = vsel %vm3807, %v3443, %v3957
  %v3959 = vsel %vm3809, %v3450, %v3958
  %v3960 = vsel %vm3811, %v3457, %v3959
  %v3961 = vsel %vm3813, %v3464, %v3960
  %v3962 = vsel %vm3801, %v3478, %v3471
  %v3963 = vsel %vm3803, %v3485, %v3962
  %v3964 = vsel %vm3805, %v3492, %v3963
  %v3965 = vsel %vm3807, %v3499, %v3964
  %v3966 = vsel %vm3809, %v3506, %v3965
  %v3967 = vsel %vm3811, %v3513, %v3966
  %v3968 = vsel %vm3813, %v3520, %v3967
  %v3969 = vsel %vm3801, %v3534, %v3527
  %v3970 = vsel %vm3803, %v3541, %v3969
  %v3971 = vsel %vm3805, %v3548, %v3970
  %v3972 = vsel %vm3807, %v3555, %v3971
  %v3973 = vsel %vm3809, %v3562, %v3972
  %v3974 = vsel %vm3811, %v3569, %v3973
  %v3975 = vsel %vm3813, %v3576, %v3974
  %v3976 = vsel %vm3801, %v3590, %v3583
  %v3977 = vsel %vm3803, %v3597, %v3976
  %v3978 = vsel %vm3805, %v3604, %v3977
  %4004 = vst.msk [vmem:[%s3] sm:$0xff] %vm2232, %v3814
  %4005 = vst.msk [vmem:[%s3 + $0x8] sm:$0xff] %vm2232, %v3821
  %4006 = vst.msk [vmem:[%s3 + $0x10] sm:$0xff] %vm2232, %v3828
  %4007 = vst.msk [vmem:[%s3 + $0x18] sm:$0xff] %vm2232, %v3835
  %4008 = vst.msk [vmem:[%s3 + $0x20] sm:$0xff] %vm2232, %v3842
  %4009 = vst.msk [vmem:[%s3 + $0x28] sm:$0xff] %vm2232, %v3849
  %4010 = vst.msk [vmem:[%s3 + $0x30] sm:$0xff] %vm2232, %v3856
  %4011 = vst.msk [vmem:[%s3 + $0x38] sm:$0xff] %vm2232, %v3863
  %4012 = vst.msk [vmem:[%s3 + $0x40] sm:$0xff] %vm2232, %v3870
  %4013 = vst.msk [vmem:[%s3 + $0x48] sm:$0xff] %vm2232, %v3877
  %4014 = vst.msk [vmem:[%s3 + $0x50] sm:$0xff] %vm2232, %v3884
  %4015 = vst.msk [vmem:[%s3 + $0x58] sm:$0xff] %vm2232, %v3891
  %4016 = vst.msk [vmem:[%s3 + $0x60] sm:$0xff] %vm2232, %v3898
  %4017 = vst.msk [vmem:[%s3 + $0x68] sm:$0xff] %vm2232, %v3905
  %4018 = vst.msk [vmem:[%s3 + $0x70] sm:$0xff] %vm2232, %v3912
  %4019 = vst.msk [vmem:[%s3 + $0x78] sm:$0xff] %vm2232, %v3919
  %4020 = vst.msk [vmem:[%s3 + $0x80] sm:$0xff] %vm2232, %v3926
  %4021 = vst.msk [vmem:[%s3 + $0x88] sm:$0xff] %vm2232, %v3933
  %4022 = vst.msk [vmem:[%s3 + $0x90] sm:$0xff] %vm2232, %v3940
  %4023 = vst.msk [vmem:[%s3 + $0x98] sm:$0xff] %vm2232, %v3947
  %4024 = vst.msk [vmem:[%s3 + $0xa0] sm:$0xff] %vm2232, %v3954
  %4025 = vst.msk [vmem:[%s3 + $0xa8] sm:$0xff] %vm2232, %v3961
  %4026 = vst.msk [vmem:[%s3 + $0xb0] sm:$0xff] %vm2232, %v3968
  %4027 = vst.msk [vmem:[%s3 + $0xb8] sm:$0xff] %vm2232, %v3975
  %vm4028 = vcmask 519168
  %4029 = vst.msk [vmem:[%s3 + $0xc0] sm:$0xf] %vm4028, %v3978
  // Predicated region
  $region14: #{stage1.2} parent=0 // pred_check
    _
  $region15: #{stage1.2} parent=0 // pred_check_branch
    %4031 = sbr.rel (0) target = $region17
  $region16: #{stage1.2} parent=0 // pred_region
    _
  $region17: #{stage1.2} parent=0 // pred_fallthru
    _
  // Predicated region
  $region18: #{stage1.2} parent=0 // pred_check
    _
  $region19: #{stage1.2} parent=0 // pred_check_branch
    %4033 = sbr.rel (0) target = $region21
  $region20: #{stage1.2} parent=0 // pred_region
    _
  $region21: #{stage1.2} parent=0 // pred_fallthru
    _

</llo_original>
